<compile_context>
chip_gen: v6e
topology: v6e:2x2x1
jax: 0.10.0
libtpu: 0.0.40
codegen_flags: <defaults>
</compile_context>

<pallas_src>
import math

import jax
import jax.numpy as jnp
from jax.experimental import pallas as pl
from jax.experimental.pallas import tpu as pltpu

# --------------------------- model config (small) ---------------------------
V = 64     # vocab size
B = 2      # batch per tower
S = 8      # sequence length
H = 32     # hidden size
NH = 4     # attention heads
DH = H // NH
FF = 64    # FFN intermediate
L = 2      # transformer layers
LN_EPS = 1e-12


# ------------------------------- Pallas kernel ------------------------------
def encoder_kernel(
    x_ref,        # (BT*S, H)   f32  token + position embeddings (flattened)
    bias_ref,     # (BT*S, BT*S) f32 block-diagonal + key-padding additive bias
    emb_ln_ref,   # (2, H)      f32  embedding LayerNorm [gamma; beta]
    wqkv_ref,     # (L, H, 3H)  bf16 fused QKV projection
    bqkv_ref,     # (L, 1, 3H)  f32
    wo_ref,       # (L, H, H)   bf16 attention output projection
    w1_ref,       # (L, H, FF)  bf16 FFN in
    b1_ref,       # (L, 1, FF)  f32
    w2_ref,       # (L, FF, H)  bf16 FFN out
    lnp_ref,      # (L, 6, H)   f32  packed [bo, ln1_g, ln1_b, b2, ln2_g, ln2_b]
    wp_ref,       # (H, H)      bf16 pooler dense
    bp_ref,       # (1, H)      f32
    pool_ref,     # (BT, H)     f32  output: pooler output per fused-batch row
):
    T = x_ref.shape[0]          # fused tokens = BT * S
    BT = pool_ref.shape[0]      # fused batch  = 2 * B

    def layernorm(h, g, b):
        mu = jnp.mean(h, axis=-1, keepdims=True)
        var = jnp.mean((h - mu) ** 2, axis=-1, keepdims=True)
        return (h - mu) * jax.lax.rsqrt(var + LN_EPS) * g + b

    def bdot(a, w_bf16):
        # f32 activations x bf16 weights on the MXU, f32 accumulation.
        return jnp.dot(a.astype(jnp.bfloat16), w_bf16,
                       preferred_element_type=jnp.float32)

    x = x_ref[...]                       # (T, H)
    bias = bias_ref[...]                 # (T, T)
    h = layernorm(x, emb_ln_ref[0:1, :], emb_ln_ref[1:2, :])

    scale = 1.0 / math.sqrt(DH)
    for l in range(L):                   # static unroll; L is tiny
        wo_l = wo_ref[l]                 # (H, H) bf16
        lnp_l = lnp_ref[l]               # (6, H) f32

        qkv = bdot(h, wqkv_ref[l]) + bqkv_ref[l]               # (T, 3H)

        attn = jnp.zeros((T, H), jnp.float32)
        for n in range(NH):              # static head loop, static lane slices
            qs = qkv[:, n * DH:(n + 1) * DH]                    # (T, DH)
            ks = qkv[:, H + n * DH:H + (n + 1) * DH]
            vs = qkv[:, 2 * H + n * DH:2 * H + (n + 1) * DH]
            # q @ k^T as an NT matmul (no materialized transpose).
            s = jax.lax.dot_general(qs, ks, (((1,), (1,)), ((), ())),
                                    preferred_element_type=jnp.float32)
            s = s * scale + bias         # block-diag mask keeps batches apart
            s = s - jnp.max(s, axis=-1, keepdims=True)
            p = jnp.exp(s)
            p = p * pl.reciprocal(jnp.sum(p, axis=-1, keepdims=True), approx=True)
            ctx = jnp.dot(p, vs, preferred_element_type=jnp.float32)  # (T, DH)
            # Accumulated per-head output projection == concat(heads) @ Wo.
            attn = attn + bdot(ctx, wo_l[n * DH:(n + 1) * DH, :])

        attn = attn + lnp_l[0:1, :]                              # + bo
        h = layernorm(h + attn, lnp_l[1:2, :], lnp_l[2:3, :])

        ff = bdot(h, w1_ref[l]) + b1_ref[l]
        # NOTE: tanh-GELU ("gelu_new"); HF BERT default is exact erf-GELU.
        ff = jax.nn.gelu(ff, approximate=True)
        ff = bdot(ff, w2_ref[l]) + lnp_l[3:4, :]                 # + b2
        h = layernorm(h + ff, lnp_l[4:5, :], lnp_l[5:6, :])

    # Pooler: tanh(Dense(CLS)).  CLS rows are rows b*S of the fused slab;
    # gather them with a one-hot selection matmul (no strided slices/concat).
    row_id = jax.lax.broadcasted_iota(jnp.int32, (BT, T), 0)
    col_id = jax.lax.broadcasted_iota(jnp.int32, (BT, T), 1)
    sel = (col_id == row_id * S).astype(jnp.float32)             # (BT, T)
    cls = jnp.dot(sel, h, preferred_element_type=jnp.float32)    # (BT, H)
    pool_ref[...] = jnp.tanh(bdot(cls, wp_ref[...]) + bp_ref[...])


# ------------------------------- wrapper / glue ------------------------------
def _full_spec(shape):
    zeros = (0,) * len(shape)
    return pl.BlockSpec(shape, lambda i, _z=zeros: _z)


def _encode(ids, attn_mask, params):
    bt, s = ids.shape
    t = bt * s

    # Embedding gather + bias construction: plain-JAX glue around the kernel.
    x = params["tok_emb"][ids] + params["pos_emb"][None, :, :]    # (BT, S, H)
    x_flat = x.reshape(t, H)

    # (T, T) additive bias: attend only within the same batch element and only
    # to non-padded key positions.
    tok_batch = jnp.repeat(jnp.arange(bt, dtype=jnp.int32), s)    # (T,)
    same_batch = tok_batch[:, None] == tok_batch[None, :]
    key_ok = attn_mask.reshape(t) > 0
    bias2d = jnp.where(same_batch & key_ok[None, :], 0.0, -1e9).astype(jnp.float32)

    weights = [params[n] for n in
               ("emb_ln", "wqkv", "bqkv", "wo", "w1", "b1", "w2",
                "lnp", "wp", "bp")]
    operands = [x_flat, bias2d] + weights

    return pl.pallas_call(
        encoder_kernel,
        out_shape=jax.ShapeDtypeStruct((bt, H), jnp.float32),
        grid_spec=pltpu.PrefetchScalarGridSpec(
            num_scalar_prefetch=0,
            grid=(1,),                       # single step: whole fused batch
            in_specs=[_full_spec(op.shape) for op in operands],
            out_specs=_full_spec((bt, H)),
        ),
        compiler_params=pltpu.CompilerParams(
            # One grid step -> semantics irrelevant; mark "parallel" if this is
            # ever re-tiled over batch (v7x has 2 TensorCores per chip).
            dimension_semantics=("arbitrary",),
        ),
    )(*operands)


@jax.jit
def biencoder_forward(query_ids, query_attn_mask, evid_ids, evid_attn_mask, params):
    # evid_model is None -> shared encoder; fuse both towers into one call.
    ids = jnp.concatenate([query_ids, evid_ids], axis=0)          # (2B, S)
    mask = jnp.concatenate([query_attn_mask, evid_attn_mask], axis=0)
    pooled = _encode(ids, mask, params)                           # (2B, H)
    nb = query_ids.shape[0]
    return pooled[:nb], pooled[nb:]


def init_params(key):
    def nrm(k, shape, scale=0.02):
        return (scale * jax.random.normal(k, shape)).astype(jnp.float32)

    ks = jax.random.split(key, 9)
    wq, wk, wv = nrm(ks[0], (L, H, H)), nrm(ks[1], (L, H, H)), nrm(ks[2], (L, H, H))
    ones_h = jnp.ones((L, 1, H), jnp.float32)
    zeros_h = jnp.zeros((L, 1, H), jnp.float32)
    return {
        "tok_emb": nrm(ks[3], (V, H)),
        "pos_emb": nrm(ks[4], (S, H)),
        # embedding LayerNorm packed as [gamma; beta]
        "emb_ln": jnp.concatenate(
            [jnp.ones((1, H), jnp.float32), jnp.zeros((1, H), jnp.float32)], axis=0),
        # fused QKV projection; big matrices in bf16 for the MXU path
        "wqkv": jnp.concatenate([wq, wk, wv], axis=-1).astype(jnp.bfloat16),  # (L,H,3H)
        "bqkv": jnp.zeros((L, 1, 3 * H), jnp.float32),
        "wo": nrm(ks[5], (L, H, H)).astype(jnp.bfloat16),
        "w1": nrm(ks[6], (L, H, FF)).astype(jnp.bfloat16),
        "b1": jnp.zeros((L, 1, FF), jnp.float32),
        "w2": nrm(ks[7], (L, FF, H)).astype(jnp.bfloat16),
        # packed small per-layer params: [bo, ln1_g, ln1_b, b2, ln2_g, ln2_b]
        "lnp": jnp.concatenate(
            [zeros_h, ones_h, zeros_h, zeros_h, ones_h, zeros_h], axis=1),    # (L,6,H)
        "wp": nrm(ks[8], (H, H)).astype(jnp.bfloat16),
        "bp": jnp.zeros((1, H), jnp.float32),
    }


if __name__ == "__main__":
    params = init_params(jax.random.PRNGKey(42))

    key = jax.random.PRNGKey(0)
    k1, k2 = jax.random.split(key)
    query_ids = jax.random.randint(k1, (B, S), 0, V, dtype=jnp.int32)
    evid_ids = jax.random.randint(k2, (B, S), 0, V, dtype=jnp.int32)
    # attention masks: last two positions of each query padded, evidence full.
    query_attn_mask = jnp.concatenate(
        [jnp.ones((B, S - 2), jnp.int32), jnp.zeros((B, 2), jnp.int32)], axis=1)
    evid_attn_mask = jnp.ones((B, S), jnp.int32)

    q_pool, e_pool = biencoder_forward(
        query_ids, query_attn_mask, evid_ids, evid_attn_mask, params)
    jax.block_until_ready((q_pool, e_pool))

    assert q_pool.shape == (B, H) and e_pool.shape == (B, H)
    assert bool(jnp.all(jnp.isfinite(q_pool))) and bool(jnp.all(jnp.isfinite(e_pool)))
    print("KERNEL_OK")
</pallas_src>

<mosaic_0001>
module attributes {stable_mosaic.version = 11 : i64} {
  func.func @encoder_kernel(%arg0: i32, %arg1: memref<32x32xf32, #tpu.memory_space<vmem>>, %arg2: memref<32x32xf32, #tpu.memory_space<vmem>>, %arg3: memref<2x32xf32, #tpu.memory_space<vmem>>, %arg4: memref<2x32x96xbf16, #tpu.memory_space<vmem>>, %arg5: memref<2x1x96xf32, #tpu.memory_space<vmem>>, %arg6: memref<2x32x32xbf16, #tpu.memory_space<vmem>>, %arg7: memref<2x32x64xbf16, #tpu.memory_space<vmem>>, %arg8: memref<2x1x64xf32, #tpu.memory_space<vmem>>, %arg9: memref<2x64x32xbf16, #tpu.memory_space<vmem>>, %arg10: memref<2x6x32xf32, #tpu.memory_space<vmem>>, %arg11: memref<32x32xbf16, #tpu.memory_space<vmem>>, %arg12: memref<1x32xf32, #tpu.memory_space<vmem>>, %arg13: memref<4x32xf32, #tpu.memory_space<vmem>>) attributes {dimension_semantics = [#tpu.dimension_semantics<arbitrary>], iteration_bounds = array<i64: 1>, scalar_prefetch = 0 : i64, scratch_operands = 0 : i64, tpu.core_type = #tpu.core_type<tc>, window_params = [{pipeline_mode = #tpu.pipeline_mode<synchronous>, transform_indices = @transform_0, window_bounds = array<i64: 32, 32>}, {pipeline_mode = #tpu.pipeline_mode<synchronous>, transform_indices = @transform_1, window_bounds = array<i64: 32, 32>}, {pipeline_mode = #tpu.pipeline_mode<synchronous>, transform_indices = @transform_2, window_bounds = array<i64: 2, 32>}, {pipeline_mode = #tpu.pipeline_mode<synchronous>, transform_indices = @transform_3, window_bounds = array<i64: 2, 32, 96>}, {pipeline_mode = #tpu.pipeline_mode<synchronous>, transform_indices = @transform_4, window_bounds = array<i64: 2, 1, 96>}, {pipeline_mode = #tpu.pipeline_mode<synchronous>, transform_indices = @transform_5, window_bounds = array<i64: 2, 32, 32>}, {pipeline_mode = #tpu.pipeline_mode<synchronous>, transform_indices = @transform_6, window_bounds = array<i64: 2, 32, 64>}, {pipeline_mode = #tpu.pipeline_mode<synchronous>, transform_indices = @transform_7, window_bounds = array<i64: 2, 1, 64>}, {pipeline_mode = #tpu.pipeline_mode<synchronous>, transform_indices = @transform_8, window_bounds = array<i64: 2, 64, 32>}, {pipeline_mode = #tpu.pipeline_mode<synchronous>, transform_indices = @transform_9, window_bounds = array<i64: 2, 6, 32>}, {pipeline_mode = #tpu.pipeline_mode<synchronous>, transform_indices = @transform_10, window_bounds = array<i64: 32, 32>}, {pipeline_mode = #tpu.pipeline_mode<synchronous>, transform_indices = @transform_11, window_bounds = array<i64: 1, 32>}, {pipeline_mode = #tpu.pipeline_mode<synchronous>, transform_indices = @transform_12, window_bounds = array<i64: 4, 32>}]} {
    %c0 = arith.constant 0 : index
    %c0_0 = arith.constant 0 : index
    %0 = vector.load %arg1[%c0, %c0_0] : memref<32x32xf32, #tpu.memory_space<vmem>>, vector<32x32xf32>
    %c0_1 = arith.constant 0 : index
    %c0_2 = arith.constant 0 : index
    %1 = vector.load %arg2[%c0_1, %c0_2] : memref<32x32xf32, #tpu.memory_space<vmem>>, vector<32x32xf32>
    %c0_3 = arith.constant 0 : index
    %c0_4 = arith.constant 0 : index
    %2 = vector.load %arg3[%c0_3, %c0_4] : memref<2x32xf32, #tpu.memory_space<vmem>>, vector<1x32xf32>
    %c1 = arith.constant 1 : index
    %c0_5 = arith.constant 0 : index
    %3 = vector.load %arg3[%c1, %c0_5] : memref<2x32xf32, #tpu.memory_space<vmem>>, vector<1x32xf32>
    %cst = arith.constant dense<0.000000e+00> : vector<32xf32>
    %4 = vector.multi_reduction <add>, %0, %cst [1] : vector<32x32xf32> to vector<32xf32>
    %5 = vector.shape_cast %4 : vector<32xf32> to vector<32x1xf32>
    %cst_6 = arith.constant 3.200000e+01 : f32
    %6 = vector.broadcast %cst_6 : f32 to vector<32x1xf32>
    %7 = arith.divf %5, %6 : vector<32x1xf32>
    %8 = vector.broadcast %7 : vector<32x1xf32> to vector<32x32xf32>
    %9 = arith.subf %0, %8 : vector<32x32xf32>
    %10 = arith.mulf %9, %9 : vector<32x32xf32>
    %cst_7 = arith.constant dense<0.000000e+00> : vector<32xf32>
    %11 = vector.multi_reduction <add>, %10, %cst_7 [1] : vector<32x32xf32> to vector<32xf32>
    %12 = vector.shape_cast %11 : vector<32xf32> to vector<32x1xf32>
    %cst_8 = arith.constant 3.200000e+01 : f32
    %13 = vector.broadcast %cst_8 : f32 to vector<32x1xf32>
    %14 = arith.divf %12, %13 : vector<32x1xf32>
    %15 = vector.broadcast %7 : vector<32x1xf32> to vector<32x32xf32>
    %16 = arith.subf %0, %15 : vector<32x32xf32>
    %cst_9 = arith.constant 9.99999996E-13 : f32
    %17 = vector.broadcast %cst_9 : f32 to vector<32x1xf32>
    %18 = arith.addf %14, %17 : vector<32x1xf32>
    %19 = math.rsqrt %18 : vector<32x1xf32>
    %20 = vector.broadcast %19 : vector<32x1xf32> to vector<32x32xf32>
    %21 = arith.mulf %16, %20 : vector<32x32xf32>
    %22 = vector.broadcast %2 : vector<1x32xf32> to vector<32x32xf32>
    %23 = arith.mulf %21, %22 : vector<32x32xf32>
    %24 = vector.broadcast %3 : vector<1x32xf32> to vector<32x32xf32>
    %25 = arith.addf %23, %24 : vector<32x32xf32>
    %c0_10 = arith.constant 0 : index
    %c0_11 = arith.constant 0 : index
    %c0_12 = arith.constant 0 : index
    %26 = vector.load %arg6[%c0_10, %c0_11, %c0_12] : memref<2x32x32xbf16, #tpu.memory_space<vmem>>, vector<1x32x32xbf16>
    %27 = vector.shape_cast %26 : vector<1x32x32xbf16> to vector<32x32xbf16>
    %c0_13 = arith.constant 0 : index
    %c0_14 = arith.constant 0 : index
    %c0_15 = arith.constant 0 : index
    %28 = vector.load %arg10[%c0_13, %c0_14, %c0_15] : memref<2x6x32xf32, #tpu.memory_space<vmem>>, vector<1x6x32xf32>
    %29 = vector.shape_cast %28 : vector<1x6x32xf32> to vector<6x32xf32>
    %c0_16 = arith.constant 0 : index
    %c0_17 = arith.constant 0 : index
    %c0_18 = arith.constant 0 : index
    %30 = vector.load %arg4[%c0_16, %c0_17, %c0_18] : memref<2x32x96xbf16, #tpu.memory_space<vmem>>, vector<1x32x96xbf16>
    %31 = vector.shape_cast %30 : vector<1x32x96xbf16> to vector<32x96xbf16>
    %32 = arith.truncf %25 : vector<32x32xf32> to vector<32x32xbf16>
    %cst_19 = arith.constant dense<0.000000e+00> : vector<32x96xf32>
    %33 = tpu.matmul %32, %31, %cst_19 {dimension_numbers = #tpu.dot_dimension_numbers<[1], [0], [0], [1], [0, 0, 1, 1], [], []>} : vector<32x32xbf16>, vector<32x96xbf16>, vector<32x96xf32> -> vector<32x96xf32>
    %c0_20 = arith.constant 0 : index
    %c0_21 = arith.constant 0 : index
    %c0_22 = arith.constant 0 : index
    %34 = vector.load %arg5[%c0_20, %c0_21, %c0_22] : memref<2x1x96xf32, #tpu.memory_space<vmem>>, vector<1x1x96xf32>
    %35 = vector.shape_cast %34 : vector<1x1x96xf32> to vector<1x96xf32>
    %36 = vector.broadcast %35 : vector<1x96xf32> to vector<32x96xf32>
    %37 = arith.addf %33, %36 : vector<32x96xf32>
    %cst_23 = arith.constant 0.000000e+00 : f32
    %38 = vector.broadcast %cst_23 : f32 to vector<32x32xf32>
    %39 = vector.extract_strided_slice %37 {offsets = [0, 0], sizes = [32, 8], strides = [1, 1]} : vector<32x96xf32> to vector<32x8xf32>
    %40 = vector.extract_strided_slice %37 {offsets = [0, 32], sizes = [32, 8], strides = [1, 1]} : vector<32x96xf32> to vector<32x8xf32>
    %41 = vector.extract_strided_slice %37 {offsets = [0, 64], sizes = [32, 8], strides = [1, 1]} : vector<32x96xf32> to vector<32x8xf32>
    %cst_24 = arith.constant dense<0.000000e+00> : vector<32x32xf32>
    %42 = tpu.matmul %39, %40, %cst_24 {dimension_numbers = #tpu.dot_dimension_numbers<[1], [1], [0], [0], [0, 0, 1, 0], [], []>} : vector<32x8xf32>, vector<32x8xf32>, vector<32x32xf32> -> vector<32x32xf32>
    %cst_25 = arith.constant 0.353553385 : f32
    %43 = vector.broadcast %cst_25 : f32 to vector<32x32xf32>
    %44 = arith.mulf %42, %43 : vector<32x32xf32>
    %45 = arith.addf %44, %1 : vector<32x32xf32>
    %cst_26 = arith.constant dense<0xFF800000> : vector<32xf32>
    %46 = vector.multi_reduction <maximumf>, %45, %cst_26 [1] : vector<32x32xf32> to vector<32xf32>
    %47 = vector.shape_cast %46 : vector<32xf32> to vector<32x1xf32>
    %48 = vector.broadcast %47 : vector<32x1xf32> to vector<32x32xf32>
    %49 = arith.subf %45, %48 : vector<32x32xf32>
    %50 = math.exp %49 : vector<32x32xf32>
    %cst_27 = arith.constant dense<0.000000e+00> : vector<32xf32>
    %51 = vector.multi_reduction <add>, %50, %cst_27 [1] : vector<32x32xf32> to vector<32xf32>
    %52 = vector.shape_cast %51 : vector<32xf32> to vector<32x1xf32>
    %53 = tpu.reciprocal %52 {approx = true} : vector<32x1xf32> -> vector<32x1xf32>
    %54 = vector.broadcast %53 : vector<32x1xf32> to vector<32x32xf32>
    %55 = arith.mulf %50, %54 : vector<32x32xf32>
    %cst_28 = arith.constant dense<0.000000e+00> : vector<32x8xf32>
    %56 = tpu.matmul %55, %41, %cst_28 {dimension_numbers = #tpu.dot_dimension_numbers<[1], [0], [0], [1], [0, 0, 1, 1], [], []>} : vector<32x32xf32>, vector<32x8xf32>, vector<32x8xf32> -> vector<32x8xf32>
    %57 = vector.extract_strided_slice %27 {offsets = [0, 0], sizes = [8, 32], strides = [1, 1]} : vector<32x32xbf16> to vector<8x32xbf16>
    %58 = arith.truncf %56 : vector<32x8xf32> to vector<32x8xbf16>
    %cst_29 = arith.constant dense<0.000000e+00> : vector<32x32xf32>
    %59 = tpu.matmul %58, %57, %cst_29 {dimension_numbers = #tpu.dot_dimension_numbers<[1], [0], [0], [1], [0, 0, 1, 1], [], []>} : vector<32x8xbf16>, vector<8x32xbf16>, vector<32x32xf32> -> vector<32x32xf32>
    %60 = arith.addf %38, %59 : vector<32x32xf32>
    %61 = vector.extract_strided_slice %37 {offsets = [0, 8], sizes = [32, 8], strides = [1, 1]} : vector<32x96xf32> to vector<32x8xf32>
    %62 = vector.extract_strided_slice %37 {offsets = [0, 40], sizes = [32, 8], strides = [1, 1]} : vector<32x96xf32> to vector<32x8xf32>
    %63 = vector.extract_strided_slice %37 {offsets = [0, 72], sizes = [32, 8], strides = [1, 1]} : vector<32x96xf32> to vector<32x8xf32>
    %cst_30 = arith.constant dense<0.000000e+00> : vector<32x32xf32>
    %64 = tpu.matmul %61, %62, %cst_30 {dimension_numbers = #tpu.dot_dimension_numbers<[1], [1], [0], [0], [0, 0, 1, 0], [], []>} : vector<32x8xf32>, vector<32x8xf32>, vector<32x32xf32> -> vector<32x32xf32>
    %cst_31 = arith.constant 0.353553385 : f32
    %65 = vector.broadcast %cst_31 : f32 to vector<32x32xf32>
    %66 = arith.mulf %64, %65 : vector<32x32xf32>
    %67 = arith.addf %66, %1 : vector<32x32xf32>
    %cst_32 = arith.constant dense<0xFF800000> : vector<32xf32>
    %68 = vector.multi_reduction <maximumf>, %67, %cst_32 [1] : vector<32x32xf32> to vector<32xf32>
    %69 = vector.shape_cast %68 : vector<32xf32> to vector<32x1xf32>
    %70 = vector.broadcast %69 : vector<32x1xf32> to vector<32x32xf32>
    %71 = arith.subf %67, %70 : vector<32x32xf32>
    %72 = math.exp %71 : vector<32x32xf32>
    %cst_33 = arith.constant dense<0.000000e+00> : vector<32xf32>
    %73 = vector.multi_reduction <add>, %72, %cst_33 [1] : vector<32x32xf32> to vector<32xf32>
    %74 = vector.shape_cast %73 : vector<32xf32> to vector<32x1xf32>
    %75 = tpu.reciprocal %74 {approx = true} : vector<32x1xf32> -> vector<32x1xf32>
    %76 = vector.broadcast %75 : vector<32x1xf32> to vector<32x32xf32>
    %77 = arith.mulf %72, %76 : vector<32x32xf32>
    %cst_34 = arith.constant dense<0.000000e+00> : vector<32x8xf32>
    %78 = tpu.matmul %77, %63, %cst_34 {dimension_numbers = #tpu.dot_dimension_numbers<[1], [0], [0], [1], [0, 0, 1, 1], [], []>} : vector<32x32xf32>, vector<32x8xf32>, vector<32x8xf32> -> vector<32x8xf32>
    %79 = vector.extract_strided_slice %27 {offsets = [8, 0], sizes = [8, 32], strides = [1, 1]} : vector<32x32xbf16> to vector<8x32xbf16>
    %80 = arith.truncf %78 : vector<32x8xf32> to vector<32x8xbf16>
    %cst_35 = arith.constant dense<0.000000e+00> : vector<32x32xf32>
    %81 = tpu.matmul %80, %79, %cst_35 {dimension_numbers = #tpu.dot_dimension_numbers<[1], [0], [0], [1], [0, 0, 1, 1], [], []>} : vector<32x8xbf16>, vector<8x32xbf16>, vector<32x32xf32> -> vector<32x32xf32>
    %82 = arith.addf %60, %81 : vector<32x32xf32>
    %83 = vector.extract_strided_slice %37 {offsets = [0, 16], sizes = [32, 8], strides = [1, 1]} : vector<32x96xf32> to vector<32x8xf32>
    %84 = vector.extract_strided_slice %37 {offsets = [0, 48], sizes = [32, 8], strides = [1, 1]} : vector<32x96xf32> to vector<32x8xf32>
    %85 = vector.extract_strided_slice %37 {offsets = [0, 80], sizes = [32, 8], strides = [1, 1]} : vector<32x96xf32> to vector<32x8xf32>
    %cst_36 = arith.constant dense<0.000000e+00> : vector<32x32xf32>
    %86 = tpu.matmul %83, %84, %cst_36 {dimension_numbers = #tpu.dot_dimension_numbers<[1], [1], [0], [0], [0, 0, 1, 0], [], []>} : vector<32x8xf32>, vector<32x8xf32>, vector<32x32xf32> -> vector<32x32xf32>
    %cst_37 = arith.constant 0.353553385 : f32
    %87 = vector.broadcast %cst_37 : f32 to vector<32x32xf32>
    %88 = arith.mulf %86, %87 : vector<32x32xf32>
    %89 = arith.addf %88, %1 : vector<32x32xf32>
    %cst_38 = arith.constant dense<0xFF800000> : vector<32xf32>
    %90 = vector.multi_reduction <maximumf>, %89, %cst_38 [1] : vector<32x32xf32> to vector<32xf32>
    %91 = vector.shape_cast %90 : vector<32xf32> to vector<32x1xf32>
    %92 = vector.broadcast %91 : vector<32x1xf32> to vector<32x32xf32>
    %93 = arith.subf %89, %92 : vector<32x32xf32>
    %94 = math.exp %93 : vector<32x32xf32>
    %cst_39 = arith.constant dense<0.000000e+00> : vector<32xf32>
    %95 = vector.multi_reduction <add>, %94, %cst_39 [1] : vector<32x32xf32> to vector<32xf32>
    %96 = vector.shape_cast %95 : vector<32xf32> to vector<32x1xf32>
    %97 = tpu.reciprocal %96 {approx = true} : vector<32x1xf32> -> vector<32x1xf32>
    %98 = vector.broadcast %97 : vector<32x1xf32> to vector<32x32xf32>
    %99 = arith.mulf %94, %98 : vector<32x32xf32>
    %cst_40 = arith.constant dense<0.000000e+00> : vector<32x8xf32>
    %100 = tpu.matmul %99, %85, %cst_40 {dimension_numbers = #tpu.dot_dimension_numbers<[1], [0], [0], [1], [0, 0, 1, 1], [], []>} : vector<32x32xf32>, vector<32x8xf32>, vector<32x8xf32> -> vector<32x8xf32>
    %101 = vector.extract_strided_slice %27 {offsets = [16, 0], sizes = [8, 32], strides = [1, 1]} : vector<32x32xbf16> to vector<8x32xbf16>
    %102 = arith.truncf %100 : vector<32x8xf32> to vector<32x8xbf16>
    %cst_41 = arith.constant dense<0.000000e+00> : vector<32x32xf32>
    %103 = tpu.matmul %102, %101, %cst_41 {dimension_numbers = #tpu.dot_dimension_numbers<[1], [0], [0], [1], [0, 0, 1, 1], [], []>} : vector<32x8xbf16>, vector<8x32xbf16>, vector<32x32xf32> -> vector<32x32xf32>
    %104 = arith.addf %82, %103 : vector<32x32xf32>
    %105 = vector.extract_strided_slice %37 {offsets = [0, 24], sizes = [32, 8], strides = [1, 1]} : vector<32x96xf32> to vector<32x8xf32>
    %106 = vector.extract_strided_slice %37 {offsets = [0, 56], sizes = [32, 8], strides = [1, 1]} : vector<32x96xf32> to vector<32x8xf32>
    %107 = vector.extract_strided_slice %37 {offsets = [0, 88], sizes = [32, 8], strides = [1, 1]} : vector<32x96xf32> to vector<32x8xf32>
    %cst_42 = arith.constant dense<0.000000e+00> : vector<32x32xf32>
    %108 = tpu.matmul %105, %106, %cst_42 {dimension_numbers = #tpu.dot_dimension_numbers<[1], [1], [0], [0], [0, 0, 1, 0], [], []>} : vector<32x8xf32>, vector<32x8xf32>, vector<32x32xf32> -> vector<32x32xf32>
    %cst_43 = arith.constant 0.353553385 : f32
    %109 = vector.broadcast %cst_43 : f32 to vector<32x32xf32>
    %110 = arith.mulf %108, %109 : vector<32x32xf32>
    %111 = arith.addf %110, %1 : vector<32x32xf32>
    %cst_44 = arith.constant dense<0xFF800000> : vector<32xf32>
    %112 = vector.multi_reduction <maximumf>, %111, %cst_44 [1] : vector<32x32xf32> to vector<32xf32>
    %113 = vector.shape_cast %112 : vector<32xf32> to vector<32x1xf32>
    %114 = vector.broadcast %113 : vector<32x1xf32> to vector<32x32xf32>
    %115 = arith.subf %111, %114 : vector<32x32xf32>
    %116 = math.exp %115 : vector<32x32xf32>
    %cst_45 = arith.constant dense<0.000000e+00> : vector<32xf32>
    %117 = vector.multi_reduction <add>, %116, %cst_45 [1] : vector<32x32xf32> to vector<32xf32>
    %118 = vector.shape_cast %117 : vector<32xf32> to vector<32x1xf32>
    %119 = tpu.reciprocal %118 {approx = true} : vector<32x1xf32> -> vector<32x1xf32>
    %120 = vector.broadcast %119 : vector<32x1xf32> to vector<32x32xf32>
    %121 = arith.mulf %116, %120 : vector<32x32xf32>
    %cst_46 = arith.constant dense<0.000000e+00> : vector<32x8xf32>
    %122 = tpu.matmul %121, %107, %cst_46 {dimension_numbers = #tpu.dot_dimension_numbers<[1], [0], [0], [1], [0, 0, 1, 1], [], []>} : vector<32x32xf32>, vector<32x8xf32>, vector<32x8xf32> -> vector<32x8xf32>
    %123 = vector.extract_strided_slice %27 {offsets = [24, 0], sizes = [8, 32], strides = [1, 1]} : vector<32x32xbf16> to vector<8x32xbf16>
    %124 = arith.truncf %122 : vector<32x8xf32> to vector<32x8xbf16>
    %cst_47 = arith.constant dense<0.000000e+00> : vector<32x32xf32>
    %125 = tpu.matmul %124, %123, %cst_47 {dimension_numbers = #tpu.dot_dimension_numbers<[1], [0], [0], [1], [0, 0, 1, 1], [], []>} : vector<32x8xbf16>, vector<8x32xbf16>, vector<32x32xf32> -> vector<32x32xf32>
    %126 = arith.addf %104, %125 : vector<32x32xf32>
    %127 = vector.extract_strided_slice %29 {offsets = [0, 0], sizes = [1, 32], strides = [1, 1]} : vector<6x32xf32> to vector<1x32xf32>
    %128 = vector.broadcast %127 : vector<1x32xf32> to vector<32x32xf32>
    %129 = arith.addf %126, %128 : vector<32x32xf32>
    %130 = arith.addf %25, %129 : vector<32x32xf32>
    %131 = vector.extract_strided_slice %29 {offsets = [1, 0], sizes = [1, 32], strides = [1, 1]} : vector<6x32xf32> to vector<1x32xf32>
    %132 = vector.extract_strided_slice %29 {offsets = [2, 0], sizes = [1, 32], strides = [1, 1]} : vector<6x32xf32> to vector<1x32xf32>
    %cst_48 = arith.constant dense<0.000000e+00> : vector<32xf32>
    %133 = vector.multi_reduction <add>, %130, %cst_48 [1] : vector<32x32xf32> to vector<32xf32>
    %134 = vector.shape_cast %133 : vector<32xf32> to vector<32x1xf32>
    %cst_49 = arith.constant 3.200000e+01 : f32
    %135 = vector.broadcast %cst_49 : f32 to vector<32x1xf32>
    %136 = arith.divf %134, %135 : vector<32x1xf32>
    %137 = vector.broadcast %136 : vector<32x1xf32> to vector<32x32xf32>
    %138 = arith.subf %130, %137 : vector<32x32xf32>
    %139 = arith.mulf %138, %138 : vector<32x32xf32>
    %cst_50 = arith.constant dense<0.000000e+00> : vector<32xf32>
    %140 = vector.multi_reduction <add>, %139, %cst_50 [1] : vector<32x32xf32> to vector<32xf32>
    %141 = vector.shape_cast %140 : vector<32xf32> to vector<32x1xf32>
    %cst_51 = arith.constant 3.200000e+01 : f32
    %142 = vector.broadcast %cst_51 : f32 to vector<32x1xf32>
    %143 = arith.divf %141, %142 : vector<32x1xf32>
    %144 = vector.broadcast %136 : vector<32x1xf32> to vector<32x32xf32>
    %145 = arith.subf %130, %144 : vector<32x32xf32>
    %cst_52 = arith.constant 9.99999996E-13 : f32
    %146 = vector.broadcast %cst_52 : f32 to vector<32x1xf32>
    %147 = arith.addf %143, %146 : vector<32x1xf32>
    %148 = math.rsqrt %147 : vector<32x1xf32>
    %149 = vector.broadcast %148 : vector<32x1xf32> to vector<32x32xf32>
    %150 = arith.mulf %145, %149 : vector<32x32xf32>
    %151 = vector.broadcast %131 : vector<1x32xf32> to vector<32x32xf32>
    %152 = arith.mulf %150, %151 : vector<32x32xf32>
    %153 = vector.broadcast %132 : vector<1x32xf32> to vector<32x32xf32>
    %154 = arith.addf %152, %153 : vector<32x32xf32>
    %c0_53 = arith.constant 0 : index
    %c0_54 = arith.constant 0 : index
    %c0_55 = arith.constant 0 : index
    %155 = vector.load %arg7[%c0_53, %c0_54, %c0_55] : memref<2x32x64xbf16, #tpu.memory_space<vmem>>, vector<1x32x64xbf16>
    %156 = vector.shape_cast %155 : vector<1x32x64xbf16> to vector<32x64xbf16>
    %157 = arith.truncf %154 : vector<32x32xf32> to vector<32x32xbf16>
    %cst_56 = arith.constant dense<0.000000e+00> : vector<32x64xf32>
    %158 = tpu.matmul %157, %156, %cst_56 {dimension_numbers = #tpu.dot_dimension_numbers<[1], [0], [0], [1], [0, 0, 1, 1], [], []>} : vector<32x32xbf16>, vector<32x64xbf16>, vector<32x64xf32> -> vector<32x64xf32>
    %c0_57 = arith.constant 0 : index
    %c0_58 = arith.constant 0 : index
    %c0_59 = arith.constant 0 : index
    %159 = vector.load %arg8[%c0_57, %c0_58, %c0_59] : memref<2x1x64xf32, #tpu.memory_space<vmem>>, vector<1x1x64xf32>
    %160 = vector.shape_cast %159 : vector<1x1x64xf32> to vector<1x64xf32>
    %161 = vector.broadcast %160 : vector<1x64xf32> to vector<32x64xf32>
    %162 = arith.addf %158, %161 : vector<32x64xf32>
    %163 = arith.mulf %162, %162 : vector<32x64xf32>
    %164 = arith.mulf %162, %163 : vector<32x64xf32>
    %cst_60 = arith.constant 4.471500e-02 : f32
    %165 = vector.broadcast %cst_60 : f32 to vector<32x64xf32>
    %166 = arith.mulf %165, %164 : vector<32x64xf32>
    %167 = arith.addf %162, %166 : vector<32x64xf32>
    %cst_61 = arith.constant 0.797884583 : f32
    %168 = vector.broadcast %cst_61 : f32 to vector<32x64xf32>
    %169 = arith.mulf %168, %167 : vector<32x64xf32>
    %170 = math.tanh %169 : vector<32x64xf32>
    %cst_62 = arith.constant 1.000000e+00 : f32
    %171 = vector.broadcast %cst_62 : f32 to vector<32x64xf32>
    %172 = arith.addf %171, %170 : vector<32x64xf32>
    %cst_63 = arith.constant 5.000000e-01 : f32
    %173 = vector.broadcast %cst_63 : f32 to vector<32x64xf32>
    %174 = arith.mulf %173, %172 : vector<32x64xf32>
    %175 = arith.mulf %162, %174 : vector<32x64xf32>
    %c0_64 = arith.constant 0 : index
    %c0_65 = arith.constant 0 : index
    %c0_66 = arith.constant 0 : index
    %176 = vector.load %arg9[%c0_64, %c0_65, %c0_66] : memref<2x64x32xbf16, #tpu.memory_space<vmem>>, vector<1x64x32xbf16>
    %177 = vector.shape_cast %176 : vector<1x64x32xbf16> to vector<64x32xbf16>
    %178 = arith.truncf %175 : vector<32x64xf32> to vector<32x64xbf16>
    %cst_67 = arith.constant dense<0.000000e+00> : vector<32x32xf32>
    %179 = tpu.matmul %178, %177, %cst_67 {dimension_numbers = #tpu.dot_dimension_numbers<[1], [0], [0], [1], [0, 0, 1, 1], [], []>} : vector<32x64xbf16>, vector<64x32xbf16>, vector<32x32xf32> -> vector<32x32xf32>
    %180 = vector.extract_strided_slice %29 {offsets = [3, 0], sizes = [1, 32], strides = [1, 1]} : vector<6x32xf32> to vector<1x32xf32>
    %181 = vector.broadcast %180 : vector<1x32xf32> to vector<32x32xf32>
    %182 = arith.addf %179, %181 : vector<32x32xf32>
    %183 = arith.addf %154, %182 : vector<32x32xf32>
    %184 = vector.extract_strided_slice %29 {offsets = [4, 0], sizes = [1, 32], strides = [1, 1]} : vector<6x32xf32> to vector<1x32xf32>
    %185 = vector.extract_strided_slice %29 {offsets = [5, 0], sizes = [1, 32], strides = [1, 1]} : vector<6x32xf32> to vector<1x32xf32>
    %cst_68 = arith.constant dense<0.000000e+00> : vector<32xf32>
    %186 = vector.multi_reduction <add>, %183, %cst_68 [1] : vector<32x32xf32> to vector<32xf32>
    %187 = vector.shape_cast %186 : vector<32xf32> to vector<32x1xf32>
    %cst_69 = arith.constant 3.200000e+01 : f32
    %188 = vector.broadcast %cst_69 : f32 to vector<32x1xf32>
    %189 = arith.divf %187, %188 : vector<32x1xf32>
    %190 = vector.broadcast %189 : vector<32x1xf32> to vector<32x32xf32>
    %191 = arith.subf %183, %190 : vector<32x32xf32>
    %192 = arith.mulf %191, %191 : vector<32x32xf32>
    %cst_70 = arith.constant dense<0.000000e+00> : vector<32xf32>
    %193 = vector.multi_reduction <add>, %192, %cst_70 [1] : vector<32x32xf32> to vector<32xf32>
    %194 = vector.shape_cast %193 : vector<32xf32> to vector<32x1xf32>
    %cst_71 = arith.constant 3.200000e+01 : f32
    %195 = vector.broadcast %cst_71 : f32 to vector<32x1xf32>
    %196 = arith.divf %194, %195 : vector<32x1xf32>
    %197 = vector.broadcast %189 : vector<32x1xf32> to vector<32x32xf32>
    %198 = arith.subf %183, %197 : vector<32x32xf32>
    %cst_72 = arith.constant 9.99999996E-13 : f32
    %199 = vector.broadcast %cst_72 : f32 to vector<32x1xf32>
    %200 = arith.addf %196, %199 : vector<32x1xf32>
    %201 = math.rsqrt %200 : vector<32x1xf32>
    %202 = vector.broadcast %201 : vector<32x1xf32> to vector<32x32xf32>
    %203 = arith.mulf %198, %202 : vector<32x32xf32>
    %204 = vector.broadcast %184 : vector<1x32xf32> to vector<32x32xf32>
    %205 = arith.mulf %203, %204 : vector<32x32xf32>
    %206 = vector.broadcast %185 : vector<1x32xf32> to vector<32x32xf32>
    %207 = arith.addf %205, %206 : vector<32x32xf32>
    %c1_73 = arith.constant 1 : index
    %c0_74 = arith.constant 0 : index
    %c0_75 = arith.constant 0 : index
    %208 = vector.load %arg6[%c1_73, %c0_74, %c0_75] : memref<2x32x32xbf16, #tpu.memory_space<vmem>>, vector<1x32x32xbf16>
    %209 = vector.shape_cast %208 : vector<1x32x32xbf16> to vector<32x32xbf16>
    %c1_76 = arith.constant 1 : index
    %c0_77 = arith.constant 0 : index
    %c0_78 = arith.constant 0 : index
    %210 = vector.load %arg10[%c1_76, %c0_77, %c0_78] : memref<2x6x32xf32, #tpu.memory_space<vmem>>, vector<1x6x32xf32>
    %211 = vector.shape_cast %210 : vector<1x6x32xf32> to vector<6x32xf32>
    %c1_79 = arith.constant 1 : index
    %c0_80 = arith.constant 0 : index
    %c0_81 = arith.constant 0 : index
    %212 = vector.load %arg4[%c1_79, %c0_80, %c0_81] : memref<2x32x96xbf16, #tpu.memory_space<vmem>>, vector<1x32x96xbf16>
    %213 = vector.shape_cast %212 : vector<1x32x96xbf16> to vector<32x96xbf16>
    %214 = arith.truncf %207 : vector<32x32xf32> to vector<32x32xbf16>
    %cst_82 = arith.constant dense<0.000000e+00> : vector<32x96xf32>
    %215 = tpu.matmul %214, %213, %cst_82 {dimension_numbers = #tpu.dot_dimension_numbers<[1], [0], [0], [1], [0, 0, 1, 1], [], []>} : vector<32x32xbf16>, vector<32x96xbf16>, vector<32x96xf32> -> vector<32x96xf32>
    %c1_83 = arith.constant 1 : index
    %c0_84 = arith.constant 0 : index
    %c0_85 = arith.constant 0 : index
    %216 = vector.load %arg5[%c1_83, %c0_84, %c0_85] : memref<2x1x96xf32, #tpu.memory_space<vmem>>, vector<1x1x96xf32>
    %217 = vector.shape_cast %216 : vector<1x1x96xf32> to vector<1x96xf32>
    %218 = vector.broadcast %217 : vector<1x96xf32> to vector<32x96xf32>
    %219 = arith.addf %215, %218 : vector<32x96xf32>
    %cst_86 = arith.constant 0.000000e+00 : f32
    %220 = vector.broadcast %cst_86 : f32 to vector<32x32xf32>
    %221 = vector.extract_strided_slice %219 {offsets = [0, 0], sizes = [32, 8], strides = [1, 1]} : vector<32x96xf32> to vector<32x8xf32>
    %222 = vector.extract_strided_slice %219 {offsets = [0, 32], sizes = [32, 8], strides = [1, 1]} : vector<32x96xf32> to vector<32x8xf32>
    %223 = vector.extract_strided_slice %219 {offsets = [0, 64], sizes = [32, 8], strides = [1, 1]} : vector<32x96xf32> to vector<32x8xf32>
    %cst_87 = arith.constant dense<0.000000e+00> : vector<32x32xf32>
    %224 = tpu.matmul %221, %222, %cst_87 {dimension_numbers = #tpu.dot_dimension_numbers<[1], [1], [0], [0], [0, 0, 1, 0], [], []>} : vector<32x8xf32>, vector<32x8xf32>, vector<32x32xf32> -> vector<32x32xf32>
    %cst_88 = arith.constant 0.353553385 : f32
    %225 = vector.broadcast %cst_88 : f32 to vector<32x32xf32>
    %226 = arith.mulf %224, %225 : vector<32x32xf32>
    %227 = arith.addf %226, %1 : vector<32x32xf32>
    %cst_89 = arith.constant dense<0xFF800000> : vector<32xf32>
    %228 = vector.multi_reduction <maximumf>, %227, %cst_89 [1] : vector<32x32xf32> to vector<32xf32>
    %229 = vector.shape_cast %228 : vector<32xf32> to vector<32x1xf32>
    %230 = vector.broadcast %229 : vector<32x1xf32> to vector<32x32xf32>
    %231 = arith.subf %227, %230 : vector<32x32xf32>
    %232 = math.exp %231 : vector<32x32xf32>
    %cst_90 = arith.constant dense<0.000000e+00> : vector<32xf32>
    %233 = vector.multi_reduction <add>, %232, %cst_90 [1] : vector<32x32xf32> to vector<32xf32>
    %234 = vector.shape_cast %233 : vector<32xf32> to vector<32x1xf32>
    %235 = tpu.reciprocal %234 {approx = true} : vector<32x1xf32> -> vector<32x1xf32>
    %236 = vector.broadcast %235 : vector<32x1xf32> to vector<32x32xf32>
    %237 = arith.mulf %232, %236 : vector<32x32xf32>
    %cst_91 = arith.constant dense<0.000000e+00> : vector<32x8xf32>
    %238 = tpu.matmul %237, %223, %cst_91 {dimension_numbers = #tpu.dot_dimension_numbers<[1], [0], [0], [1], [0, 0, 1, 1], [], []>} : vector<32x32xf32>, vector<32x8xf32>, vector<32x8xf32> -> vector<32x8xf32>
    %239 = vector.extract_strided_slice %209 {offsets = [0, 0], sizes = [8, 32], strides = [1, 1]} : vector<32x32xbf16> to vector<8x32xbf16>
    %240 = arith.truncf %238 : vector<32x8xf32> to vector<32x8xbf16>
    %cst_92 = arith.constant dense<0.000000e+00> : vector<32x32xf32>
    %241 = tpu.matmul %240, %239, %cst_92 {dimension_numbers = #tpu.dot_dimension_numbers<[1], [0], [0], [1], [0, 0, 1, 1], [], []>} : vector<32x8xbf16>, vector<8x32xbf16>, vector<32x32xf32> -> vector<32x32xf32>
    %242 = arith.addf %220, %241 : vector<32x32xf32>
    %243 = vector.extract_strided_slice %219 {offsets = [0, 8], sizes = [32, 8], strides = [1, 1]} : vector<32x96xf32> to vector<32x8xf32>
    %244 = vector.extract_strided_slice %219 {offsets = [0, 40], sizes = [32, 8], strides = [1, 1]} : vector<32x96xf32> to vector<32x8xf32>
    %245 = vector.extract_strided_slice %219 {offsets = [0, 72], sizes = [32, 8], strides = [1, 1]} : vector<32x96xf32> to vector<32x8xf32>
    %cst_93 = arith.constant dense<0.000000e+00> : vector<32x32xf32>
    %246 = tpu.matmul %243, %244, %cst_93 {dimension_numbers = #tpu.dot_dimension_numbers<[1], [1], [0], [0], [0, 0, 1, 0], [], []>} : vector<32x8xf32>, vector<32x8xf32>, vector<32x32xf32> -> vector<32x32xf32>
    %cst_94 = arith.constant 0.353553385 : f32
    %247 = vector.broadcast %cst_94 : f32 to vector<32x32xf32>
    %248 = arith.mulf %246, %247 : vector<32x32xf32>
    %249 = arith.addf %248, %1 : vector<32x32xf32>
    %cst_95 = arith.constant dense<0xFF800000> : vector<32xf32>
    %250 = vector.multi_reduction <maximumf>, %249, %cst_95 [1] : vector<32x32xf32> to vector<32xf32>
    %251 = vector.shape_cast %250 : vector<32xf32> to vector<32x1xf32>
    %252 = vector.broadcast %251 : vector<32x1xf32> to vector<32x32xf32>
    %253 = arith.subf %249, %252 : vector<32x32xf32>
    %254 = math.exp %253 : vector<32x32xf32>
    %cst_96 = arith.constant dense<0.000000e+00> : vector<32xf32>
    %255 = vector.multi_reduction <add>, %254, %cst_96 [1] : vector<32x32xf32> to vector<32xf32>
    %256 = vector.shape_cast %255 : vector<32xf32> to vector<32x1xf32>
    %257 = tpu.reciprocal %256 {approx = true} : vector<32x1xf32> -> vector<32x1xf32>
    %258 = vector.broadcast %257 : vector<32x1xf32> to vector<32x32xf32>
    %259 = arith.mulf %254, %258 : vector<32x32xf32>
    %cst_97 = arith.constant dense<0.000000e+00> : vector<32x8xf32>
    %260 = tpu.matmul %259, %245, %cst_97 {dimension_numbers = #tpu.dot_dimension_numbers<[1], [0], [0], [1], [0, 0, 1, 1], [], []>} : vector<32x32xf32>, vector<32x8xf32>, vector<32x8xf32> -> vector<32x8xf32>
    %261 = vector.extract_strided_slice %209 {offsets = [8, 0], sizes = [8, 32], strides = [1, 1]} : vector<32x32xbf16> to vector<8x32xbf16>
    %262 = arith.truncf %260 : vector<32x8xf32> to vector<32x8xbf16>
    %cst_98 = arith.constant dense<0.000000e+00> : vector<32x32xf32>
    %263 = tpu.matmul %262, %261, %cst_98 {dimension_numbers = #tpu.dot_dimension_numbers<[1], [0], [0], [1], [0, 0, 1, 1], [], []>} : vector<32x8xbf16>, vector<8x32xbf16>, vector<32x32xf32> -> vector<32x32xf32>
    %264 = arith.addf %242, %263 : vector<32x32xf32>
    %265 = vector.extract_strided_slice %219 {offsets = [0, 16], sizes = [32, 8], strides = [1, 1]} : vector<32x96xf32> to vector<32x8xf32>
    %266 = vector.extract_strided_slice %219 {offsets = [0, 48], sizes = [32, 8], strides = [1, 1]} : vector<32x96xf32> to vector<32x8xf32>
    %267 = vector.extract_strided_slice %219 {offsets = [0, 80], sizes = [32, 8], strides = [1, 1]} : vector<32x96xf32> to vector<32x8xf32>
    %cst_99 = arith.constant dense<0.000000e+00> : vector<32x32xf32>
    %268 = tpu.matmul %265, %266, %cst_99 {dimension_numbers = #tpu.dot_dimension_numbers<[1], [1], [0], [0], [0, 0, 1, 0], [], []>} : vector<32x8xf32>, vector<32x8xf32>, vector<32x32xf32> -> vector<32x32xf32>
    %cst_100 = arith.constant 0.353553385 : f32
    %269 = vector.broadcast %cst_100 : f32 to vector<32x32xf32>
    %270 = arith.mulf %268, %269 : vector<32x32xf32>
    %271 = arith.addf %270, %1 : vector<32x32xf32>
    %cst_101 = arith.constant dense<0xFF800000> : vector<32xf32>
    %272 = vector.multi_reduction <maximumf>, %271, %cst_101 [1] : vector<32x32xf32> to vector<32xf32>
    %273 = vector.shape_cast %272 : vector<32xf32> to vector<32x1xf32>
    %274 = vector.broadcast %273 : vector<32x1xf32> to vector<32x32xf32>
    %275 = arith.subf %271, %274 : vector<32x32xf32>
    %276 = math.exp %275 : vector<32x32xf32>
    %cst_102 = arith.constant dense<0.000000e+00> : vector<32xf32>
    %277 = vector.multi_reduction <add>, %276, %cst_102 [1] : vector<32x32xf32> to vector<32xf32>
    %278 = vector.shape_cast %277 : vector<32xf32> to vector<32x1xf32>
    %279 = tpu.reciprocal %278 {approx = true} : vector<32x1xf32> -> vector<32x1xf32>
    %280 = vector.broadcast %279 : vector<32x1xf32> to vector<32x32xf32>
    %281 = arith.mulf %276, %280 : vector<32x32xf32>
    %cst_103 = arith.constant dense<0.000000e+00> : vector<32x8xf32>
    %282 = tpu.matmul %281, %267, %cst_103 {dimension_numbers = #tpu.dot_dimension_numbers<[1], [0], [0], [1], [0, 0, 1, 1], [], []>} : vector<32x32xf32>, vector<32x8xf32>, vector<32x8xf32> -> vector<32x8xf32>
    %283 = vector.extract_strided_slice %209 {offsets = [16, 0], sizes = [8, 32], strides = [1, 1]} : vector<32x32xbf16> to vector<8x32xbf16>
    %284 = arith.truncf %282 : vector<32x8xf32> to vector<32x8xbf16>
    %cst_104 = arith.constant dense<0.000000e+00> : vector<32x32xf32>
    %285 = tpu.matmul %284, %283, %cst_104 {dimension_numbers = #tpu.dot_dimension_numbers<[1], [0], [0], [1], [0, 0, 1, 1], [], []>} : vector<32x8xbf16>, vector<8x32xbf16>, vector<32x32xf32> -> vector<32x32xf32>
    %286 = arith.addf %264, %285 : vector<32x32xf32>
    %287 = vector.extract_strided_slice %219 {offsets = [0, 24], sizes = [32, 8], strides = [1, 1]} : vector<32x96xf32> to vector<32x8xf32>
    %288 = vector.extract_strided_slice %219 {offsets = [0, 56], sizes = [32, 8], strides = [1, 1]} : vector<32x96xf32> to vector<32x8xf32>
    %289 = vector.extract_strided_slice %219 {offsets = [0, 88], sizes = [32, 8], strides = [1, 1]} : vector<32x96xf32> to vector<32x8xf32>
    %cst_105 = arith.constant dense<0.000000e+00> : vector<32x32xf32>
    %290 = tpu.matmul %287, %288, %cst_105 {dimension_numbers = #tpu.dot_dimension_numbers<[1], [1], [0], [0], [0, 0, 1, 0], [], []>} : vector<32x8xf32>, vector<32x8xf32>, vector<32x32xf32> -> vector<32x32xf32>
    %cst_106 = arith.constant 0.353553385 : f32
    %291 = vector.broadcast %cst_106 : f32 to vector<32x32xf32>
    %292 = arith.mulf %290, %291 : vector<32x32xf32>
    %293 = arith.addf %292, %1 : vector<32x32xf32>
    %cst_107 = arith.constant dense<0xFF800000> : vector<32xf32>
    %294 = vector.multi_reduction <maximumf>, %293, %cst_107 [1] : vector<32x32xf32> to vector<32xf32>
    %295 = vector.shape_cast %294 : vector<32xf32> to vector<32x1xf32>
    %296 = vector.broadcast %295 : vector<32x1xf32> to vector<32x32xf32>
    %297 = arith.subf %293, %296 : vector<32x32xf32>
    %298 = math.exp %297 : vector<32x32xf32>
    %cst_108 = arith.constant dense<0.000000e+00> : vector<32xf32>
    %299 = vector.multi_reduction <add>, %298, %cst_108 [1] : vector<32x32xf32> to vector<32xf32>
    %300 = vector.shape_cast %299 : vector<32xf32> to vector<32x1xf32>
    %301 = tpu.reciprocal %300 {approx = true} : vector<32x1xf32> -> vector<32x1xf32>
    %302 = vector.broadcast %301 : vector<32x1xf32> to vector<32x32xf32>
    %303 = arith.mulf %298, %302 : vector<32x32xf32>
    %cst_109 = arith.constant dense<0.000000e+00> : vector<32x8xf32>
    %304 = tpu.matmul %303, %289, %cst_109 {dimension_numbers = #tpu.dot_dimension_numbers<[1], [0], [0], [1], [0, 0, 1, 1], [], []>} : vector<32x32xf32>, vector<32x8xf32>, vector<32x8xf32> -> vector<32x8xf32>
    %305 = vector.extract_strided_slice %209 {offsets = [24, 0], sizes = [8, 32], strides = [1, 1]} : vector<32x32xbf16> to vector<8x32xbf16>
    %306 = arith.truncf %304 : vector<32x8xf32> to vector<32x8xbf16>
    %cst_110 = arith.constant dense<0.000000e+00> : vector<32x32xf32>
    %307 = tpu.matmul %306, %305, %cst_110 {dimension_numbers = #tpu.dot_dimension_numbers<[1], [0], [0], [1], [0, 0, 1, 1], [], []>} : vector<32x8xbf16>, vector<8x32xbf16>, vector<32x32xf32> -> vector<32x32xf32>
    %308 = arith.addf %286, %307 : vector<32x32xf32>
    %309 = vector.extract_strided_slice %211 {offsets = [0, 0], sizes = [1, 32], strides = [1, 1]} : vector<6x32xf32> to vector<1x32xf32>
    %310 = vector.broadcast %309 : vector<1x32xf32> to vector<32x32xf32>
    %311 = arith.addf %308, %310 : vector<32x32xf32>
    %312 = arith.addf %207, %311 : vector<32x32xf32>
    %313 = vector.extract_strided_slice %211 {offsets = [1, 0], sizes = [1, 32], strides = [1, 1]} : vector<6x32xf32> to vector<1x32xf32>
    %314 = vector.extract_strided_slice %211 {offsets = [2, 0], sizes = [1, 32], strides = [1, 1]} : vector<6x32xf32> to vector<1x32xf32>
    %cst_111 = arith.constant dense<0.000000e+00> : vector<32xf32>
    %315 = vector.multi_reduction <add>, %312, %cst_111 [1] : vector<32x32xf32> to vector<32xf32>
    %316 = vector.shape_cast %315 : vector<32xf32> to vector<32x1xf32>
    %cst_112 = arith.constant 3.200000e+01 : f32
    %317 = vector.broadcast %cst_112 : f32 to vector<32x1xf32>
    %318 = arith.divf %316, %317 : vector<32x1xf32>
    %319 = vector.broadcast %318 : vector<32x1xf32> to vector<32x32xf32>
    %320 = arith.subf %312, %319 : vector<32x32xf32>
    %321 = arith.mulf %320, %320 : vector<32x32xf32>
    %cst_113 = arith.constant dense<0.000000e+00> : vector<32xf32>
    %322 = vector.multi_reduction <add>, %321, %cst_113 [1] : vector<32x32xf32> to vector<32xf32>
    %323 = vector.shape_cast %322 : vector<32xf32> to vector<32x1xf32>
    %cst_114 = arith.constant 3.200000e+01 : f32
    %324 = vector.broadcast %cst_114 : f32 to vector<32x1xf32>
    %325 = arith.divf %323, %324 : vector<32x1xf32>
    %326 = vector.broadcast %318 : vector<32x1xf32> to vector<32x32xf32>
    %327 = arith.subf %312, %326 : vector<32x32xf32>
    %cst_115 = arith.constant 9.99999996E-13 : f32
    %328 = vector.broadcast %cst_115 : f32 to vector<32x1xf32>
    %329 = arith.addf %325, %328 : vector<32x1xf32>
    %330 = math.rsqrt %329 : vector<32x1xf32>
    %331 = vector.broadcast %330 : vector<32x1xf32> to vector<32x32xf32>
    %332 = arith.mulf %327, %331 : vector<32x32xf32>
    %333 = vector.broadcast %313 : vector<1x32xf32> to vector<32x32xf32>
    %334 = arith.mulf %332, %333 : vector<32x32xf32>
    %335 = vector.broadcast %314 : vector<1x32xf32> to vector<32x32xf32>
    %336 = arith.addf %334, %335 : vector<32x32xf32>
    %c1_116 = arith.constant 1 : index
    %c0_117 = arith.constant 0 : index
    %c0_118 = arith.constant 0 : index
    %337 = vector.load %arg7[%c1_116, %c0_117, %c0_118] : memref<2x32x64xbf16, #tpu.memory_space<vmem>>, vector<1x32x64xbf16>
    %338 = vector.shape_cast %337 : vector<1x32x64xbf16> to vector<32x64xbf16>
    %339 = arith.truncf %336 : vector<32x32xf32> to vector<32x32xbf16>
    %cst_119 = arith.constant dense<0.000000e+00> : vector<32x64xf32>
    %340 = tpu.matmul %339, %338, %cst_119 {dimension_numbers = #tpu.dot_dimension_numbers<[1], [0], [0], [1], [0, 0, 1, 1], [], []>} : vector<32x32xbf16>, vector<32x64xbf16>, vector<32x64xf32> -> vector<32x64xf32>
    %c1_120 = arith.constant 1 : index
    %c0_121 = arith.constant 0 : index
    %c0_122 = arith.constant 0 : index
    %341 = vector.load %arg8[%c1_120, %c0_121, %c0_122] : memref<2x1x64xf32, #tpu.memory_space<vmem>>, vector<1x1x64xf32>
    %342 = vector.shape_cast %341 : vector<1x1x64xf32> to vector<1x64xf32>
    %343 = vector.broadcast %342 : vector<1x64xf32> to vector<32x64xf32>
    %344 = arith.addf %340, %343 : vector<32x64xf32>
    %345 = arith.mulf %344, %344 : vector<32x64xf32>
    %346 = arith.mulf %344, %345 : vector<32x64xf32>
    %cst_123 = arith.constant 4.471500e-02 : f32
    %347 = vector.broadcast %cst_123 : f32 to vector<32x64xf32>
    %348 = arith.mulf %347, %346 : vector<32x64xf32>
    %349 = arith.addf %344, %348 : vector<32x64xf32>
    %cst_124 = arith.constant 0.797884583 : f32
    %350 = vector.broadcast %cst_124 : f32 to vector<32x64xf32>
    %351 = arith.mulf %350, %349 : vector<32x64xf32>
    %352 = math.tanh %351 : vector<32x64xf32>
    %cst_125 = arith.constant 1.000000e+00 : f32
    %353 = vector.broadcast %cst_125 : f32 to vector<32x64xf32>
    %354 = arith.addf %353, %352 : vector<32x64xf32>
    %cst_126 = arith.constant 5.000000e-01 : f32
    %355 = vector.broadcast %cst_126 : f32 to vector<32x64xf32>
    %356 = arith.mulf %355, %354 : vector<32x64xf32>
    %357 = arith.mulf %344, %356 : vector<32x64xf32>
    %c1_127 = arith.constant 1 : index
    %c0_128 = arith.constant 0 : index
    %c0_129 = arith.constant 0 : index
    %358 = vector.load %arg9[%c1_127, %c0_128, %c0_129] : memref<2x64x32xbf16, #tpu.memory_space<vmem>>, vector<1x64x32xbf16>
    %359 = vector.shape_cast %358 : vector<1x64x32xbf16> to vector<64x32xbf16>
    %360 = arith.truncf %357 : vector<32x64xf32> to vector<32x64xbf16>
    %cst_130 = arith.constant dense<0.000000e+00> : vector<32x32xf32>
    %361 = tpu.matmul %360, %359, %cst_130 {dimension_numbers = #tpu.dot_dimension_numbers<[1], [0], [0], [1], [0, 0, 1, 1], [], []>} : vector<32x64xbf16>, vector<64x32xbf16>, vector<32x32xf32> -> vector<32x32xf32>
    %362 = vector.extract_strided_slice %211 {offsets = [3, 0], sizes = [1, 32], strides = [1, 1]} : vector<6x32xf32> to vector<1x32xf32>
    %363 = vector.broadcast %362 : vector<1x32xf32> to vector<32x32xf32>
    %364 = arith.addf %361, %363 : vector<32x32xf32>
    %365 = arith.addf %336, %364 : vector<32x32xf32>
    %366 = vector.extract_strided_slice %211 {offsets = [4, 0], sizes = [1, 32], strides = [1, 1]} : vector<6x32xf32> to vector<1x32xf32>
    %367 = vector.extract_strided_slice %211 {offsets = [5, 0], sizes = [1, 32], strides = [1, 1]} : vector<6x32xf32> to vector<1x32xf32>
    %cst_131 = arith.constant dense<0.000000e+00> : vector<32xf32>
    %368 = vector.multi_reduction <add>, %365, %cst_131 [1] : vector<32x32xf32> to vector<32xf32>
    %369 = vector.shape_cast %368 : vector<32xf32> to vector<32x1xf32>
    %cst_132 = arith.constant 3.200000e+01 : f32
    %370 = vector.broadcast %cst_132 : f32 to vector<32x1xf32>
    %371 = arith.divf %369, %370 : vector<32x1xf32>
    %372 = vector.broadcast %371 : vector<32x1xf32> to vector<32x32xf32>
    %373 = arith.subf %365, %372 : vector<32x32xf32>
    %374 = arith.mulf %373, %373 : vector<32x32xf32>
    %cst_133 = arith.constant dense<0.000000e+00> : vector<32xf32>
    %375 = vector.multi_reduction <add>, %374, %cst_133 [1] : vector<32x32xf32> to vector<32xf32>
    %376 = vector.shape_cast %375 : vector<32xf32> to vector<32x1xf32>
    %cst_134 = arith.constant 3.200000e+01 : f32
    %377 = vector.broadcast %cst_134 : f32 to vector<32x1xf32>
    %378 = arith.divf %376, %377 : vector<32x1xf32>
    %379 = vector.broadcast %371 : vector<32x1xf32> to vector<32x32xf32>
    %380 = arith.subf %365, %379 : vector<32x32xf32>
    %cst_135 = arith.constant 9.99999996E-13 : f32
    %381 = vector.broadcast %cst_135 : f32 to vector<32x1xf32>
    %382 = arith.addf %378, %381 : vector<32x1xf32>
    %383 = math.rsqrt %382 : vector<32x1xf32>
    %384 = vector.broadcast %383 : vector<32x1xf32> to vector<32x32xf32>
    %385 = arith.mulf %380, %384 : vector<32x32xf32>
    %386 = vector.broadcast %366 : vector<1x32xf32> to vector<32x32xf32>
    %387 = arith.mulf %385, %386 : vector<32x32xf32>
    %388 = vector.broadcast %367 : vector<1x32xf32> to vector<32x32xf32>
    %389 = arith.addf %387, %388 : vector<32x32xf32>
    %390 = tpu.iota {dimensions = array<i32: 0>} : vector<4x32xi32>
    %391 = tpu.iota {dimensions = array<i32: 1>} : vector<4x32xi32>
    %c8_i32 = arith.constant 8 : i32
    %392 = vector.broadcast %c8_i32 : i32 to vector<4x32xi32>
    %393 = arith.muli %390, %392 : vector<4x32xi32>
    %394 = arith.cmpi eq, %391, %393 : vector<4x32xi32>
    %395 = arith.extui %394 : vector<4x32xi1> to vector<4x32xi32>
    %396 = arith.sitofp %395 : vector<4x32xi32> to vector<4x32xf32>
    %cst_136 = arith.constant dense<0.000000e+00> : vector<4x32xf32>
    %397 = tpu.matmul %396, %389, %cst_136 {dimension_numbers = #tpu.dot_dimension_numbers<[1], [0], [0], [1], [0, 0, 1, 1], [], []>} : vector<4x32xf32>, vector<32x32xf32>, vector<4x32xf32> -> vector<4x32xf32>
    %c0_137 = arith.constant 0 : index
    %c0_138 = arith.constant 0 : index
    %398 = vector.load %arg11[%c0_137, %c0_138] : memref<32x32xbf16, #tpu.memory_space<vmem>>, vector<32x32xbf16>
    %399 = arith.truncf %397 : vector<4x32xf32> to vector<4x32xbf16>
    %cst_139 = arith.constant dense<0.000000e+00> : vector<4x32xf32>
    %400 = tpu.matmul %399, %398, %cst_139 {dimension_numbers = #tpu.dot_dimension_numbers<[1], [0], [0], [1], [0, 0, 1, 1], [], []>} : vector<4x32xbf16>, vector<32x32xbf16>, vector<4x32xf32> -> vector<4x32xf32>
    %c0_140 = arith.constant 0 : index
    %c0_141 = arith.constant 0 : index
    %401 = vector.load %arg12[%c0_140, %c0_141] : memref<1x32xf32, #tpu.memory_space<vmem>>, vector<1x32xf32>
    %402 = vector.broadcast %401 : vector<1x32xf32> to vector<4x32xf32>
    %403 = arith.addf %400, %402 : vector<4x32xf32>
    %404 = math.tanh %403 : vector<4x32xf32>
    %c0_142 = arith.constant 0 : index
    %c0_143 = arith.constant 0 : index
    %405 = vector.load %arg13[%c0_142, %c0_143] : memref<4x32xf32, #tpu.memory_space<vmem>>, vector<4x32xf32>
    tpu.vector_store %arg13[%c0_142, %c0_143], %404 {strides = array<i32>} : memref<4x32xf32, #tpu.memory_space<vmem>>, vector<4x32xf32>,
    return
  }
  func.func @transform_0(%arg0: i32) -> (i32, i32) {
    %c0_i32 = arith.constant 0 : i32
    %c0_i32_0 = arith.constant 0 : i32
    %c0_i32_1 = arith.constant 0 : i32
    return %c0_i32, %c0_i32_0 : i32, i32
  }
  func.func @transform_1(%arg0: i32) -> (i32, i32) {
    %c0_i32 = arith.constant 0 : i32
    %c0_i32_0 = arith.constant 0 : i32
    %c0_i32_1 = arith.constant 0 : i32
    return %c0_i32, %c0_i32_0 : i32, i32
  }
  func.func @transform_2(%arg0: i32) -> (i32, i32) {
    %c0_i32 = arith.constant 0 : i32
    %c0_i32_0 = arith.constant 0 : i32
    %c0_i32_1 = arith.constant 0 : i32
    return %c0_i32, %c0_i32_0 : i32, i32
  }
  func.func @transform_3(%arg0: i32) -> (i32, i32, i32) {
    %c0_i32 = arith.constant 0 : i32
    %c0_i32_0 = arith.constant 0 : i32
    %c0_i32_1 = arith.constant 0 : i32
    %c0_i32_2 = arith.constant 0 : i32
    return %c0_i32, %c0_i32_0, %c0_i32_1 : i32, i32, i32
  }
  func.func @transform_4(%arg0: i32) -> (i32, i32, i32) {
    %c0_i32 = arith.constant 0 : i32
    %c0_i32_0 = arith.constant 0 : i32
    %c0_i32_1 = arith.constant 0 : i32
    %c0_i32_2 = arith.constant 0 : i32
    return %c0_i32, %c0_i32_0, %c0_i32_1 : i32, i32, i32
  }
  func.func @transform_5(%arg0: i32) -> (i32, i32, i32) {
    %c0_i32 = arith.constant 0 : i32
    %c0_i32_0 = arith.constant 0 : i32
    %c0_i32_1 = arith.constant 0 : i32
    %c0_i32_2 = arith.constant 0 : i32
    return %c0_i32, %c0_i32_0, %c0_i32_1 : i32, i32, i32
  }
  func.func @transform_6(%arg0: i32) -> (i32, i32, i32) {
    %c0_i32 = arith.constant 0 : i32
    %c0_i32_0 = arith.constant 0 : i32
    %c0_i32_1 = arith.constant 0 : i32
    %c0_i32_2 = arith.constant 0 : i32
    return %c0_i32, %c0_i32_0, %c0_i32_1 : i32, i32, i32
  }
  func.func @transform_7(%arg0: i32) -> (i32, i32, i32) {
    %c0_i32 = arith.constant 0 : i32
    %c0_i32_0 = arith.constant 0 : i32
    %c0_i32_1 = arith.constant 0 : i32
    %c0_i32_2 = arith.constant 0 : i32
    return %c0_i32, %c0_i32_0, %c0_i32_1 : i32, i32, i32
  }
  func.func @transform_8(%arg0: i32) -> (i32, i32, i32) {
    %c0_i32 = arith.constant 0 : i32
    %c0_i32_0 = arith.constant 0 : i32
    %c0_i32_1 = arith.constant 0 : i32
    %c0_i32_2 = arith.constant 0 : i32
    return %c0_i32, %c0_i32_0, %c0_i32_1 : i32, i32, i32
  }
  func.func @transform_9(%arg0: i32) -> (i32, i32, i32) {
    %c0_i32 = arith.constant 0 : i32
    %c0_i32_0 = arith.constant 0 : i32
    %c0_i32_1 = arith.constant 0 : i32
    %c0_i32_2 = arith.constant 0 : i32
    return %c0_i32, %c0_i32_0, %c0_i32_1 : i32, i32, i32
  }
  func.func @transform_10(%arg0: i32) -> (i32, i32) {
    %c0_i32 = arith.constant 0 : i32
    %c0_i32_0 = arith.constant 0 : i32
    %c0_i32_1 = arith.constant 0 : i32
    return %c0_i32, %c0_i32_0 : i32, i32
  }
  func.func @transform_11(%arg0: i32) -> (i32, i32) {
    %c0_i32 = arith.constant 0 : i32
    %c0_i32_0 = arith.constant 0 : i32
    %c0_i32_1 = arith.constant 0 : i32
    return %c0_i32, %c0_i32_0 : i32, i32
  }
  func.func @transform_12(%arg0: i32) -> (i32, i32) {
    %c0_i32 = arith.constant 0 : i32
    %c0_i32_0 = arith.constant 0 : i32
    %c0_i32_1 = arith.constant 0 : i32
    return %c0_i32, %c0_i32_0 : i32, i32
  }
}

</mosaic_0001>

<llo_original>
// kernel: eq.8
$region0: #{eq.8}
  %s0 = inlined_call_operand.vmem [shape: s32[4,8], index: 0, kind: input, shape index: {}]
  %s1 = inlined_call_operand.vmem [shape: s32[32], index: 1, kind: output, shape index: {}]
  $region1: #{eq.8} parent=0
    #allocation0 [shape = 'u8[4096]{0}', space=vmem, size = 0x1000, scoped, tag = 'scoped mem for output reshape']
    #allocation1 [shape = 'u8[4096]{0}', space=vmem, size = 0x1000, scoped, tag = 'scoped mem for input reshape']
    %s3 = sshll.u32 1, 4
    %s4 = ssub.s32 %s3, 1
    %v5 = vld [vmem:[%s0] sm:%s4]
    %6 = vst [vmem:[#allocation1] sm:%s4] %v5
    %v7 = vld [vmem:[#allocation1] sm:$0x1]
    %vm8 = vcmask 64512
    %9 = vst.msk [vmem:[#allocation0] sm:$0x1] %vm8, %v7
    %s10 = scalar_lea.vmem [#allocation1], 3
    %v11 = vld [vmem:[%s10] sm:$0x1]
    %12 = vrot.lane.b32.xlu0 %v11, 24
    %v13 = vpop.permute.xlu0 %12
    %vm14 = vcmask 261312
    %15 = vst.msk [vmem:[#allocation0] sm:$0x1] %vm14, %v13
    %s16 = scalar_lea.vmem [#allocation1], 2
    %v17 = vld [vmem:[%s16] sm:$0x1]
    %18 = vrot.lane.b32.xlu0 %v17, 16
    %v19 = vpop.permute.xlu0 %18
    %vm20 = vcmask 195712
    %21 = vst.msk [vmem:[#allocation0] sm:$0x1] %vm20, %v19
    %s22 = scalar_lea.vmem [#allocation1], 1
    %v23 = vld [vmem:[%s22] sm:$0x1]
    %24 = vrot.lane.b32.xlu0 %v23, 8
    %v25 = vpop.permute.xlu0 %24
    %vm26 = vcmask 130112
    %27 = vst.msk [vmem:[#allocation0] sm:$0x1] %vm26, %v25
    %s29 = sshll.u32 1, 1
    %s30 = ssub.s32 %s29, 1
    %v32 = vld [vmem:[#allocation0] sm:%s30]
    %s33 = sshll.u32 1, 1
    %s34 = ssub.s32 %s33, 1
    %35 = vst [vmem:[%s1] sm:%s34] %v32

// kernel: biencoder_forward.1
$region0: #{biencoder_forward.1}
  #allocation0 [shape = 'u32[]', space=smem, size = 0x4, offset = 0x4, fixed_abs, tag = 'smem constant byte address 0x4 - core index']
  #allocation1 [shape = 'u32[144,128]{1,0:T(1,128)}', space=vmem, size = 0x12000, scoped, tag = 'internal scratch']
  %s0 = inlined_call_operand.vmem [shape: f32[32,32], index: 0, kind: input, shape index: {}]
  %s1 = inlined_call_operand.vmem [shape: f32[32,32], index: 1, kind: input, shape index: {}]
  %s2 = inlined_call_operand.vmem [shape: f32[2,32], index: 2, kind: input, shape index: {}]
  %s3 = inlined_call_operand.vmem [shape: bf16[2,32,96], index: 3, kind: input, shape index: {}]
  %s4 = inlined_call_operand.vmem [shape: f32[2,1,96], index: 4, kind: input, shape index: {}]
  %s5 = inlined_call_operand.vmem [shape: bf16[2,32,32], index: 5, kind: input, shape index: {}]
  %s6 = inlined_call_operand.vmem [shape: bf16[2,32,64], index: 6, kind: input, shape index: {}]
  %s7 = inlined_call_operand.vmem [shape: f32[2,1,64], index: 7, kind: input, shape index: {}]
  %s8 = inlined_call_operand.vmem [shape: bf16[2,64,32], index: 8, kind: input, shape index: {}]
  %s9 = inlined_call_operand.vmem [shape: f32[2,6,32], index: 9, kind: input, shape index: {}]
  %s10 = inlined_call_operand.vmem [shape: bf16[32,32], index: 10, kind: input, shape index: {}]
  %s11 = inlined_call_operand.vmem [shape: f32[1,32], index: 11, kind: input, shape index: {}]
  %s12 = inlined_call_operand.vmem [shape: f32[4,32], index: 12, kind: output, shape index: {}]
  %s13 = sld [smem:[#allocation0]]
  $region58: #{biencoder_forward.1} parent=0
    _
  %s15 = ssub.s32 1, %s13
  %s16 = scalar_select 0, %s15, %s13
  // Predicated region
  $region2: #{biencoder_forward.1} parent=0 // pred_check
    _
  $region3: #{biencoder_forward.1} parent=0 // pred_check_branch
    %18 = sbr.rel (0) target = $region5
  $region4: #{biencoder_forward.1} parent=0 // pred_region
    _
  $region5: #{biencoder_forward.1} parent=0 // pred_fallthru
    _
  // Predicated region
  $region6: #{biencoder_forward.1} parent=0 // pred_check
    _
  $region7: #{biencoder_forward.1} parent=0 // pred_check_branch
    %20 = sbr.rel (0) target = $region9
  $region8: #{biencoder_forward.1} parent=0 // pred_region
    _
  $region9: #{biencoder_forward.1} parent=0 // pred_fallthru
    _
  // Predicated region
  $region10: #{biencoder_forward.1} parent=0 // pred_check
    _
  $region11: #{biencoder_forward.1} parent=0 // pred_check_branch
    %22 = sbr.rel (0) target = $region13
  $region12: #{biencoder_forward.1} parent=0 // pred_region
    _
  $region13: #{biencoder_forward.1} parent=0 // pred_fallthru
    _
  // Predicated region
  $region14: #{biencoder_forward.1} parent=0 // pred_check
    _
  $region15: #{biencoder_forward.1} parent=0 // pred_check_branch
    %24 = sbr.rel (0) target = $region17
  $region16: #{biencoder_forward.1} parent=0 // pred_region
    _
  $region17: #{biencoder_forward.1} parent=0 // pred_fallthru
    _
  // Predicated region
  $region18: #{biencoder_forward.1} parent=0 // pred_check
    _
  $region19: #{biencoder_forward.1} parent=0 // pred_check_branch
    %26 = sbr.rel (0) target = $region21
  $region20: #{biencoder_forward.1} parent=0 // pred_region
    _
  $region21: #{biencoder_forward.1} parent=0 // pred_fallthru
    _
  // Predicated region
  $region22: #{biencoder_forward.1} parent=0 // pred_check
    _
  $region23: #{biencoder_forward.1} parent=0 // pred_check_branch
    %28 = sbr.rel (0) target = $region25
  $region24: #{biencoder_forward.1} parent=0 // pred_region
    _
  $region25: #{biencoder_forward.1} parent=0 // pred_fallthru
    _
  // Predicated region
  $region26: #{biencoder_forward.1} parent=0 // pred_check
    _
  $region27: #{biencoder_forward.1} parent=0 // pred_check_branch
    %30 = sbr.rel (0) target = $region29
  $region28: #{biencoder_forward.1} parent=0 // pred_region
    _
  $region29: #{biencoder_forward.1} parent=0 // pred_fallthru
    _
  // Predicated region
  $region30: #{biencoder_forward.1} parent=0 // pred_check
    _
  $region31: #{biencoder_forward.1} parent=0 // pred_check_branch
    %32 = sbr.rel (0) target = $region33
  $region32: #{biencoder_forward.1} parent=0 // pred_region
    _
  $region33: #{biencoder_forward.1} parent=0 // pred_fallthru
    _
  // Predicated region
  $region34: #{biencoder_forward.1} parent=0 // pred_check
    _
  $region35: #{biencoder_forward.1} parent=0 // pred_check_branch
    %34 = sbr.rel (0) target = $region37
  $region36: #{biencoder_forward.1} parent=0 // pred_region
    _
  $region37: #{biencoder_forward.1} parent=0 // pred_fallthru
    _
  // Predicated region
  $region38: #{biencoder_forward.1} parent=0 // pred_check
    _
  $region39: #{biencoder_forward.1} parent=0 // pred_check_branch
    %36 = sbr.rel (0) target = $region41
  $region40: #{biencoder_forward.1} parent=0 // pred_region
    _
  $region41: #{biencoder_forward.1} parent=0 // pred_fallthru
    _
  // Predicated region
  $region42: #{biencoder_forward.1} parent=0 // pred_check
    _
  $region43: #{biencoder_forward.1} parent=0 // pred_check_branch
    %38 = sbr.rel (0) target = $region45
  $region44: #{biencoder_forward.1} parent=0 // pred_region
    _
  $region45: #{biencoder_forward.1} parent=0 // pred_fallthru
    _
  // Predicated region
  $region46: #{biencoder_forward.1} parent=0 // pred_check
    _
  $region47: #{biencoder_forward.1} parent=0 // pred_check_branch
    %40 = sbr.rel (0) target = $region49
  $region48: #{biencoder_forward.1} parent=0 // pred_region
    _
  $region49: #{biencoder_forward.1} parent=0 // pred_fallthru
    _
  %v42 = vld [vmem:[%s0] sm:$0xff]
  %v43 = vld [vmem:[%s0 + $0x8] sm:$0xff]
  %v44 = vld [vmem:[%s0 + $0x10] sm:$0xff]
  %v45 = vld [vmem:[%s0 + $0x18] sm:$0xff]
  %v46 = vld [vmem:[%s1] sm:$0xff]
  %v47 = vld [vmem:[%s1 + $0x8] sm:$0xff]
  %v48 = vld [vmem:[%s1 + $0x10] sm:$0xff]
  %v49 = vld [vmem:[%s1 + $0x18] sm:$0xff]
  %v50 = vld [vmem:[%s2] sm:$0x1]
  %v51 = vld [vmem:[%s2 + $0x1] sm:$0x1]
  %vm52 = vcmask 261120
  %v53 = vsel %vm52, %v42, 0.0
  %54 = vadd.xlane.f32.xlu0 %v53
  %v55 = vpop.xlane.xlu0 %54
  %v56 = vsel %vm52, %v43, 0.0
  %57 = vadd.xlane.f32.xlu0 %v56
  %v58 = vpop.xlane.xlu0 %57
  %v59 = vsel %vm52, %v44, 0.0
  %60 = vadd.xlane.f32.xlu0 %v59
  %v61 = vpop.xlane.xlu0 %60
  %v62 = vsel %vm52, %v45, 0.0
  %63 = vadd.xlane.f32.xlu0 %v62
  %v64 = vpop.xlane.xlu0 %63
  %v65 = vrcp.pop 32.0
  %v66 = vmul.f32 %v55, %v65
  %v67 = vmul.f32 %v58, %v65
  %v68 = vmul.f32 %v61, %v65
  %v69 = vmul.f32 %v64, %v65
  %v70 = vsub.f32 %v42, %v66
  %v71 = vsub.f32 %v43, %v67
  %v72 = vsub.f32 %v44, %v68
  %v73 = vsub.f32 %v45, %v69
  %v74 = vmul.f32 %v70, %v70
  %v75 = vmul.f32 %v71, %v71
  %v76 = vmul.f32 %v72, %v72
  %v77 = vmul.f32 %v73, %v73
  %v78 = vsel %vm52, %v74, 0.0
  %79 = vadd.xlane.f32.xlu0 %v78
  %v80 = vpop.xlane.xlu0 %79
  %v81 = vsel %vm52, %v75, 0.0
  %82 = vadd.xlane.f32.xlu0 %v81
  %v83 = vpop.xlane.xlu0 %82
  %v84 = vsel %vm52, %v76, 0.0
  %85 = vadd.xlane.f32.xlu0 %v84
  %v86 = vpop.xlane.xlu0 %85
  %v87 = vsel %vm52, %v77, 0.0
  %88 = vadd.xlane.f32.xlu0 %v87
  %v89 = vpop.xlane.xlu0 %88
  %v90 = vmul.f32 %v80, %v65
  %v91 = vmul.f32 %v83, %v65
  %v92 = vmul.f32 %v86, %v65
  %v93 = vmul.f32 %v89, %v65
  %v94 = vadd.f32 %v90, 1e-12
  %v95 = vadd.f32 %v91, 1e-12
  %v96 = vadd.f32 %v92, 1e-12
  %v97 = vadd.f32 %v93, 1e-12
  %v98 = vrsqrt.pop %v94
  %v99 = vrsqrt.pop %v95
  %v100 = vrsqrt.pop %v96
  %v101 = vrsqrt.pop %v97
  %v102 = vmul.f32 %v70, %v98
  %v103 = vmul.f32 %v71, %v99
  %v104 = vmul.f32 %v72, %v100
  %v105 = vmul.f32 %v73, %v101
  %v106 = vlaneseq
  %v107 = vshrl.u32 %v106, 7
  %v108 = vsub.s32 0, %v107
  %v109 = vrot.slane %v50, %v108
  %v110 = vmul.f32 %v102, %v109
  %v111 = vmul.f32 %v103, %v109
  %v112 = vmul.f32 %v104, %v109
  %v113 = vmul.f32 %v105, %v109
  %v114 = vlaneseq
  %v115 = vshrl.u32 %v114, 7
  %v116 = vsub.s32 0, %v115
  %v117 = vrot.slane %v51, %v116
  %v118 = vadd.f32 %v110, %v117
  %v119 = vadd.f32 %v111, %v117
  %v120 = vadd.f32 %v112, %v117
  %v121 = vadd.f32 %v113, %v117
  %v122 = vld [vmem:[%s5] sm:$0xf]
  %v123 = vld [vmem:[%s5 + $0x4] sm:$0xf]
  %v124 = vld [vmem:[%s5 + $0x8] sm:$0xf]
  %v125 = vld [vmem:[%s5 + $0xc] sm:$0xf]
  %v126 = vld [vmem:[%s9] sm:$0x3f]
  %v127 = vld [vmem:[%s3] sm:$0xf]
  %v128 = vld [vmem:[%s3 + $0x4] sm:$0xf]
  %v129 = vld [vmem:[%s3 + $0x8] sm:$0xf]
  %v130 = vld [vmem:[%s3 + $0xc] sm:$0xf]
  %v131 = vpack.c.bf16 %v119, %v118
  %v132 = vpack.c.bf16 %v121, %v120
  %v133 = vld [vmem:[%s4] sm:$0x1]
  %v135 = vlaneseq
  %v136 = vshrl.u32 %v135, 7
  %v137 = vsub.s32 0, %v136
  %v138 = vrot.slane %v133, %v137
  %v144 = vunpack.c.l.b16 %v127
  %v145 = vunpack.c.l.b16 %v128
  %v146 = vunpack.c.l.b16 %v129
  %v147 = vunpack.c.l.b16 %v130
  %v148 = vpack.c.b16 %v145, %v144
  %v149 = vpack.c.b16 %v147, %v146
  %v153 = vsel %vm52, %v131, 0
  %v156 = vsel %vm52, %v132, 0
  %158 = vmatprep.subr.bf16.mxu0 0
  %159 = vmatpush1.bf16.msra.mxu0 0
  %160 = vmatprep.subr.bf16.mxu0 0
  %161 = vmatpush1.bf16.msra.mxu0 0
  %162 = vmatprep.subr.bf16.mxu0 0
  %163 = vmatpush1.bf16.msra.mxu0 0
  %164 = vmatprep.subr.bf16.mxu0 0
  %165 = vmatpush1.bf16.msra.mxu0 0
  %166 = vmatprep.subr.bf16.mxu0 0
  %167 = vmatpush1.bf16.msra.mxu0 0
  %168 = vmatprep.subr.bf16.mxu0 0
  %169 = vmatpush1.bf16.msra.mxu0 0
  %170 = vmatprep.subr.bf16.mxu0 0
  %171 = vmatpush1.bf16.msra.mxu0 %v149
  %172 = vmatprep.subr.bf16.mxu0 0
  %173 = vmatpush1.bf16.msra.mxu0 %v148
  %174 = vmatprep.subr.bf16.mxu0 0
  %175 = vmatpush2.bf16.msra.mxu0 0
  %176 = vmatprep.subr.bf16.mxu0 0
  %177 = vmatpush2.bf16.msra.mxu0 0
  %178 = vmatprep.subr.bf16.mxu0 0
  %179 = vmatpush2.bf16.msra.mxu0 0
  %180 = vmatprep.subr.bf16.mxu0 0
  %181 = vmatpush2.bf16.msra.mxu0 0
  %182 = vmatprep.subr.bf16.mxu0 0
  %183 = vmatpush2.bf16.msra.mxu0 0
  %184 = vmatprep.subr.bf16.mxu0 0
  %185 = vmatpush2.bf16.msra.mxu0 0
  %186 = vmatprep.subr.bf16.mxu0 0
  %187 = vmatpush2.bf16.msra.mxu0 0
  %188 = vmatprep.subr.bf16.mxu0 0
  %189 = vmatpush2.bf16.msra.mxu0 0
  %190 = vmatprep.mubr.bf16.mxu0 0
  %191 = vmatmul.mubr.bf16.gmra.mxu0 %v153
  %v192 = vpop.f32.mrf.mxu0
  %v193 = vadd.f32 %v138, %v192
  %v194 = vpop.f32.mrf.mxu0
  %v195 = vpop.f32.mrf.mxu0
  %v196 = vadd.f32 %v138, %v195
  %v197 = vpop.f32.mrf.mxu0
  %198 = vmatprep.mubr.bf16.mxu0 0
  %199 = vmatmul.mubr.bf16.gmra.mxu0 %v156
  %v200 = vpop.f32.mrf.mxu0
  %v201 = vadd.f32 %v138, %v200
  %v202 = vpop.f32.mrf.mxu0
  %v203 = vpop.f32.mrf.mxu0
  %v204 = vadd.f32 %v138, %v203
  %v205 = vpop.f32.mrf.mxu0
  %206 = vdwg.mxu0
  %211 = vrot.lane.b32.xlu0 %v193, 96
  %v212 = vpop.permute.xlu0 %211
  %213 = vrot.lane.b32.xlu0 %v196, 96
  %v214 = vpop.permute.xlu0 %213
  %215 = vrot.lane.b32.xlu0 %v201, 96
  %v216 = vpop.permute.xlu0 %215
  %217 = vrot.lane.b32.xlu0 %v204, 96
  %v218 = vpop.permute.xlu0 %217
  %vm219 = vcmask 64512
  %v220 = vsel %vm219, %v193, 0
  %v222 = vsel %vm219, %v196, 0
  %v224 = vsel %vm219, %v201, 0
  %v226 = vsel %vm219, %v204, 0
  %v228 = vsel %vm219, %v212, 0
  %v230 = vsel %vm219, %v214, 0
  %v232 = vsel %vm219, %v216, 0
  %v234 = vsel %vm219, %v218, 0
  %236 = vmatprep.subr.mxu0 0.0
  %237 = vmatpush1.xpose.msra.mxu0 0.0
  %238 = vmatprep.subr.mxu0 0.0
  %239 = vmatpush1.xpose.msra.mxu0 0.0
  %240 = vmatprep.subr.mxu0 0.0
  %241 = vmatpush1.xpose.msra.mxu0 0.0
  %242 = vmatprep.subr.mxu0 0.0
  %243 = vmatpush1.xpose.msra.mxu0 0.0
  %244 = vmatprep.subr.mxu0 0.0
  %245 = vmatpush1.xpose.msra.mxu0 0.0
  %246 = vmatprep.subr.mxu0 0.0
  %247 = vmatpush1.xpose.msra.mxu0 0.0
  %248 = vmatprep.subr.mxu0 0.0
  %249 = vmatpush1.xpose.msra.mxu0 0.0
  %250 = vmatprep.subr.mxu0 0.0
  %251 = vmatpush1.xpose.msra.mxu0 0.0
  %252 = vmatprep.subr.mxu0 0.0
  %253 = vmatpush1.xpose.msra.mxu0 0.0
  %254 = vmatprep.subr.mxu0 0.0
  %255 = vmatpush1.xpose.msra.mxu0 0.0
  %256 = vmatprep.subr.mxu0 0.0
  %257 = vmatpush1.xpose.msra.mxu0 0.0
  %258 = vmatprep.subr.mxu0 0.0
  %259 = vmatpush1.xpose.msra.mxu0 0.0
  %260 = vmatprep.subr.mxu0 0.0
  %261 = vmatpush1.xpose.msra.mxu0 %v234
  %262 = vmatprep.subr.mxu0 0.0
  %263 = vmatpush1.xpose.msra.mxu0 %v232
  %264 = vmatprep.subr.mxu0 0.0
  %265 = vmatpush1.xpose.msra.mxu0 %v230
  %266 = vmatprep.subr.mxu0 0.0
  %267 = vmatpush1.xpose.msra.mxu0 %v228
  %268 = vmatprep.subr.mxu0 0.0
  %269 = vmatpush2.xpose.msra.mxu0 0.0
  %270 = vmatprep.subr.mxu0 0.0
  %271 = vmatpush2.xpose.msra.mxu0 0.0
  %272 = vmatprep.subr.mxu0 0.0
  %273 = vmatpush2.xpose.msra.mxu0 0.0
  %274 = vmatprep.subr.mxu0 0.0
  %275 = vmatpush2.xpose.msra.mxu0 0.0
  %276 = vmatprep.subr.mxu0 0.0
  %277 = vmatpush2.xpose.msra.mxu0 0.0
  %278 = vmatprep.subr.mxu0 0.0
  %279 = vmatpush2.xpose.msra.mxu0 0.0
  %280 = vmatprep.subr.mxu0 0.0
  %281 = vmatpush2.xpose.msra.mxu0 0.0
  %282 = vmatprep.subr.mxu0 0.0
  %283 = vmatpush2.xpose.msra.mxu0 0.0
  %284 = vmatprep.subr.mxu0 0.0
  %285 = vmatpush2.xpose.msra.mxu0 0.0
  %286 = vmatprep.subr.mxu0 0.0
  %287 = vmatpush2.xpose.msra.mxu0 0.0
  %288 = vmatprep.subr.mxu0 0.0
  %289 = vmatpush2.xpose.msra.mxu0 0.0
  %290 = vmatprep.subr.mxu0 0.0
  %291 = vmatpush2.xpose.msra.mxu0 0.0
  %292 = vmatprep.subr.mxu0 0.0
  %293 = vmatpush2.xpose.msra.mxu0 0.0
  %294 = vmatprep.subr.mxu0 0.0
  %295 = vmatpush2.xpose.msra.mxu0 0.0
  %296 = vmatprep.subr.mxu0 0.0
  %297 = vmatpush2.xpose.msra.mxu0 0.0
  %298 = vmatprep.subr.mxu0 0.0
  %299 = vmatpush2.xpose.msra.mxu0 0.0
  %300 = vmatprep.mubr.f32.mxu0 0.0
  %301 = vmatmul.mubr.f32.gmra.mxu0 %v220
  %v302 = vpop.f32.mrf.mxu0
  %v303 = vadd.f32 0.0, %v302
  %v304 = vpop.f32.mrf.mxu0
  %305 = vmatprep.mubr.f32.mxu0 0.0
  %306 = vmatmul.mubr.f32.gmra.mxu0 %v222
  %v307 = vpop.f32.mrf.mxu0
  %v308 = vadd.f32 0.0, %v307
  %v309 = vpop.f32.mrf.mxu0
  %310 = vmatprep.mubr.f32.mxu0 0.0
  %311 = vmatmul.mubr.f32.gmra.mxu0 %v224
  %v312 = vpop.f32.mrf.mxu0
  %v313 = vadd.f32 0.0, %v312
  %v314 = vpop.f32.mrf.mxu0
  %315 = vmatprep.mubr.f32.mxu0 0.0
  %316 = vmatmul.mubr.f32.gmra.mxu0 %v226
  %v317 = vpop.f32.mrf.mxu0
  %v318 = vadd.f32 0.0, %v317
  %v319 = vpop.f32.mrf.mxu0
  %320 = vdwg.mxu0
  %v321 = vmul.f32 %v303, 0.35355338
  %v322 = vmul.f32 %v308, 0.35355338
  %v323 = vmul.f32 %v313, 0.35355338
  %v324 = vmul.f32 %v318, 0.35355338
  %v325 = vadd.f32 %v321, %v46
  %v326 = vadd.f32 %v322, %v47
  %v327 = vadd.f32 %v323, %v48
  %v328 = vadd.f32 %v324, %v49
  %v329 = vsel %vm52, %v325, -inf
  %330 = vmax.xlane.f32.xlu0 %v329
  %v331 = vpop.xlane.xlu0 %330
  %v332 = vsel %vm52, %v326, -inf
  %333 = vmax.xlane.f32.xlu0 %v332
  %v334 = vpop.xlane.xlu0 %333
  %v335 = vsel %vm52, %v327, -inf
  %336 = vmax.xlane.f32.xlu0 %v335
  %v337 = vpop.xlane.xlu0 %336
  %v338 = vsel %vm52, %v328, -inf
  %339 = vmax.xlane.f32.xlu0 %v338
  %v340 = vpop.xlane.xlu0 %339
  %v341 = vsub.f32 %v325, %v331
  %v342 = vsub.f32 %v326, %v334
  %v343 = vsub.f32 %v327, %v337
  %v344 = vsub.f32 %v328, %v340
  %v345 = vmul.f32 %v341, 1.442695
  %v346 = vpow.pop %v345
  %v347 = vmul.f32 %v342, 1.442695
  %v348 = vpow.pop %v347
  %v349 = vmul.f32 %v343, 1.442695
  %v350 = vpow.pop %v349
  %v351 = vmul.f32 %v344, 1.442695
  %v352 = vpow.pop %v351
  %v353 = vsel %vm52, %v346, 0.0
  %354 = vadd.xlane.f32.xlu0 %v353
  %v355 = vpop.xlane.xlu0 %354
  %v356 = vsel %vm52, %v348, 0.0
  %357 = vadd.xlane.f32.xlu0 %v356
  %v358 = vpop.xlane.xlu0 %357
  %v359 = vsel %vm52, %v350, 0.0
  %360 = vadd.xlane.f32.xlu0 %v359
  %v361 = vpop.xlane.xlu0 %360
  %v362 = vsel %vm52, %v352, 0.0
  %363 = vadd.xlane.f32.xlu0 %v362
  %v364 = vpop.xlane.xlu0 %363
  %v365 = vrcp.pop %v355
  %v366 = vrcp.pop %v358
  %v367 = vrcp.pop %v361
  %v368 = vrcp.pop %v364
  %v369 = vmul.f32 %v346, %v365
  %v370 = vmul.f32 %v348, %v366
  %v371 = vmul.f32 %v350, %v367
  %v372 = vmul.f32 %v352, %v368
  %373 = vrot.lane.b32.xlu0 %v193, 64
  %v374 = vpop.permute.xlu0 %373
  %375 = vrot.lane.b32.xlu0 %v196, 64
  %v376 = vpop.permute.xlu0 %375
  %377 = vrot.lane.b32.xlu0 %v201, 64
  %v378 = vpop.permute.xlu0 %377
  %379 = vrot.lane.b32.xlu0 %v204, 64
  %v380 = vpop.permute.xlu0 %379
  %v386 = vsel %vm52, %v369, 0
  %v389 = vsel %vm52, %v370, 0
  %v392 = vsel %vm52, %v371, 0
  %v395 = vsel %vm52, %v372, 0
  %397 = vmatprep.subr.mxu0 0.0
  %398 = vmatpush1.msra.mxu0 0.0
  %399 = vmatprep.subr.mxu0 0.0
  %400 = vmatpush1.msra.mxu0 0.0
  %401 = vmatprep.subr.mxu0 0.0
  %402 = vmatpush1.msra.mxu0 0.0
  %403 = vmatprep.subr.mxu0 0.0
  %404 = vmatpush1.msra.mxu0 0.0
  %405 = vmatprep.subr.mxu0 0.0
  %406 = vmatpush1.msra.mxu0 0.0
  %407 = vmatprep.subr.mxu0 0.0
  %408 = vmatpush1.msra.mxu0 0.0
  %409 = vmatprep.subr.mxu0 0.0
  %410 = vmatpush1.msra.mxu0 0.0
  %411 = vmatprep.subr.mxu0 0.0
  %412 = vmatpush1.msra.mxu0 0.0
  %413 = vmatprep.subr.mxu0 0.0
  %414 = vmatpush1.msra.mxu0 0.0
  %415 = vmatprep.subr.mxu0 0.0
  %416 = vmatpush1.msra.mxu0 0.0
  %417 = vmatprep.subr.mxu0 0.0
  %418 = vmatpush1.msra.mxu0 0.0
  %419 = vmatprep.subr.mxu0 0.0
  %420 = vmatpush1.msra.mxu0 0.0
  %421 = vmatprep.subr.mxu0 0.0
  %422 = vmatpush1.msra.mxu0 %v380
  %423 = vmatprep.subr.mxu0 0.0
  %424 = vmatpush1.msra.mxu0 %v378
  %425 = vmatprep.subr.mxu0 0.0
  %426 = vmatpush1.msra.mxu0 %v376
  %427 = vmatprep.subr.mxu0 0.0
  %428 = vmatpush1.msra.mxu0 %v374
  %429 = vmatprep.subr.mxu0 0.0
  %430 = vmatpush2.msra.mxu0 0.0
  %431 = vmatprep.subr.mxu0 0.0
  %432 = vmatpush2.msra.mxu0 0.0
  %433 = vmatprep.subr.mxu0 0.0
  %434 = vmatpush2.msra.mxu0 0.0
  %435 = vmatprep.subr.mxu0 0.0
  %436 = vmatpush2.msra.mxu0 0.0
  %437 = vmatprep.subr.mxu0 0.0
  %438 = vmatpush2.msra.mxu0 0.0
  %439 = vmatprep.subr.mxu0 0.0
  %440 = vmatpush2.msra.mxu0 0.0
  %441 = vmatprep.subr.mxu0 0.0
  %442 = vmatpush2.msra.mxu0 0.0
  %443 = vmatprep.subr.mxu0 0.0
  %444 = vmatpush2.msra.mxu0 0.0
  %445 = vmatprep.subr.mxu0 0.0
  %446 = vmatpush2.msra.mxu0 0.0
  %447 = vmatprep.subr.mxu0 0.0
  %448 = vmatpush2.msra.mxu0 0.0
  %449 = vmatprep.subr.mxu0 0.0
  %450 = vmatpush2.msra.mxu0 0.0
  %451 = vmatprep.subr.mxu0 0.0
  %452 = vmatpush2.msra.mxu0 0.0
  %453 = vmatprep.subr.mxu0 0.0
  %454 = vmatpush2.msra.mxu0 0.0
  %455 = vmatprep.subr.mxu0 0.0
  %456 = vmatpush2.msra.mxu0 0.0
  %457 = vmatprep.subr.mxu0 0.0
  %458 = vmatpush2.msra.mxu0 0.0
  %459 = vmatprep.subr.mxu0 0.0
  %460 = vmatpush2.msra.mxu0 0.0
  %461 = vmatprep.mubr.f32.mxu0 0.0
  %462 = vmatmul.mubr.f32.gmra.mxu0 %v386
  %v463 = vpop.f32.mrf.mxu0
  %v464 = vadd.f32 0.0, %v463
  %v465 = vpop.f32.mrf.mxu0
  %466 = vmatprep.mubr.f32.mxu0 0.0
  %467 = vmatmul.mubr.f32.gmra.mxu0 %v389
  %v468 = vpop.f32.mrf.mxu0
  %v469 = vadd.f32 0.0, %v468
  %v470 = vpop.f32.mrf.mxu0
  %471 = vmatprep.mubr.f32.mxu0 0.0
  %472 = vmatmul.mubr.f32.gmra.mxu0 %v392
  %v473 = vpop.f32.mrf.mxu0
  %v474 = vadd.f32 0.0, %v473
  %v475 = vpop.f32.mrf.mxu0
  %476 = vmatprep.mubr.f32.mxu0 0.0
  %477 = vmatmul.mubr.f32.gmra.mxu0 %v395
  %v478 = vpop.f32.mrf.mxu0
  %v479 = vadd.f32 0.0, %v478
  %v480 = vpop.f32.mrf.mxu0
  %481 = vdwg.mxu0
  %v482 = vpack.c.bf16 %v469, %v464
  %v483 = vpack.c.bf16 %v479, %v474
  %484 = vrot.lane.b32.xlu0 %v193, 120
  %v485 = vpop.permute.xlu0 %484
  %486 = vrot.lane.b32.xlu0 %v196, 120
  %v487 = vpop.permute.xlu0 %486
  %488 = vrot.lane.b32.xlu0 %v201, 120
  %v489 = vpop.permute.xlu0 %488
  %490 = vrot.lane.b32.xlu0 %v204, 120
  %v491 = vpop.permute.xlu0 %490
  %492 = vrot.lane.b32.xlu0 %v193, 88
  %v493 = vpop.permute.xlu0 %492
  %494 = vrot.lane.b32.xlu0 %v196, 88
  %v495 = vpop.permute.xlu0 %494
  %496 = vrot.lane.b32.xlu0 %v201, 88
  %v497 = vpop.permute.xlu0 %496
  %498 = vrot.lane.b32.xlu0 %v204, 88
  %v499 = vpop.permute.xlu0 %498
  %v500 = vsel %vm219, %v485, 0
  %v502 = vsel %vm219, %v487, 0
  %v504 = vsel %vm219, %v489, 0
  %v506 = vsel %vm219, %v491, 0
  %v508 = vsel %vm219, %v493, 0
  %v510 = vsel %vm219, %v495, 0
  %v512 = vsel %vm219, %v497, 0
  %v514 = vsel %vm219, %v499, 0
  %516 = vmatprep.subr.mxu0 0.0
  %517 = vmatpush1.xpose.msra.mxu0 0.0
  %518 = vmatprep.subr.mxu0 0.0
  %519 = vmatpush1.xpose.msra.mxu0 0.0
  %520 = vmatprep.subr.mxu0 0.0
  %521 = vmatpush1.xpose.msra.mxu0 0.0
  %522 = vmatprep.subr.mxu0 0.0
  %523 = vmatpush1.xpose.msra.mxu0 0.0
  %524 = vmatprep.subr.mxu0 0.0
  %525 = vmatpush1.xpose.msra.mxu0 0.0
  %526 = vmatprep.subr.mxu0 0.0
  %527 = vmatpush1.xpose.msra.mxu0 0.0
  %528 = vmatprep.subr.mxu0 0.0
  %529 = vmatpush1.xpose.msra.mxu0 0.0
  %530 = vmatprep.subr.mxu0 0.0
  %531 = vmatpush1.xpose.msra.mxu0 0.0
  %532 = vmatprep.subr.mxu0 0.0
  %533 = vmatpush1.xpose.msra.mxu0 0.0
  %534 = vmatprep.subr.mxu0 0.0
  %535 = vmatpush1.xpose.msra.mxu0 0.0
  %536 = vmatprep.subr.mxu0 0.0
  %537 = vmatpush1.xpose.msra.mxu0 0.0
  %538 = vmatprep.subr.mxu0 0.0
  %539 = vmatpush1.xpose.msra.mxu0 0.0
  %540 = vmatprep.subr.mxu0 0.0
  %541 = vmatpush1.xpose.msra.mxu0 %v514
  %542 = vmatprep.subr.mxu0 0.0
  %543 = vmatpush1.xpose.msra.mxu0 %v512
  %544 = vmatprep.subr.mxu0 0.0
  %545 = vmatpush1.xpose.msra.mxu0 %v510
  %546 = vmatprep.subr.mxu0 0.0
  %547 = vmatpush1.xpose.msra.mxu0 %v508
  %548 = vmatprep.subr.mxu0 0.0
  %549 = vmatpush2.xpose.msra.mxu0 0.0
  %550 = vmatprep.subr.mxu0 0.0
  %551 = vmatpush2.xpose.msra.mxu0 0.0
  %552 = vmatprep.subr.mxu0 0.0
  %553 = vmatpush2.xpose.msra.mxu0 0.0
  %554 = vmatprep.subr.mxu0 0.0
  %555 = vmatpush2.xpose.msra.mxu0 0.0
  %556 = vmatprep.subr.mxu0 0.0
  %557 = vmatpush2.xpose.msra.mxu0 0.0
  %558 = vmatprep.subr.mxu0 0.0
  %559 = vmatpush2.xpose.msra.mxu0 0.0
  %560 = vmatprep.subr.mxu0 0.0
  %561 = vmatpush2.xpose.msra.mxu0 0.0
  %562 = vmatprep.subr.mxu0 0.0
  %563 = vmatpush2.xpose.msra.mxu0 0.0
  %564 = vmatprep.subr.mxu0 0.0
  %565 = vmatpush2.xpose.msra.mxu0 0.0
  %566 = vmatprep.subr.mxu0 0.0
  %567 = vmatpush2.xpose.msra.mxu0 0.0
  %568 = vmatprep.subr.mxu0 0.0
  %569 = vmatpush2.xpose.msra.mxu0 0.0
  %570 = vmatprep.subr.mxu0 0.0
  %571 = vmatpush2.xpose.msra.mxu0 0.0
  %572 = vmatprep.subr.mxu0 0.0
  %573 = vmatpush2.xpose.msra.mxu0 0.0
  %574 = vmatprep.subr.mxu0 0.0
  %575 = vmatpush2.xpose.msra.mxu0 0.0
  %576 = vmatprep.subr.mxu0 0.0
  %577 = vmatpush2.xpose.msra.mxu0 0.0
  %578 = vmatprep.subr.mxu0 0.0
  %579 = vmatpush2.xpose.msra.mxu0 0.0
  %580 = vmatprep.mubr.f32.mxu0 0.0
  %581 = vmatmul.mubr.f32.gmra.mxu0 %v500
  %v582 = vpop.f32.mrf.mxu0
  %v583 = vadd.f32 0.0, %v582
  %v584 = vpop.f32.mrf.mxu0
  %585 = vmatprep.mubr.f32.mxu0 0.0
  %586 = vmatmul.mubr.f32.gmra.mxu0 %v502
  %v587 = vpop.f32.mrf.mxu0
  %v588 = vadd.f32 0.0, %v587
  %v589 = vpop.f32.mrf.mxu0
  %590 = vmatprep.mubr.f32.mxu0 0.0
  %591 = vmatmul.mubr.f32.gmra.mxu0 %v504
  %v592 = vpop.f32.mrf.mxu0
  %v593 = vadd.f32 0.0, %v592
  %v594 = vpop.f32.mrf.mxu0
  %595 = vmatprep.mubr.f32.mxu0 0.0
  %596 = vmatmul.mubr.f32.gmra.mxu0 %v506
  %v597 = vpop.f32.mrf.mxu0
  %v598 = vadd.f32 0.0, %v597
  %v599 = vpop.f32.mrf.mxu0
  %600 = vdwg.mxu0
  %v601 = vmul.f32 %v583, 0.35355338
  %v602 = vmul.f32 %v588, 0.35355338
  %v603 = vmul.f32 %v593, 0.35355338
  %v604 = vmul.f32 %v598, 0.35355338
  %v605 = vadd.f32 %v601, %v46
  %v606 = vadd.f32 %v602, %v47
  %v607 = vadd.f32 %v603, %v48
  %v608 = vadd.f32 %v604, %v49
  %v609 = vsel %vm52, %v605, -inf
  %610 = vmax.xlane.f32.xlu0 %v609
  %v611 = vpop.xlane.xlu0 %610
  %v612 = vsel %vm52, %v606, -inf
  %613 = vmax.xlane.f32.xlu0 %v612
  %v614 = vpop.xlane.xlu0 %613
  %v615 = vsel %vm52, %v607, -inf
  %616 = vmax.xlane.f32.xlu0 %v615
  %v617 = vpop.xlane.xlu0 %616
  %v618 = vsel %vm52, %v608, -inf
  %619 = vmax.xlane.f32.xlu0 %v618
  %v620 = vpop.xlane.xlu0 %619
  %v621 = vsub.f32 %v605, %v611
  %v622 = vsub.f32 %v606, %v614
  %v623 = vsub.f32 %v607, %v617
  %v624 = vsub.f32 %v608, %v620
  %v625 = vmul.f32 %v621, 1.442695
  %v626 = vpow.pop %v625
  %v627 = vmul.f32 %v622, 1.442695
  %v628 = vpow.pop %v627
  %v629 = vmul.f32 %v623, 1.442695
  %v630 = vpow.pop %v629
  %v631 = vmul.f32 %v624, 1.442695
  %v632 = vpow.pop %v631
  %v633 = vsel %vm52, %v626, 0.0
  %634 = vadd.xlane.f32.xlu0 %v633
  %v635 = vpop.xlane.xlu0 %634
  %v636 = vsel %vm52, %v628, 0.0
  %637 = vadd.xlane.f32.xlu0 %v636
  %v638 = vpop.xlane.xlu0 %637
  %v639 = vsel %vm52, %v630, 0.0
  %640 = vadd.xlane.f32.xlu0 %v639
  %v641 = vpop.xlane.xlu0 %640
  %v642 = vsel %vm52, %v632, 0.0
  %643 = vadd.xlane.f32.xlu0 %v642
  %v644 = vpop.xlane.xlu0 %643
  %v645 = vrcp.pop %v635
  %v646 = vrcp.pop %v638
  %v647 = vrcp.pop %v641
  %v648 = vrcp.pop %v644
  %v649 = vmul.f32 %v626, %v645
  %v650 = vmul.f32 %v628, %v646
  %v651 = vmul.f32 %v630, %v647
  %v652 = vmul.f32 %v632, %v648
  %653 = vrot.lane.b32.xlu0 %v193, 56
  %v654 = vpop.permute.xlu0 %653
  %655 = vrot.lane.b32.xlu0 %v196, 56
  %v656 = vpop.permute.xlu0 %655
  %657 = vrot.lane.b32.xlu0 %v201, 56
  %v658 = vpop.permute.xlu0 %657
  %659 = vrot.lane.b32.xlu0 %v204, 56
  %v660 = vpop.permute.xlu0 %659
  %v666 = vsel %vm52, %v649, 0
  %v669 = vsel %vm52, %v650, 0
  %v672 = vsel %vm52, %v651, 0
  %v675 = vsel %vm52, %v652, 0
  %677 = vmatprep.subr.mxu0 0.0
  %678 = vmatpush1.msra.mxu0 0.0
  %679 = vmatprep.subr.mxu0 0.0
  %680 = vmatpush1.msra.mxu0 0.0
  %681 = vmatprep.subr.mxu0 0.0
  %682 = vmatpush1.msra.mxu0 0.0
  %683 = vmatprep.subr.mxu0 0.0
  %684 = vmatpush1.msra.mxu0 0.0
  %685 = vmatprep.subr.mxu0 0.0
  %686 = vmatpush1.msra.mxu0 0.0
  %687 = vmatprep.subr.mxu0 0.0
  %688 = vmatpush1.msra.mxu0 0.0
  %689 = vmatprep.subr.mxu0 0.0
  %690 = vmatpush1.msra.mxu0 0.0
  %691 = vmatprep.subr.mxu0 0.0
  %692 = vmatpush1.msra.mxu0 0.0
  %693 = vmatprep.subr.mxu0 0.0
  %694 = vmatpush1.msra.mxu0 0.0
  %695 = vmatprep.subr.mxu0 0.0
  %696 = vmatpush1.msra.mxu0 0.0
  %697 = vmatprep.subr.mxu0 0.0
  %698 = vmatpush1.msra.mxu0 0.0
  %699 = vmatprep.subr.mxu0 0.0
  %700 = vmatpush1.msra.mxu0 0.0
  %701 = vmatprep.subr.mxu0 0.0
  %702 = vmatpush1.msra.mxu0 %v660
  %703 = vmatprep.subr.mxu0 0.0
  %704 = vmatpush1.msra.mxu0 %v658
  %705 = vmatprep.subr.mxu0 0.0
  %706 = vmatpush1.msra.mxu0 %v656
  %707 = vmatprep.subr.mxu0 0.0
  %708 = vmatpush1.msra.mxu0 %v654
  %709 = vmatprep.subr.mxu0 0.0
  %710 = vmatpush2.msra.mxu0 0.0
  %711 = vmatprep.subr.mxu0 0.0
  %712 = vmatpush2.msra.mxu0 0.0
  %713 = vmatprep.subr.mxu0 0.0
  %714 = vmatpush2.msra.mxu0 0.0
  %715 = vmatprep.subr.mxu0 0.0
  %716 = vmatpush2.msra.mxu0 0.0
  %717 = vmatprep.subr.mxu0 0.0
  %718 = vmatpush2.msra.mxu0 0.0
  %719 = vmatprep.subr.mxu0 0.0
  %720 = vmatpush2.msra.mxu0 0.0
  %721 = vmatprep.subr.mxu0 0.0
  %722 = vmatpush2.msra.mxu0 0.0
  %723 = vmatprep.subr.mxu0 0.0
  %724 = vmatpush2.msra.mxu0 0.0
  %725 = vmatprep.subr.mxu0 0.0
  %726 = vmatpush2.msra.mxu0 0.0
  %727 = vmatprep.subr.mxu0 0.0
  %728 = vmatpush2.msra.mxu0 0.0
  %729 = vmatprep.subr.mxu0 0.0
  %730 = vmatpush2.msra.mxu0 0.0
  %731 = vmatprep.subr.mxu0 0.0
  %732 = vmatpush2.msra.mxu0 0.0
  %733 = vmatprep.subr.mxu0 0.0
  %734 = vmatpush2.msra.mxu0 0.0
  %735 = vmatprep.subr.mxu0 0.0
  %736 = vmatpush2.msra.mxu0 0.0
  %737 = vmatprep.subr.mxu0 0.0
  %738 = vmatpush2.msra.mxu0 0.0
  %739 = vmatprep.subr.mxu0 0.0
  %740 = vmatpush2.msra.mxu0 0.0
  %741 = vmatprep.mubr.f32.mxu0 0.0
  %742 = vmatmul.mubr.f32.gmra.mxu0 %v666
  %v743 = vpop.f32.mrf.mxu0
  %v744 = vadd.f32 0.0, %v743
  %v745 = vpop.f32.mrf.mxu0
  %746 = vmatprep.mubr.f32.mxu0 0.0
  %747 = vmatmul.mubr.f32.gmra.mxu0 %v669
  %v748 = vpop.f32.mrf.mxu0
  %v749 = vadd.f32 0.0, %v748
  %v750 = vpop.f32.mrf.mxu0
  %751 = vmatprep.mubr.f32.mxu0 0.0
  %752 = vmatmul.mubr.f32.gmra.mxu0 %v672
  %v753 = vpop.f32.mrf.mxu0
  %v754 = vadd.f32 0.0, %v753
  %v755 = vpop.f32.mrf.mxu0
  %756 = vmatprep.mubr.f32.mxu0 0.0
  %757 = vmatmul.mubr.f32.gmra.mxu0 %v675
  %v758 = vpop.f32.mrf.mxu0
  %v759 = vadd.f32 0.0, %v758
  %v760 = vpop.f32.mrf.mxu0
  %761 = vdwg.mxu0
  %v762 = vpack.c.bf16 %v749, %v744
  %v763 = vpack.c.bf16 %v759, %v754
  %v765 = vsel %vm219, %v762, 0
  %v768 = vsel %vm219, %v763, 0
  %vm770 = vcmask 1043456
  %v772 = vsel %vm770, %v123, 0
  %774 = vmatprep.subr.bf16.mxu0 0
  %775 = vmatpush1.bf16.msra.mxu0 0
  %776 = vmatprep.subr.bf16.mxu0 0
  %777 = vmatpush1.bf16.msra.mxu0 0
  %778 = vmatprep.subr.bf16.mxu0 0
  %779 = vmatpush1.bf16.msra.mxu0 0
  %780 = vmatprep.subr.bf16.mxu0 0
  %781 = vmatpush1.bf16.msra.mxu0 0
  %782 = vmatprep.subr.bf16.mxu0 0
  %783 = vmatpush1.bf16.msra.mxu0 0
  %784 = vmatprep.subr.bf16.mxu0 0
  %785 = vmatpush1.bf16.msra.mxu0 0
  %786 = vmatprep.subr.bf16.mxu0 0
  %787 = vmatpush1.bf16.msra.mxu0 0
  %788 = vmatprep.subr.bf16.mxu0 0
  %789 = vmatpush1.bf16.msra.mxu0 %v772
  %790 = vmatprep.subr.bf16.mxu0 0
  %791 = vmatpush2.bf16.msra.mxu0 0
  %792 = vmatprep.subr.bf16.mxu0 0
  %793 = vmatpush2.bf16.msra.mxu0 0
  %794 = vmatprep.subr.bf16.mxu0 0
  %795 = vmatpush2.bf16.msra.mxu0 0
  %796 = vmatprep.subr.bf16.mxu0 0
  %797 = vmatpush2.bf16.msra.mxu0 0
  %798 = vmatprep.subr.bf16.mxu0 0
  %799 = vmatpush2.bf16.msra.mxu0 0
  %800 = vmatprep.subr.bf16.mxu0 0
  %801 = vmatpush2.bf16.msra.mxu0 0
  %802 = vmatprep.subr.bf16.mxu0 0
  %803 = vmatpush2.bf16.msra.mxu0 0
  %804 = vmatprep.subr.bf16.mxu0 0
  %805 = vmatpush2.bf16.msra.mxu0 0
  %806 = vmatprep.mubr.bf16.mxu0 0
  %807 = vmatmul.mubr.bf16.gmra.mxu0 %v765
  %v808 = vpop.f32.mrf.mxu0
  %v809 = vadd.f32 0.0, %v808
  %v810 = vpop.f32.mrf.mxu0
  %v811 = vpop.f32.mrf.mxu0
  %v812 = vadd.f32 0.0, %v811
  %v813 = vpop.f32.mrf.mxu0
  %814 = vmatprep.mubr.bf16.mxu0 0
  %815 = vmatmul.mubr.bf16.gmra.mxu0 %v768
  %v816 = vpop.f32.mrf.mxu0
  %v817 = vadd.f32 0.0, %v816
  %v818 = vpop.f32.mrf.mxu0
  %v819 = vpop.f32.mrf.mxu0
  %v820 = vadd.f32 0.0, %v819
  %v821 = vpop.f32.mrf.mxu0
  %822 = vdwg.mxu0
  %v824 = vsel %vm219, %v482, 0
  %v827 = vsel %vm219, %v483, 0
  %v830 = vsel %vm770, %v122, 0
  %832 = vmatprep.subr.bf16.mxu0 0
  %833 = vmatpush1.bf16.msra.mxu0 0
  %834 = vmatprep.subr.bf16.mxu0 0
  %835 = vmatpush1.bf16.msra.mxu0 0
  %836 = vmatprep.subr.bf16.mxu0 0
  %837 = vmatpush1.bf16.msra.mxu0 0
  %838 = vmatprep.subr.bf16.mxu0 0
  %839 = vmatpush1.bf16.msra.mxu0 0
  %840 = vmatprep.subr.bf16.mxu0 0
  %841 = vmatpush1.bf16.msra.mxu0 0
  %842 = vmatprep.subr.bf16.mxu0 0
  %843 = vmatpush1.bf16.msra.mxu0 0
  %844 = vmatprep.subr.bf16.mxu0 0
  %845 = vmatpush1.bf16.msra.mxu0 0
  %846 = vmatprep.subr.bf16.mxu0 0
  %847 = vmatpush1.bf16.msra.mxu0 %v830
  %848 = vmatprep.subr.bf16.mxu0 0
  %849 = vmatpush2.bf16.msra.mxu0 0
  %850 = vmatprep.subr.bf16.mxu0 0
  %851 = vmatpush2.bf16.msra.mxu0 0
  %852 = vmatprep.subr.bf16.mxu0 0
  %853 = vmatpush2.bf16.msra.mxu0 0
  %854 = vmatprep.subr.bf16.mxu0 0
  %855 = vmatpush2.bf16.msra.mxu0 0
  %856 = vmatprep.subr.bf16.mxu0 0
  %857 = vmatpush2.bf16.msra.mxu0 0
  %858 = vmatprep.subr.bf16.mxu0 0
  %859 = vmatpush2.bf16.msra.mxu0 0
  %860 = vmatprep.subr.bf16.mxu0 0
  %861 = vmatpush2.bf16.msra.mxu0 0
  %862 = vmatprep.subr.bf16.mxu0 0
  %863 = vmatpush2.bf16.msra.mxu0 0
  %864 = vmatprep.mubr.bf16.mxu0 0
  %865 = vmatmul.mubr.bf16.gmra.mxu0 %v824
  %v866 = vpop.f32.mrf.mxu0
  %v867 = vadd.f32 %v809, %v866
  %v868 = vpop.f32.mrf.mxu0
  %v869 = vpop.f32.mrf.mxu0
  %v870 = vadd.f32 %v812, %v869
  %v871 = vpop.f32.mrf.mxu0
  %872 = vmatprep.mubr.bf16.mxu0 0
  %873 = vmatmul.mubr.bf16.gmra.mxu0 %v827
  %v874 = vpop.f32.mrf.mxu0
  %v875 = vadd.f32 %v817, %v874
  %v876 = vpop.f32.mrf.mxu0
  %v877 = vpop.f32.mrf.mxu0
  %v878 = vadd.f32 %v820, %v877
  %v879 = vpop.f32.mrf.mxu0
  %880 = vdwg.mxu0
  %881 = vrot.lane.b32.xlu0 %v193, 112
  %v882 = vpop.permute.xlu0 %881
  %883 = vrot.lane.b32.xlu0 %v196, 112
  %v884 = vpop.permute.xlu0 %883
  %885 = vrot.lane.b32.xlu0 %v201, 112
  %v886 = vpop.permute.xlu0 %885
  %887 = vrot.lane.b32.xlu0 %v204, 112
  %v888 = vpop.permute.xlu0 %887
  %889 = vrot.lane.b32.xlu0 %v193, 80
  %v890 = vpop.permute.xlu0 %889
  %891 = vrot.lane.b32.xlu0 %v196, 80
  %v892 = vpop.permute.xlu0 %891
  %893 = vrot.lane.b32.xlu0 %v201, 80
  %v894 = vpop.permute.xlu0 %893
  %895 = vrot.lane.b32.xlu0 %v204, 80
  %v896 = vpop.permute.xlu0 %895
  %v897 = vsel %vm219, %v882, 0
  %v899 = vsel %vm219, %v884, 0
  %v901 = vsel %vm219, %v886, 0
  %v903 = vsel %vm219, %v888, 0
  %v905 = vsel %vm219, %v890, 0
  %v907 = vsel %vm219, %v892, 0
  %v909 = vsel %vm219, %v894, 0
  %v911 = vsel %vm219, %v896, 0
  %913 = vmatprep.subr.mxu0 0.0
  %914 = vmatpush1.xpose.msra.mxu0 0.0
  %915 = vmatprep.subr.mxu0 0.0
  %916 = vmatpush1.xpose.msra.mxu0 0.0
  %917 = vmatprep.subr.mxu0 0.0
  %918 = vmatpush1.xpose.msra.mxu0 0.0
  %919 = vmatprep.subr.mxu0 0.0
  %920 = vmatpush1.xpose.msra.mxu0 0.0
  %921 = vmatprep.subr.mxu0 0.0
  %922 = vmatpush1.xpose.msra.mxu0 0.0
  %923 = vmatprep.subr.mxu0 0.0
  %924 = vmatpush1.xpose.msra.mxu0 0.0
  %925 = vmatprep.subr.mxu0 0.0
  %926 = vmatpush1.xpose.msra.mxu0 0.0
  %927 = vmatprep.subr.mxu0 0.0
  %928 = vmatpush1.xpose.msra.mxu0 0.0
  %929 = vmatprep.subr.mxu0 0.0
  %930 = vmatpush1.xpose.msra.mxu0 0.0
  %931 = vmatprep.subr.mxu0 0.0
  %932 = vmatpush1.xpose.msra.mxu0 0.0
  %933 = vmatprep.subr.mxu0 0.0
  %934 = vmatpush1.xpose.msra.mxu0 0.0
  %935 = vmatprep.subr.mxu0 0.0
  %936 = vmatpush1.xpose.msra.mxu0 0.0
  %937 = vmatprep.subr.mxu0 0.0
  %938 = vmatpush1.xpose.msra.mxu0 %v911
  %939 = vmatprep.subr.mxu0 0.0
  %940 = vmatpush1.xpose.msra.mxu0 %v909
  %941 = vmatprep.subr.mxu0 0.0
  %942 = vmatpush1.xpose.msra.mxu0 %v907
  %943 = vmatprep.subr.mxu0 0.0
  %944 = vmatpush1.xpose.msra.mxu0 %v905
  %945 = vmatprep.subr.mxu0 0.0
  %946 = vmatpush2.xpose.msra.mxu0 0.0
  %947 = vmatprep.subr.mxu0 0.0
  %948 = vmatpush2.xpose.msra.mxu0 0.0
  %949 = vmatprep.subr.mxu0 0.0
  %950 = vmatpush2.xpose.msra.mxu0 0.0
  %951 = vmatprep.subr.mxu0 0.0
  %952 = vmatpush2.xpose.msra.mxu0 0.0
  %953 = vmatprep.subr.mxu0 0.0
  %954 = vmatpush2.xpose.msra.mxu0 0.0
  %955 = vmatprep.subr.mxu0 0.0
  %956 = vmatpush2.xpose.msra.mxu0 0.0
  %957 = vmatprep.subr.mxu0 0.0
  %958 = vmatpush2.xpose.msra.mxu0 0.0
  %959 = vmatprep.subr.mxu0 0.0
  %960 = vmatpush2.xpose.msra.mxu0 0.0
  %961 = vmatprep.subr.mxu0 0.0
  %962 = vmatpush2.xpose.msra.mxu0 0.0
  %963 = vmatprep.subr.mxu0 0.0
  %964 = vmatpush2.xpose.msra.mxu0 0.0
  %965 = vmatprep.subr.mxu0 0.0
  %966 = vmatpush2.xpose.msra.mxu0 0.0
  %967 = vmatprep.subr.mxu0 0.0
  %968 = vmatpush2.xpose.msra.mxu0 0.0
  %969 = vmatprep.subr.mxu0 0.0
  %970 = vmatpush2.xpose.msra.mxu0 0.0
  %971 = vmatprep.subr.mxu0 0.0
  %972 = vmatpush2.xpose.msra.mxu0 0.0
  %973 = vmatprep.subr.mxu0 0.0
  %974 = vmatpush2.xpose.msra.mxu0 0.0
  %975 = vmatprep.subr.mxu0 0.0
  %976 = vmatpush2.xpose.msra.mxu0 0.0
  %977 = vmatprep.mubr.f32.mxu0 0.0
  %978 = vmatmul.mubr.f32.gmra.mxu0 %v897
  %v979 = vpop.f32.mrf.mxu0
  %v980 = vadd.f32 0.0, %v979
  %v981 = vpop.f32.mrf.mxu0
  %982 = vmatprep.mubr.f32.mxu0 0.0
  %983 = vmatmul.mubr.f32.gmra.mxu0 %v899
  %v984 = vpop.f32.mrf.mxu0
  %v985 = vadd.f32 0.0, %v984
  %v986 = vpop.f32.mrf.mxu0
  %987 = vmatprep.mubr.f32.mxu0 0.0
  %988 = vmatmul.mubr.f32.gmra.mxu0 %v901
  %v989 = vpop.f32.mrf.mxu0
  %v990 = vadd.f32 0.0, %v989
  %v991 = vpop.f32.mrf.mxu0
  %992 = vmatprep.mubr.f32.mxu0 0.0
  %993 = vmatmul.mubr.f32.gmra.mxu0 %v903
  %v994 = vpop.f32.mrf.mxu0
  %v995 = vadd.f32 0.0, %v994
  %v996 = vpop.f32.mrf.mxu0
  %997 = vdwg.mxu0
  %v998 = vmul.f32 %v980, 0.35355338
  %v999 = vmul.f32 %v985, 0.35355338
  %v1000 = vmul.f32 %v990, 0.35355338
  %v1001 = vmul.f32 %v995, 0.35355338
  %v1002 = vadd.f32 %v998, %v46
  %v1003 = vadd.f32 %v999, %v47
  %v1004 = vadd.f32 %v1000, %v48
  %v1005 = vadd.f32 %v1001, %v49
  %v1006 = vsel %vm52, %v1002, -inf
  %1007 = vmax.xlane.f32.xlu0 %v1006
  %v1008 = vpop.xlane.xlu0 %1007
  %v1009 = vsel %vm52, %v1003, -inf
  %1010 = vmax.xlane.f32.xlu0 %v1009
  %v1011 = vpop.xlane.xlu0 %1010
  %v1012 = vsel %vm52, %v1004, -inf
  %1013 = vmax.xlane.f32.xlu0 %v1012
  %v1014 = vpop.xlane.xlu0 %1013
  %v1015 = vsel %vm52, %v1005, -inf
  %1016 = vmax.xlane.f32.xlu0 %v1015
  %v1017 = vpop.xlane.xlu0 %1016
  %v1018 = vsub.f32 %v1002, %v1008
  %v1019 = vsub.f32 %v1003, %v1011
  %v1020 = vsub.f32 %v1004, %v1014
  %v1021 = vsub.f32 %v1005, %v1017
  %v1022 = vmul.f32 %v1018, 1.442695
  %v1023 = vpow.pop %v1022
  %v1024 = vmul.f32 %v1019, 1.442695
  %v1025 = vpow.pop %v1024
  %v1026 = vmul.f32 %v1020, 1.442695
  %v1027 = vpow.pop %v1026
  %v1028 = vmul.f32 %v1021, 1.442695
  %v1029 = vpow.pop %v1028
  %v1030 = vsel %vm52, %v1023, 0.0
  %1031 = vadd.xlane.f32.xlu0 %v1030
  %v1032 = vpop.xlane.xlu0 %1031
  %v1033 = vsel %vm52, %v1025, 0.0
  %1034 = vadd.xlane.f32.xlu0 %v1033
  %v1035 = vpop.xlane.xlu0 %1034
  %v1036 = vsel %vm52, %v1027, 0.0
  %1037 = vadd.xlane.f32.xlu0 %v1036
  %v1038 = vpop.xlane.xlu0 %1037
  %v1039 = vsel %vm52, %v1029, 0.0
  %1040 = vadd.xlane.f32.xlu0 %v1039
  %v1041 = vpop.xlane.xlu0 %1040
  %v1042 = vrcp.pop %v1032
  %v1043 = vrcp.pop %v1035
  %v1044 = vrcp.pop %v1038
  %v1045 = vrcp.pop %v1041
  %v1046 = vmul.f32 %v1023, %v1042
  %v1047 = vmul.f32 %v1025, %v1043
  %v1048 = vmul.f32 %v1027, %v1044
  %v1049 = vmul.f32 %v1029, %v1045
  %1050 = vrot.lane.b32.xlu0 %v193, 48
  %v1051 = vpop.permute.xlu0 %1050
  %1052 = vrot.lane.b32.xlu0 %v196, 48
  %v1053 = vpop.permute.xlu0 %1052
  %1054 = vrot.lane.b32.xlu0 %v201, 48
  %v1055 = vpop.permute.xlu0 %1054
  %1056 = vrot.lane.b32.xlu0 %v204, 48
  %v1057 = vpop.permute.xlu0 %1056
  %v1063 = vsel %vm52, %v1046, 0
  %v1066 = vsel %vm52, %v1047, 0
  %v1069 = vsel %vm52, %v1048, 0
  %v1072 = vsel %vm52, %v1049, 0
  %1074 = vmatprep.subr.mxu0 0.0
  %1075 = vmatpush1.msra.mxu0 0.0
  %1076 = vmatprep.subr.mxu0 0.0
  %1077 = vmatpush1.msra.mxu0 0.0
  %1078 = vmatprep.subr.mxu0 0.0
  %1079 = vmatpush1.msra.mxu0 0.0
  %1080 = vmatprep.subr.mxu0 0.0
  %1081 = vmatpush1.msra.mxu0 0.0
  %1082 = vmatprep.subr.mxu0 0.0
  %1083 = vmatpush1.msra.mxu0 0.0
  %1084 = vmatprep.subr.mxu0 0.0
  %1085 = vmatpush1.msra.mxu0 0.0
  %1086 = vmatprep.subr.mxu0 0.0
  %1087 = vmatpush1.msra.mxu0 0.0
  %1088 = vmatprep.subr.mxu0 0.0
  %1089 = vmatpush1.msra.mxu0 0.0
  %1090 = vmatprep.subr.mxu0 0.0
  %1091 = vmatpush1.msra.mxu0 0.0
  %1092 = vmatprep.subr.mxu0 0.0
  %1093 = vmatpush1.msra.mxu0 0.0
  %1094 = vmatprep.subr.mxu0 0.0
  %1095 = vmatpush1.msra.mxu0 0.0
  %1096 = vmatprep.subr.mxu0 0.0
  %1097 = vmatpush1.msra.mxu0 0.0
  %1098 = vmatprep.subr.mxu0 0.0
  %1099 = vmatpush1.msra.mxu0 %v1057
  %1100 = vmatprep.subr.mxu0 0.0
  %1101 = vmatpush1.msra.mxu0 %v1055
  %1102 = vmatprep.subr.mxu0 0.0
  %1103 = vmatpush1.msra.mxu0 %v1053
  %1104 = vmatprep.subr.mxu0 0.0
  %1105 = vmatpush1.msra.mxu0 %v1051
  %1106 = vmatprep.subr.mxu0 0.0
  %1107 = vmatpush2.msra.mxu0 0.0
  %1108 = vmatprep.subr.mxu0 0.0
  %1109 = vmatpush2.msra.mxu0 0.0
  %1110 = vmatprep.subr.mxu0 0.0
  %1111 = vmatpush2.msra.mxu0 0.0
  %1112 = vmatprep.subr.mxu0 0.0
  %1113 = vmatpush2.msra.mxu0 0.0
  %1114 = vmatprep.subr.mxu0 0.0
  %1115 = vmatpush2.msra.mxu0 0.0
  %1116 = vmatprep.subr.mxu0 0.0
  %1117 = vmatpush2.msra.mxu0 0.0
  %1118 = vmatprep.subr.mxu0 0.0
  %1119 = vmatpush2.msra.mxu0 0.0
  %1120 = vmatprep.subr.mxu0 0.0
  %1121 = vmatpush2.msra.mxu0 0.0
  %1122 = vmatprep.subr.mxu0 0.0
  %1123 = vmatpush2.msra.mxu0 0.0
  %1124 = vmatprep.subr.mxu0 0.0
  %1125 = vmatpush2.msra.mxu0 0.0
  %1126 = vmatprep.subr.mxu0 0.0
  %1127 = vmatpush2.msra.mxu0 0.0
  %1128 = vmatprep.subr.mxu0 0.0
  %1129 = vmatpush2.msra.mxu0 0.0
  %1130 = vmatprep.subr.mxu0 0.0
  %1131 = vmatpush2.msra.mxu0 0.0
  %1132 = vmatprep.subr.mxu0 0.0
  %1133 = vmatpush2.msra.mxu0 0.0
  %1134 = vmatprep.subr.mxu0 0.0
  %1135 = vmatpush2.msra.mxu0 0.0
  %1136 = vmatprep.subr.mxu0 0.0
  %1137 = vmatpush2.msra.mxu0 0.0
  %1138 = vmatprep.mubr.f32.mxu0 0.0
  %1139 = vmatmul.mubr.f32.gmra.mxu0 %v1063
  %v1140 = vpop.f32.mrf.mxu0
  %v1141 = vadd.f32 0.0, %v1140
  %v1142 = vpop.f32.mrf.mxu0
  %1143 = vmatprep.mubr.f32.mxu0 0.0
  %1144 = vmatmul.mubr.f32.gmra.mxu0 %v1066
  %v1145 = vpop.f32.mrf.mxu0
  %v1146 = vadd.f32 0.0, %v1145
  %v1147 = vpop.f32.mrf.mxu0
  %1148 = vmatprep.mubr.f32.mxu0 0.0
  %1149 = vmatmul.mubr.f32.gmra.mxu0 %v1069
  %v1150 = vpop.f32.mrf.mxu0
  %v1151 = vadd.f32 0.0, %v1150
  %v1152 = vpop.f32.mrf.mxu0
  %1153 = vmatprep.mubr.f32.mxu0 0.0
  %1154 = vmatmul.mubr.f32.gmra.mxu0 %v1072
  %v1155 = vpop.f32.mrf.mxu0
  %v1156 = vadd.f32 0.0, %v1155
  %v1157 = vpop.f32.mrf.mxu0
  %1158 = vdwg.mxu0
  %v1159 = vpack.c.bf16 %v1146, %v1141
  %v1160 = vpack.c.bf16 %v1156, %v1151
  %v1162 = vsel %vm219, %v1159, 0
  %v1165 = vsel %vm219, %v1160, 0
  %v1168 = vsel %vm770, %v124, 0
  %1170 = vmatprep.subr.bf16.mxu0 0
  %1171 = vmatpush1.bf16.msra.mxu0 0
  %1172 = vmatprep.subr.bf16.mxu0 0
  %1173 = vmatpush1.bf16.msra.mxu0 0
  %1174 = vmatprep.subr.bf16.mxu0 0
  %1175 = vmatpush1.bf16.msra.mxu0 0
  %1176 = vmatprep.subr.bf16.mxu0 0
  %1177 = vmatpush1.bf16.msra.mxu0 0
  %1178 = vmatprep.subr.bf16.mxu0 0
  %1179 = vmatpush1.bf16.msra.mxu0 0
  %1180 = vmatprep.subr.bf16.mxu0 0
  %1181 = vmatpush1.bf16.msra.mxu0 0
  %1182 = vmatprep.subr.bf16.mxu0 0
  %1183 = vmatpush1.bf16.msra.mxu0 0
  %1184 = vmatprep.subr.bf16.mxu0 0
  %1185 = vmatpush1.bf16.msra.mxu0 %v1168
  %1186 = vmatprep.subr.bf16.mxu0 0
  %1187 = vmatpush2.bf16.msra.mxu0 0
  %1188 = vmatprep.subr.bf16.mxu0 0
  %1189 = vmatpush2.bf16.msra.mxu0 0
  %1190 = vmatprep.subr.bf16.mxu0 0
  %1191 = vmatpush2.bf16.msra.mxu0 0
  %1192 = vmatprep.subr.bf16.mxu0 0
  %1193 = vmatpush2.bf16.msra.mxu0 0
  %1194 = vmatprep.subr.bf16.mxu0 0
  %1195 = vmatpush2.bf16.msra.mxu0 0
  %1196 = vmatprep.subr.bf16.mxu0 0
  %1197 = vmatpush2.bf16.msra.mxu0 0
  %1198 = vmatprep.subr.bf16.mxu0 0
  %1199 = vmatpush2.bf16.msra.mxu0 0
  %1200 = vmatprep.subr.bf16.mxu0 0
  %1201 = vmatpush2.bf16.msra.mxu0 0
  %1202 = vmatprep.mubr.bf16.mxu0 0
  %1203 = vmatmul.mubr.bf16.gmra.mxu0 %v1162
  %v1204 = vpop.f32.mrf.mxu0
  %v1205 = vadd.f32 0.0, %v1204
  %v1206 = vpop.f32.mrf.mxu0
  %v1207 = vpop.f32.mrf.mxu0
  %v1208 = vadd.f32 0.0, %v1207
  %v1209 = vpop.f32.mrf.mxu0
  %1210 = vmatprep.mubr.bf16.mxu0 0
  %1211 = vmatmul.mubr.bf16.gmra.mxu0 %v1165
  %v1212 = vpop.f32.mrf.mxu0
  %v1213 = vadd.f32 0.0, %v1212
  %v1214 = vpop.f32.mrf.mxu0
  %v1215 = vpop.f32.mrf.mxu0
  %v1216 = vadd.f32 0.0, %v1215
  %v1217 = vpop.f32.mrf.mxu0
  %1218 = vdwg.mxu0
  %v1219 = vadd.f32 %v867, %v1205
  %v1220 = vadd.f32 %v870, %v1208
  %v1221 = vadd.f32 %v875, %v1213
  %v1222 = vadd.f32 %v878, %v1216
  %1223 = vrot.lane.b32.xlu0 %v193, 104
  %v1224 = vpop.permute.xlu0 %1223
  %1225 = vrot.lane.b32.xlu0 %v196, 104
  %v1226 = vpop.permute.xlu0 %1225
  %1227 = vrot.lane.b32.xlu0 %v201, 104
  %v1228 = vpop.permute.xlu0 %1227
  %1229 = vrot.lane.b32.xlu0 %v204, 104
  %v1230 = vpop.permute.xlu0 %1229
  %1231 = vrot.lane.b32.xlu0 %v193, 72
  %v1232 = vpop.permute.xlu0 %1231
  %1233 = vrot.lane.b32.xlu0 %v196, 72
  %v1234 = vpop.permute.xlu0 %1233
  %1235 = vrot.lane.b32.xlu0 %v201, 72
  %v1236 = vpop.permute.xlu0 %1235
  %1237 = vrot.lane.b32.xlu0 %v204, 72
  %v1238 = vpop.permute.xlu0 %1237
  %v1239 = vsel %vm219, %v1224, 0
  %v1241 = vsel %vm219, %v1226, 0
  %v1243 = vsel %vm219, %v1228, 0
  %v1245 = vsel %vm219, %v1230, 0
  %v1247 = vsel %vm219, %v1232, 0
  %v1249 = vsel %vm219, %v1234, 0
  %v1251 = vsel %vm219, %v1236, 0
  %v1253 = vsel %vm219, %v1238, 0
  %1255 = vmatprep.subr.mxu0 0.0
  %1256 = vmatpush1.xpose.msra.mxu0 0.0
  %1257 = vmatprep.subr.mxu0 0.0
  %1258 = vmatpush1.xpose.msra.mxu0 0.0
  %1259 = vmatprep.subr.mxu0 0.0
  %1260 = vmatpush1.xpose.msra.mxu0 0.0
  %1261 = vmatprep.subr.mxu0 0.0
  %1262 = vmatpush1.xpose.msra.mxu0 0.0
  %1263 = vmatprep.subr.mxu0 0.0
  %1264 = vmatpush1.xpose.msra.mxu0 0.0
  %1265 = vmatprep.subr.mxu0 0.0
  %1266 = vmatpush1.xpose.msra.mxu0 0.0
  %1267 = vmatprep.subr.mxu0 0.0
  %1268 = vmatpush1.xpose.msra.mxu0 0.0
  %1269 = vmatprep.subr.mxu0 0.0
  %1270 = vmatpush1.xpose.msra.mxu0 0.0
  %1271 = vmatprep.subr.mxu0 0.0
  %1272 = vmatpush1.xpose.msra.mxu0 0.0
  %1273 = vmatprep.subr.mxu0 0.0
  %1274 = vmatpush1.xpose.msra.mxu0 0.0
  %1275 = vmatprep.subr.mxu0 0.0
  %1276 = vmatpush1.xpose.msra.mxu0 0.0
  %1277 = vmatprep.subr.mxu0 0.0
  %1278 = vmatpush1.xpose.msra.mxu0 0.0
  %1279 = vmatprep.subr.mxu0 0.0
  %1280 = vmatpush1.xpose.msra.mxu0 %v1253
  %1281 = vmatprep.subr.mxu0 0.0
  %1282 = vmatpush1.xpose.msra.mxu0 %v1251
  %1283 = vmatprep.subr.mxu0 0.0
  %1284 = vmatpush1.xpose.msra.mxu0 %v1249
  %1285 = vmatprep.subr.mxu0 0.0
  %1286 = vmatpush1.xpose.msra.mxu0 %v1247
  %1287 = vmatprep.subr.mxu0 0.0
  %1288 = vmatpush2.xpose.msra.mxu0 0.0
  %1289 = vmatprep.subr.mxu0 0.0
  %1290 = vmatpush2.xpose.msra.mxu0 0.0
  %1291 = vmatprep.subr.mxu0 0.0
  %1292 = vmatpush2.xpose.msra.mxu0 0.0
  %1293 = vmatprep.subr.mxu0 0.0
  %1294 = vmatpush2.xpose.msra.mxu0 0.0
  %1295 = vmatprep.subr.mxu0 0.0
  %1296 = vmatpush2.xpose.msra.mxu0 0.0
  %1297 = vmatprep.subr.mxu0 0.0
  %1298 = vmatpush2.xpose.msra.mxu0 0.0
  %1299 = vmatprep.subr.mxu0 0.0
  %1300 = vmatpush2.xpose.msra.mxu0 0.0
  %1301 = vmatprep.subr.mxu0 0.0
  %1302 = vmatpush2.xpose.msra.mxu0 0.0
  %1303 = vmatprep.subr.mxu0 0.0
  %1304 = vmatpush2.xpose.msra.mxu0 0.0
  %1305 = vmatprep.subr.mxu0 0.0
  %1306 = vmatpush2.xpose.msra.mxu0 0.0
  %1307 = vmatprep.subr.mxu0 0.0
  %1308 = vmatpush2.xpose.msra.mxu0 0.0
  %1309 = vmatprep.subr.mxu0 0.0
  %1310 = vmatpush2.xpose.msra.mxu0 0.0
  %1311 = vmatprep.subr.mxu0 0.0
  %1312 = vmatpush2.xpose.msra.mxu0 0.0
  %1313 = vmatprep.subr.mxu0 0.0
  %1314 = vmatpush2.xpose.msra.mxu0 0.0
  %1315 = vmatprep.subr.mxu0 0.0
  %1316 = vmatpush2.xpose.msra.mxu0 0.0
  %1317 = vmatprep.subr.mxu0 0.0
  %1318 = vmatpush2.xpose.msra.mxu0 0.0
  %1319 = vmatprep.mubr.f32.mxu0 0.0
  %1320 = vmatmul.mubr.f32.gmra.mxu0 %v1239
  %v1321 = vpop.f32.mrf.mxu0
  %v1322 = vadd.f32 0.0, %v1321
  %v1323 = vpop.f32.mrf.mxu0
  %1324 = vmatprep.mubr.f32.mxu0 0.0
  %1325 = vmatmul.mubr.f32.gmra.mxu0 %v1241
  %v1326 = vpop.f32.mrf.mxu0
  %v1327 = vadd.f32 0.0, %v1326
  %v1328 = vpop.f32.mrf.mxu0
  %1329 = vmatprep.mubr.f32.mxu0 0.0
  %1330 = vmatmul.mubr.f32.gmra.mxu0 %v1243
  %v1331 = vpop.f32.mrf.mxu0
  %v1332 = vadd.f32 0.0, %v1331
  %v1333 = vpop.f32.mrf.mxu0
  %1334 = vmatprep.mubr.f32.mxu0 0.0
  %1335 = vmatmul.mubr.f32.gmra.mxu0 %v1245
  %v1336 = vpop.f32.mrf.mxu0
  %v1337 = vadd.f32 0.0, %v1336
  %v1338 = vpop.f32.mrf.mxu0
  %1339 = vdwg.mxu0
  %v1340 = vmul.f32 %v1322, 0.35355338
  %v1341 = vmul.f32 %v1327, 0.35355338
  %v1342 = vmul.f32 %v1332, 0.35355338
  %v1343 = vmul.f32 %v1337, 0.35355338
  %v1344 = vadd.f32 %v1340, %v46
  %v1345 = vadd.f32 %v1341, %v47
  %v1346 = vadd.f32 %v1342, %v48
  %v1347 = vadd.f32 %v1343, %v49
  %v1348 = vsel %vm52, %v1344, -inf
  %1349 = vmax.xlane.f32.xlu0 %v1348
  %v1350 = vpop.xlane.xlu0 %1349
  %v1351 = vsel %vm52, %v1345, -inf
  %1352 = vmax.xlane.f32.xlu0 %v1351
  %v1353 = vpop.xlane.xlu0 %1352
  %v1354 = vsel %vm52, %v1346, -inf
  %1355 = vmax.xlane.f32.xlu0 %v1354
  %v1356 = vpop.xlane.xlu0 %1355
  %v1357 = vsel %vm52, %v1347, -inf
  %1358 = vmax.xlane.f32.xlu0 %v1357
  %v1359 = vpop.xlane.xlu0 %1358
  %v1360 = vsub.f32 %v1344, %v1350
  %v1361 = vsub.f32 %v1345, %v1353
  %v1362 = vsub.f32 %v1346, %v1356
  %v1363 = vsub.f32 %v1347, %v1359
  %v1364 = vmul.f32 %v1360, 1.442695
  %v1365 = vpow.pop %v1364
  %v1366 = vmul.f32 %v1361, 1.442695
  %v1367 = vpow.pop %v1366
  %v1368 = vmul.f32 %v1362, 1.442695
  %v1369 = vpow.pop %v1368
  %v1370 = vmul.f32 %v1363, 1.442695
  %v1371 = vpow.pop %v1370
  %v1372 = vsel %vm52, %v1365, 0.0
  %1373 = vadd.xlane.f32.xlu0 %v1372
  %v1374 = vpop.xlane.xlu0 %1373
  %v1375 = vsel %vm52, %v1367, 0.0
  %1376 = vadd.xlane.f32.xlu0 %v1375
  %v1377 = vpop.xlane.xlu0 %1376
  %v1378 = vsel %vm52, %v1369, 0.0
  %1379 = vadd.xlane.f32.xlu0 %v1378
  %v1380 = vpop.xlane.xlu0 %1379
  %v1381 = vsel %vm52, %v1371, 0.0
  %1382 = vadd.xlane.f32.xlu0 %v1381
  %v1383 = vpop.xlane.xlu0 %1382
  %v1384 = vrcp.pop %v1374
  %v1385 = vrcp.pop %v1377
  %v1386 = vrcp.pop %v1380
  %v1387 = vrcp.pop %v1383
  %v1388 = vmul.f32 %v1365, %v1384
  %v1389 = vmul.f32 %v1367, %v1385
  %v1390 = vmul.f32 %v1369, %v1386
  %v1391 = vmul.f32 %v1371, %v1387
  %1392 = vrot.lane.b32.xlu0 %v193, 40
  %v1393 = vpop.permute.xlu0 %1392
  %1394 = vrot.lane.b32.xlu0 %v196, 40
  %v1395 = vpop.permute.xlu0 %1394
  %1396 = vrot.lane.b32.xlu0 %v201, 40
  %v1397 = vpop.permute.xlu0 %1396
  %1398 = vrot.lane.b32.xlu0 %v204, 40
  %v1399 = vpop.permute.xlu0 %1398
  %v1405 = vsel %vm52, %v1388, 0
  %v1408 = vsel %vm52, %v1389, 0
  %v1411 = vsel %vm52, %v1390, 0
  %v1414 = vsel %vm52, %v1391, 0
  %1416 = vmatprep.subr.mxu0 0.0
  %1417 = vmatpush1.msra.mxu0 0.0
  %1418 = vmatprep.subr.mxu0 0.0
  %1419 = vmatpush1.msra.mxu0 0.0
  %1420 = vmatprep.subr.mxu0 0.0
  %1421 = vmatpush1.msra.mxu0 0.0
  %1422 = vmatprep.subr.mxu0 0.0
  %1423 = vmatpush1.msra.mxu0 0.0
  %1424 = vmatprep.subr.mxu0 0.0
  %1425 = vmatpush1.msra.mxu0 0.0
  %1426 = vmatprep.subr.mxu0 0.0
  %1427 = vmatpush1.msra.mxu0 0.0
  %1428 = vmatprep.subr.mxu0 0.0
  %1429 = vmatpush1.msra.mxu0 0.0
  %1430 = vmatprep.subr.mxu0 0.0
  %1431 = vmatpush1.msra.mxu0 0.0
  %1432 = vmatprep.subr.mxu0 0.0
  %1433 = vmatpush1.msra.mxu0 0.0
  %1434 = vmatprep.subr.mxu0 0.0
  %1435 = vmatpush1.msra.mxu0 0.0
  %1436 = vmatprep.subr.mxu0 0.0
  %1437 = vmatpush1.msra.mxu0 0.0
  %1438 = vmatprep.subr.mxu0 0.0
  %1439 = vmatpush1.msra.mxu0 0.0
  %1440 = vmatprep.subr.mxu0 0.0
  %1441 = vmatpush1.msra.mxu0 %v1399
  %1442 = vmatprep.subr.mxu0 0.0
  %1443 = vmatpush1.msra.mxu0 %v1397
  %1444 = vmatprep.subr.mxu0 0.0
  %1445 = vmatpush1.msra.mxu0 %v1395
  %1446 = vmatprep.subr.mxu0 0.0
  %1447 = vmatpush1.msra.mxu0 %v1393
  %1448 = vmatprep.subr.mxu0 0.0
  %1449 = vmatpush2.msra.mxu0 0.0
  %1450 = vmatprep.subr.mxu0 0.0
  %1451 = vmatpush2.msra.mxu0 0.0
  %1452 = vmatprep.subr.mxu0 0.0
  %1453 = vmatpush2.msra.mxu0 0.0
  %1454 = vmatprep.subr.mxu0 0.0
  %1455 = vmatpush2.msra.mxu0 0.0
  %1456 = vmatprep.subr.mxu0 0.0
  %1457 = vmatpush2.msra.mxu0 0.0
  %1458 = vmatprep.subr.mxu0 0.0
  %1459 = vmatpush2.msra.mxu0 0.0
  %1460 = vmatprep.subr.mxu0 0.0
  %1461 = vmatpush2.msra.mxu0 0.0
  %1462 = vmatprep.subr.mxu0 0.0
  %1463 = vmatpush2.msra.mxu0 0.0
  %1464 = vmatprep.subr.mxu0 0.0
  %1465 = vmatpush2.msra.mxu0 0.0
  %1466 = vmatprep.subr.mxu0 0.0
  %1467 = vmatpush2.msra.mxu0 0.0
  %1468 = vmatprep.subr.mxu0 0.0
  %1469 = vmatpush2.msra.mxu0 0.0
  %1470 = vmatprep.subr.mxu0 0.0
  %1471 = vmatpush2.msra.mxu0 0.0
  %1472 = vmatprep.subr.mxu0 0.0
  %1473 = vmatpush2.msra.mxu0 0.0
  %1474 = vmatprep.subr.mxu0 0.0
  %1475 = vmatpush2.msra.mxu0 0.0
  %1476 = vmatprep.subr.mxu0 0.0
  %1477 = vmatpush2.msra.mxu0 0.0
  %1478 = vmatprep.subr.mxu0 0.0
  %1479 = vmatpush2.msra.mxu0 0.0
  %1480 = vmatprep.mubr.f32.mxu0 0.0
  %1481 = vmatmul.mubr.f32.gmra.mxu0 %v1405
  %v1482 = vpop.f32.mrf.mxu0
  %v1483 = vadd.f32 0.0, %v1482
  %v1484 = vpop.f32.mrf.mxu0
  %1485 = vmatprep.mubr.f32.mxu0 0.0
  %1486 = vmatmul.mubr.f32.gmra.mxu0 %v1408
  %v1487 = vpop.f32.mrf.mxu0
  %v1488 = vadd.f32 0.0, %v1487
  %v1489 = vpop.f32.mrf.mxu0
  %1490 = vmatprep.mubr.f32.mxu0 0.0
  %1491 = vmatmul.mubr.f32.gmra.mxu0 %v1411
  %v1492 = vpop.f32.mrf.mxu0
  %v1493 = vadd.f32 0.0, %v1492
  %v1494 = vpop.f32.mrf.mxu0
  %1495 = vmatprep.mubr.f32.mxu0 0.0
  %1496 = vmatmul.mubr.f32.gmra.mxu0 %v1414
  %v1497 = vpop.f32.mrf.mxu0
  %v1498 = vadd.f32 0.0, %v1497
  %v1499 = vpop.f32.mrf.mxu0
  %1500 = vdwg.mxu0
  %v1501 = vpack.c.bf16 %v1488, %v1483
  %v1502 = vpack.c.bf16 %v1498, %v1493
  %v1504 = vsel %vm219, %v1501, 0
  %v1507 = vsel %vm219, %v1502, 0
  %v1510 = vsel %vm770, %v125, 0
  %1512 = vmatprep.subr.bf16.mxu0 0
  %1513 = vmatpush1.bf16.msra.mxu0 0
  %1514 = vmatprep.subr.bf16.mxu0 0
  %1515 = vmatpush1.bf16.msra.mxu0 0
  %1516 = vmatprep.subr.bf16.mxu0 0
  %1517 = vmatpush1.bf16.msra.mxu0 0
  %1518 = vmatprep.subr.bf16.mxu0 0
  %1519 = vmatpush1.bf16.msra.mxu0 0
  %1520 = vmatprep.subr.bf16.mxu0 0
  %1521 = vmatpush1.bf16.msra.mxu0 0
  %1522 = vmatprep.subr.bf16.mxu0 0
  %1523 = vmatpush1.bf16.msra.mxu0 0
  %1524 = vmatprep.subr.bf16.mxu0 0
  %1525 = vmatpush1.bf16.msra.mxu0 0
  %1526 = vmatprep.subr.bf16.mxu0 0
  %1527 = vmatpush1.bf16.msra.mxu0 %v1510
  %1528 = vmatprep.subr.bf16.mxu0 0
  %1529 = vmatpush2.bf16.msra.mxu0 0
  %1530 = vmatprep.subr.bf16.mxu0 0
  %1531 = vmatpush2.bf16.msra.mxu0 0
  %1532 = vmatprep.subr.bf16.mxu0 0
  %1533 = vmatpush2.bf16.msra.mxu0 0
  %1534 = vmatprep.subr.bf16.mxu0 0
  %1535 = vmatpush2.bf16.msra.mxu0 0
  %1536 = vmatprep.subr.bf16.mxu0 0
  %1537 = vmatpush2.bf16.msra.mxu0 0
  %1538 = vmatprep.subr.bf16.mxu0 0
  %1539 = vmatpush2.bf16.msra.mxu0 0
  %1540 = vmatprep.subr.bf16.mxu0 0
  %1541 = vmatpush2.bf16.msra.mxu0 0
  %1542 = vmatprep.subr.bf16.mxu0 0
  %1543 = vmatpush2.bf16.msra.mxu0 0
  %1544 = vmatprep.mubr.bf16.mxu0 0
  %1545 = vmatmul.mubr.bf16.gmra.mxu0 %v1504
  %v1546 = vpop.f32.mrf.mxu0
  %v1547 = vadd.f32 0.0, %v1546
  %v1548 = vpop.f32.mrf.mxu0
  %v1549 = vpop.f32.mrf.mxu0
  %v1550 = vadd.f32 0.0, %v1549
  %v1551 = vpop.f32.mrf.mxu0
  %1552 = vmatprep.mubr.bf16.mxu0 0
  %1553 = vmatmul.mubr.bf16.gmra.mxu0 %v1507
  %v1554 = vpop.f32.mrf.mxu0
  %v1555 = vadd.f32 0.0, %v1554
  %v1556 = vpop.f32.mrf.mxu0
  %v1557 = vpop.f32.mrf.mxu0
  %v1558 = vadd.f32 0.0, %v1557
  %v1559 = vpop.f32.mrf.mxu0
  %1560 = vdwg.mxu0
  %v1561 = vadd.f32 %v1219, %v1547
  %v1562 = vadd.f32 %v1220, %v1550
  %v1563 = vadd.f32 %v1221, %v1555
  %v1564 = vadd.f32 %v1222, %v1558
  %v1565 = vlaneseq
  %v1566 = vshrl.u32 %v1565, 7
  %v1567 = vsub.s32 0, %v1566
  %v1568 = vrot.slane %v126, %v1567
  %v1569 = vadd.f32 %v1561, %v1568
  %v1570 = vadd.f32 %v1562, %v1568
  %v1571 = vadd.f32 %v1563, %v1568
  %v1572 = vadd.f32 %v1564, %v1568
  %v1573 = vadd.f32 %v118, %v1569
  %v1574 = vadd.f32 %v119, %v1570
  %v1575 = vadd.f32 %v120, %v1571
  %v1576 = vadd.f32 %v121, %v1572
  %v1577 = vsel %vm52, %v1573, 0.0
  %1578 = vadd.xlane.f32.xlu0 %v1577
  %v1579 = vpop.xlane.xlu0 %1578
  %v1580 = vsel %vm52, %v1574, 0.0
  %1581 = vadd.xlane.f32.xlu0 %v1580
  %v1582 = vpop.xlane.xlu0 %1581
  %v1583 = vsel %vm52, %v1575, 0.0
  %1584 = vadd.xlane.f32.xlu0 %v1583
  %v1585 = vpop.xlane.xlu0 %1584
  %v1586 = vsel %vm52, %v1576, 0.0
  %1587 = vadd.xlane.f32.xlu0 %v1586
  %v1588 = vpop.xlane.xlu0 %1587
  %v1589 = vmul.f32 %v1579, %v65
  %v1590 = vmul.f32 %v1582, %v65
  %v1591 = vmul.f32 %v1585, %v65
  %v1592 = vmul.f32 %v1588, %v65
  %v1593 = vsub.f32 %v1573, %v1589
  %v1594 = vsub.f32 %v1574, %v1590
  %v1595 = vsub.f32 %v1575, %v1591
  %v1596 = vsub.f32 %v1576, %v1592
  %v1597 = vmul.f32 %v1593, %v1593
  %v1598 = vmul.f32 %v1594, %v1594
  %v1599 = vmul.f32 %v1595, %v1595
  %v1600 = vmul.f32 %v1596, %v1596
  %v1601 = vsel %vm52, %v1597, 0.0
  %1602 = vadd.xlane.f32.xlu0 %v1601
  %v1603 = vpop.xlane.xlu0 %1602
  %v1604 = vsel %vm52, %v1598, 0.0
  %1605 = vadd.xlane.f32.xlu0 %v1604
  %v1606 = vpop.xlane.xlu0 %1605
  %v1607 = vsel %vm52, %v1599, 0.0
  %1608 = vadd.xlane.f32.xlu0 %v1607
  %v1609 = vpop.xlane.xlu0 %1608
  %v1610 = vsel %vm52, %v1600, 0.0
  %1611 = vadd.xlane.f32.xlu0 %v1610
  %v1612 = vpop.xlane.xlu0 %1611
  %v1613 = vmul.f32 %v1603, %v65
  %v1614 = vmul.f32 %v1606, %v65
  %v1615 = vmul.f32 %v1609, %v65
  %v1616 = vmul.f32 %v1612, %v65
  %v1617 = vadd.f32 %v1613, 1e-12
  %v1618 = vadd.f32 %v1614, 1e-12
  %v1619 = vadd.f32 %v1615, 1e-12
  %v1620 = vadd.f32 %v1616, 1e-12
  %v1621 = vrsqrt.pop %v1617
  %v1622 = vrsqrt.pop %v1618
  %v1623 = vrsqrt.pop %v1619
  %v1624 = vrsqrt.pop %v1620
  %v1625 = vmul.f32 %v1593, %v1621
  %v1626 = vmul.f32 %v1594, %v1622
  %v1627 = vmul.f32 %v1595, %v1623
  %v1628 = vmul.f32 %v1596, %v1624
  %v1629 = vlaneseq
  %v1630 = vshrl.u32 %v1629, 7
  %v1631 = vsub.s32 1, %v1630
  %v1632 = vrot.slane %v126, %v1631
  %v1633 = vmul.f32 %v1625, %v1632
  %v1634 = vmul.f32 %v1626, %v1632
  %v1635 = vmul.f32 %v1627, %v1632
  %v1636 = vmul.f32 %v1628, %v1632
  %v1637 = vlaneseq
  %v1638 = vshrl.u32 %v1637, 7
  %v1639 = vsub.s32 2, %v1638
  %v1640 = vrot.slane %v126, %v1639
  %v1641 = vadd.f32 %v1633, %v1640
  %v1642 = vadd.f32 %v1634, %v1640
  %v1643 = vadd.f32 %v1635, %v1640
  %v1644 = vadd.f32 %v1636, %v1640
  %v1645 = vld [vmem:[%s6] sm:$0xf]
  %v1646 = vld [vmem:[%s6 + $0x4] sm:$0xf]
  %v1647 = vld [vmem:[%s6 + $0x8] sm:$0xf]
  %v1648 = vld [vmem:[%s6 + $0xc] sm:$0xf]
  %v1649 = vpack.c.bf16 %v1642, %v1641
  %v1650 = vpack.c.bf16 %v1644, %v1643
  %v1651 = vld [vmem:[%s7] sm:$0x1]
  %v1653 = vlaneseq
  %v1654 = vshrl.u32 %v1653, 7
  %v1655 = vsub.s32 0, %v1654
  %v1656 = vrot.slane %v1651, %v1655
  %v1662 = vunpack.c.l.b16 %v1645
  %v1663 = vunpack.c.l.b16 %v1646
  %v1664 = vunpack.c.l.b16 %v1647
  %v1665 = vunpack.c.l.b16 %v1648
  %v1666 = vpack.c.b16 %v1663, %v1662
  %v1667 = vpack.c.b16 %v1665, %v1664
  %v1671 = vsel %vm52, %v1649, 0
  %v1674 = vsel %vm52, %v1650, 0
  %1676 = vmatprep.subr.bf16.mxu0 0
  %1677 = vmatpush1.bf16.msra.mxu0 0
  %1678 = vmatprep.subr.bf16.mxu0 0
  %1679 = vmatpush1.bf16.msra.mxu0 0
  %1680 = vmatprep.subr.bf16.mxu0 0
  %1681 = vmatpush1.bf16.msra.mxu0 0
  %1682 = vmatprep.subr.bf16.mxu0 0
  %1683 = vmatpush1.bf16.msra.mxu0 0
  %1684 = vmatprep.subr.bf16.mxu0 0
  %1685 = vmatpush1.bf16.msra.mxu0 0
  %1686 = vmatprep.subr.bf16.mxu0 0
  %1687 = vmatpush1.bf16.msra.mxu0 0
  %1688 = vmatprep.subr.bf16.mxu0 0
  %1689 = vmatpush1.bf16.msra.mxu0 %v1667
  %1690 = vmatprep.subr.bf16.mxu0 0
  %1691 = vmatpush1.bf16.msra.mxu0 %v1666
  %1692 = vmatprep.subr.bf16.mxu0 0
  %1693 = vmatpush2.bf16.msra.mxu0 0
  %1694 = vmatprep.subr.bf16.mxu0 0
  %1695 = vmatpush2.bf16.msra.mxu0 0
  %1696 = vmatprep.subr.bf16.mxu0 0
  %1697 = vmatpush2.bf16.msra.mxu0 0
  %1698 = vmatprep.subr.bf16.mxu0 0
  %1699 = vmatpush2.bf16.msra.mxu0 0
  %1700 = vmatprep.subr.bf16.mxu0 0
  %1701 = vmatpush2.bf16.msra.mxu0 0
  %1702 = vmatprep.subr.bf16.mxu0 0
  %1703 = vmatpush2.bf16.msra.mxu0 0
  %1704 = vmatprep.subr.bf16.mxu0 0
  %1705 = vmatpush2.bf16.msra.mxu0 0
  %1706 = vmatprep.subr.bf16.mxu0 0
  %1707 = vmatpush2.bf16.msra.mxu0 0
  %1708 = vmatprep.mubr.bf16.mxu0 0
  %1709 = vmatmul.mubr.bf16.gmra.mxu0 %v1671
  %v1710 = vpop.f32.mrf.mxu0
  %v1711 = vadd.f32 %v1656, %v1710
  %v1712 = vpop.f32.mrf.mxu0
  %v1713 = vpop.f32.mrf.mxu0
  %v1714 = vadd.f32 %v1656, %v1713
  %v1715 = vpop.f32.mrf.mxu0
  %1716 = vmatprep.mubr.bf16.mxu0 0
  %1717 = vmatmul.mubr.bf16.gmra.mxu0 %v1674
  %v1718 = vpop.f32.mrf.mxu0
  %v1719 = vadd.f32 %v1656, %v1718
  %v1720 = vpop.f32.mrf.mxu0
  %v1721 = vpop.f32.mrf.mxu0
  %v1722 = vadd.f32 %v1656, %v1721
  %v1723 = vpop.f32.mrf.mxu0
  %1724 = vdwg.mxu0
  %v1725 = vmul.f32 %v1711, %v1711
  %v1726 = vmul.f32 %v1714, %v1714
  %v1727 = vmul.f32 %v1719, %v1719
  %v1728 = vmul.f32 %v1722, %v1722
  %v1729 = vmul.f32 %v1711, %v1725
  %v1730 = vmul.f32 %v1714, %v1726
  %v1731 = vmul.f32 %v1719, %v1727
  %v1732 = vmul.f32 %v1722, %v1728
  %v1733 = vmul.f32 %v1729, 0.044715
  %v1734 = vmul.f32 %v1730, 0.044715
  %v1735 = vmul.f32 %v1731, 0.044715
  %v1736 = vmul.f32 %v1732, 0.044715
  %v1737 = vadd.f32 %v1711, %v1733
  %v1738 = vadd.f32 %v1714, %v1734
  %v1739 = vadd.f32 %v1719, %v1735
  %v1740 = vadd.f32 %v1722, %v1736
  %v1741 = vmul.f32 %v1737, 0.7978846
  %v1742 = vmul.f32 %v1738, 0.7978846
  %v1743 = vmul.f32 %v1739, 0.7978846
  %v1744 = vmul.f32 %v1740, 0.7978846
  %v1745 = vtanh.pop %v1741
  %v1746 = vtanh.pop %v1742
  %v1747 = vtanh.pop %v1743
  %v1748 = vtanh.pop %v1744
  %v1749 = vadd.f32 %v1745, 1.0
  %v1750 = vadd.f32 %v1746, 1.0
  %v1751 = vadd.f32 %v1747, 1.0
  %v1752 = vadd.f32 %v1748, 1.0
  %v1753 = vmul.f32 %v1749, 0.5
  %v1754 = vmul.f32 %v1750, 0.5
  %v1755 = vmul.f32 %v1751, 0.5
  %v1756 = vmul.f32 %v1752, 0.5
  %v1757 = vmul.f32 %v1711, %v1753
  %v1758 = vmul.f32 %v1714, %v1754
  %v1759 = vmul.f32 %v1719, %v1755
  %v1760 = vmul.f32 %v1722, %v1756
  %v1761 = vld [vmem:[%s8] sm:$0xf]
  %v1762 = vld [vmem:[%s8 + $0x4] sm:$0xf]
  %v1763 = vld [vmem:[%s8 + $0x8] sm:$0xf]
  %v1764 = vld [vmem:[%s8 + $0xc] sm:$0xf]
  %v1765 = vld [vmem:[%s8 + $0x10] sm:$0xf]
  %v1766 = vld [vmem:[%s8 + $0x14] sm:$0xf]
  %v1767 = vld [vmem:[%s8 + $0x18] sm:$0xf]
  %v1768 = vld [vmem:[%s8 + $0x1c] sm:$0xf]
  %v1769 = vpack.c.bf16 %v1758, %v1757
  %v1770 = vpack.c.bf16 %v1760, %v1759
  %v1771 = vlaneseq
  %v1772 = vshrl.u32 %v1771, 7
  %v1773 = vsub.s32 3, %v1772
  %v1774 = vrot.slane %v126, %v1773
  %v1783 = vunpack.c.l.b16 %v1761
  %v1784 = vunpack.c.l.b16 %v1762
  %v1785 = vunpack.c.l.b16 %v1763
  %v1786 = vunpack.c.l.b16 %v1764
  %v1787 = vunpack.c.l.b16 %v1765
  %v1788 = vunpack.c.l.b16 %v1766
  %v1789 = vunpack.c.l.b16 %v1767
  %v1790 = vunpack.c.l.b16 %v1768
  %v1791 = vpack.c.b16 %v1784, %v1783
  %v1792 = vpack.c.b16 %v1786, %v1785
  %v1793 = vpack.c.b16 %v1788, %v1787
  %v1794 = vpack.c.b16 %v1790, %v1789
  %vm1799 = vcmask 523264
  %v1801 = vsel %vm1799, %v1769, 0
  %v1804 = vsel %vm1799, %v1770, 0
  %1806 = vmatprep.subr.bf16.mxu0 0
  %1807 = vmatpush1.bf16.msra.mxu0 0
  %1808 = vmatprep.subr.bf16.mxu0 0
  %1809 = vmatpush1.bf16.msra.mxu0 0
  %1810 = vmatprep.subr.bf16.mxu0 0
  %1811 = vmatpush1.bf16.msra.mxu0 0
  %1812 = vmatprep.subr.bf16.mxu0 0
  %1813 = vmatpush1.bf16.msra.mxu0 0
  %1814 = vmatprep.subr.bf16.mxu0 0
  %1815 = vmatpush1.bf16.msra.mxu0 %v1794
  %1816 = vmatprep.subr.bf16.mxu0 0
  %1817 = vmatpush1.bf16.msra.mxu0 %v1793
  %1818 = vmatprep.subr.bf16.mxu0 0
  %1819 = vmatpush1.bf16.msra.mxu0 %v1792
  %1820 = vmatprep.subr.bf16.mxu0 0
  %1821 = vmatpush1.bf16.msra.mxu0 %v1791
  %1822 = vmatprep.subr.bf16.mxu0 0
  %1823 = vmatpush2.bf16.msra.mxu0 0
  %1824 = vmatprep.subr.bf16.mxu0 0
  %1825 = vmatpush2.bf16.msra.mxu0 0
  %1826 = vmatprep.subr.bf16.mxu0 0
  %1827 = vmatpush2.bf16.msra.mxu0 0
  %1828 = vmatprep.subr.bf16.mxu0 0
  %1829 = vmatpush2.bf16.msra.mxu0 0
  %1830 = vmatprep.subr.bf16.mxu0 0
  %1831 = vmatpush2.bf16.msra.mxu0 0
  %1832 = vmatprep.subr.bf16.mxu0 0
  %1833 = vmatpush2.bf16.msra.mxu0 0
  %1834 = vmatprep.subr.bf16.mxu0 0
  %1835 = vmatpush2.bf16.msra.mxu0 0
  %1836 = vmatprep.subr.bf16.mxu0 0
  %1837 = vmatpush2.bf16.msra.mxu0 0
  %1838 = vmatprep.mubr.bf16.mxu0 0
  %1839 = vmatmul.mubr.bf16.gmra.mxu0 %v1801
  %v1840 = vpop.f32.mrf.mxu0
  %v1841 = vadd.f32 %v1774, %v1840
  %v1842 = vpop.f32.mrf.mxu0
  %v1843 = vpop.f32.mrf.mxu0
  %v1844 = vadd.f32 %v1774, %v1843
  %v1845 = vpop.f32.mrf.mxu0
  %1846 = vmatprep.mubr.bf16.mxu0 0
  %1847 = vmatmul.mubr.bf16.gmra.mxu0 %v1804
  %v1848 = vpop.f32.mrf.mxu0
  %v1849 = vadd.f32 %v1774, %v1848
  %v1850 = vpop.f32.mrf.mxu0
  %v1851 = vpop.f32.mrf.mxu0
  %v1852 = vadd.f32 %v1774, %v1851
  %v1853 = vpop.f32.mrf.mxu0
  %1854 = vdwg.mxu0
  %v1855 = vadd.f32 %v1641, %v1841
  %v1856 = vadd.f32 %v1642, %v1844
  %v1857 = vadd.f32 %v1643, %v1849
  %v1858 = vadd.f32 %v1644, %v1852
  %v1859 = vsel %vm52, %v1855, 0.0
  %1860 = vadd.xlane.f32.xlu0 %v1859
  %v1861 = vpop.xlane.xlu0 %1860
  %v1862 = vsel %vm52, %v1856, 0.0
  %1863 = vadd.xlane.f32.xlu0 %v1862
  %v1864 = vpop.xlane.xlu0 %1863
  %v1865 = vsel %vm52, %v1857, 0.0
  %1866 = vadd.xlane.f32.xlu0 %v1865
  %v1867 = vpop.xlane.xlu0 %1866
  %v1868 = vsel %vm52, %v1858, 0.0
  %1869 = vadd.xlane.f32.xlu0 %v1868
  %v1870 = vpop.xlane.xlu0 %1869
  %v1871 = vmul.f32 %v1861, %v65
  %v1872 = vmul.f32 %v1864, %v65
  %v1873 = vmul.f32 %v1867, %v65
  %v1874 = vmul.f32 %v1870, %v65
  %v1875 = vsub.f32 %v1855, %v1871
  %v1876 = vsub.f32 %v1856, %v1872
  %v1877 = vsub.f32 %v1857, %v1873
  %v1878 = vsub.f32 %v1858, %v1874
  %v1879 = vmul.f32 %v1875, %v1875
  %v1880 = vmul.f32 %v1876, %v1876
  %v1881 = vmul.f32 %v1877, %v1877
  %v1882 = vmul.f32 %v1878, %v1878
  %v1883 = vsel %vm52, %v1879, 0.0
  %1884 = vadd.xlane.f32.xlu0 %v1883
  %v1885 = vpop.xlane.xlu0 %1884
  %v1886 = vsel %vm52, %v1880, 0.0
  %1887 = vadd.xlane.f32.xlu0 %v1886
  %v1888 = vpop.xlane.xlu0 %1887
  %v1889 = vsel %vm52, %v1881, 0.0
  %1890 = vadd.xlane.f32.xlu0 %v1889
  %v1891 = vpop.xlane.xlu0 %1890
  %v1892 = vsel %vm52, %v1882, 0.0
  %1893 = vadd.xlane.f32.xlu0 %v1892
  %v1894 = vpop.xlane.xlu0 %1893
  %v1895 = vmul.f32 %v1885, %v65
  %v1896 = vmul.f32 %v1888, %v65
  %v1897 = vmul.f32 %v1891, %v65
  %v1898 = vmul.f32 %v1894, %v65
  %v1899 = vadd.f32 %v1895, 1e-12
  %v1900 = vadd.f32 %v1896, 1e-12
  %v1901 = vadd.f32 %v1897, 1e-12
  %v1902 = vadd.f32 %v1898, 1e-12
  %v1903 = vrsqrt.pop %v1899
  %v1904 = vrsqrt.pop %v1900
  %v1905 = vrsqrt.pop %v1901
  %v1906 = vrsqrt.pop %v1902
  %v1907 = vmul.f32 %v1875, %v1903
  %v1908 = vmul.f32 %v1876, %v1904
  %v1909 = vmul.f32 %v1877, %v1905
  %v1910 = vmul.f32 %v1878, %v1906
  %v1911 = vlaneseq
  %v1912 = vshrl.u32 %v1911, 7
  %v1913 = vsub.s32 4, %v1912
  %v1914 = vrot.slane %v126, %v1913
  %v1915 = vmul.f32 %v1907, %v1914
  %v1916 = vmul.f32 %v1908, %v1914
  %v1917 = vmul.f32 %v1909, %v1914
  %v1918 = vmul.f32 %v1910, %v1914
  %v1919 = vlaneseq
  %v1920 = vshrl.u32 %v1919, 7
  %v1921 = vsub.s32 5, %v1920
  %v1922 = vrot.slane %v126, %v1921
  %v1923 = vadd.f32 %v1915, %v1922
  %v1924 = vadd.f32 %v1916, %v1922
  %v1925 = vadd.f32 %v1917, %v1922
  %v1926 = vadd.f32 %v1918, %v1922
  %s1927 = scalar_lea.vmem %s5, 16
  %v1928 = vld [vmem:[%s1927] sm:$0xf]
  %v1929 = vld [vmem:[%s1927 + $0x4] sm:$0xf]
  %v1930 = vld [vmem:[%s1927 + $0x8] sm:$0xf]
  %v1931 = vld [vmem:[%s1927 + $0xc] sm:$0xf]
  %s1932 = scalar_lea.vmem %s9, 8
  %v1933 = vld [vmem:[%s1932] sm:$0x3f]
  %s1934 = scalar_lea.vmem %s3, 16
  %v1935 = vld [vmem:[%s1934] sm:$0xf]
  %v1936 = vld [vmem:[%s1934 + $0x4] sm:$0xf]
  %v1937 = vld [vmem:[%s1934 + $0x8] sm:$0xf]
  %v1938 = vld [vmem:[%s1934 + $0xc] sm:$0xf]
  %v1939 = vpack.c.bf16 %v1924, %v1923
  %v1940 = vpack.c.bf16 %v1926, %v1925
  %s1941 = scalar_lea.vmem %s4, 1
  %v1942 = vld [vmem:[%s1941] sm:$0x1]
  %v1944 = vlaneseq
  %v1945 = vshrl.u32 %v1944, 7
  %v1946 = vsub.s32 0, %v1945
  %v1947 = vrot.slane %v1942, %v1946
  %v1953 = vunpack.c.l.b16 %v1935
  %v1954 = vunpack.c.l.b16 %v1936
  %v1955 = vunpack.c.l.b16 %v1937
  %v1956 = vunpack.c.l.b16 %v1938
  %v1957 = vpack.c.b16 %v1954, %v1953
  %v1958 = vpack.c.b16 %v1956, %v1955
  %v1962 = vsel %vm52, %v1939, 0
  %v1965 = vsel %vm52, %v1940, 0
  %1967 = vmatprep.subr.bf16.mxu0 0
  %1968 = vmatpush1.bf16.msra.mxu0 0
  %1969 = vmatprep.subr.bf16.mxu0 0
  %1970 = vmatpush1.bf16.msra.mxu0 0
  %1971 = vmatprep.subr.bf16.mxu0 0
  %1972 = vmatpush1.bf16.msra.mxu0 0
  %1973 = vmatprep.subr.bf16.mxu0 0
  %1974 = vmatpush1.bf16.msra.mxu0 0
  %1975 = vmatprep.subr.bf16.mxu0 0
  %1976 = vmatpush1.bf16.msra.mxu0 0
  %1977 = vmatprep.subr.bf16.mxu0 0
  %1978 = vmatpush1.bf16.msra.mxu0 0
  %1979 = vmatprep.subr.bf16.mxu0 0
  %1980 = vmatpush1.bf16.msra.mxu0 %v1958
  %1981 = vmatprep.subr.bf16.mxu0 0
  %1982 = vmatpush1.bf16.msra.mxu0 %v1957
  %1983 = vmatprep.subr.bf16.mxu0 0
  %1984 = vmatpush2.bf16.msra.mxu0 0
  %1985 = vmatprep.subr.bf16.mxu0 0
  %1986 = vmatpush2.bf16.msra.mxu0 0
  %1987 = vmatprep.subr.bf16.mxu0 0
  %1988 = vmatpush2.bf16.msra.mxu0 0
  %1989 = vmatprep.subr.bf16.mxu0 0
  %1990 = vmatpush2.bf16.msra.mxu0 0
  %1991 = vmatprep.subr.bf16.mxu0 0
  %1992 = vmatpush2.bf16.msra.mxu0 0
  %1993 = vmatprep.subr.bf16.mxu0 0
  %1994 = vmatpush2.bf16.msra.mxu0 0
  %1995 = vmatprep.subr.bf16.mxu0 0
  %1996 = vmatpush2.bf16.msra.mxu0 0
  %1997 = vmatprep.subr.bf16.mxu0 0
  %1998 = vmatpush2.bf16.msra.mxu0 0
  %1999 = vmatprep.mubr.bf16.mxu0 0
  %2000 = vmatmul.mubr.bf16.gmra.mxu0 %v1962
  %v2001 = vpop.f32.mrf.mxu0
  %v2002 = vadd.f32 %v1947, %v2001
  %v2003 = vpop.f32.mrf.mxu0
  %v2004 = vpop.f32.mrf.mxu0
  %v2005 = vadd.f32 %v1947, %v2004
  %v2006 = vpop.f32.mrf.mxu0
  %2007 = vmatprep.mubr.bf16.mxu0 0
  %2008 = vmatmul.mubr.bf16.gmra.mxu0 %v1965
  %v2009 = vpop.f32.mrf.mxu0
  %v2010 = vadd.f32 %v1947, %v2009
  %v2011 = vpop.f32.mrf.mxu0
  %v2012 = vpop.f32.mrf.mxu0
  %v2013 = vadd.f32 %v1947, %v2012
  %v2014 = vpop.f32.mrf.mxu0
  %2015 = vdwg.mxu0
  %2020 = vrot.lane.b32.xlu0 %v2002, 96
  %v2021 = vpop.permute.xlu0 %2020
  %2022 = vrot.lane.b32.xlu0 %v2005, 96
  %v2023 = vpop.permute.xlu0 %2022
  %2024 = vrot.lane.b32.xlu0 %v2010, 96
  %v2025 = vpop.permute.xlu0 %2024
  %2026 = vrot.lane.b32.xlu0 %v2013, 96
  %v2027 = vpop.permute.xlu0 %2026
  %v2028 = vsel %vm219, %v2002, 0
  %v2030 = vsel %vm219, %v2005, 0
  %v2032 = vsel %vm219, %v2010, 0
  %v2034 = vsel %vm219, %v2013, 0
  %v2036 = vsel %vm219, %v2021, 0
  %v2038 = vsel %vm219, %v2023, 0
  %v2040 = vsel %vm219, %v2025, 0
  %v2042 = vsel %vm219, %v2027, 0
  %2044 = vmatprep.subr.mxu0 0.0
  %2045 = vmatpush1.xpose.msra.mxu0 0.0
  %2046 = vmatprep.subr.mxu0 0.0
  %2047 = vmatpush1.xpose.msra.mxu0 0.0
  %2048 = vmatprep.subr.mxu0 0.0
  %2049 = vmatpush1.xpose.msra.mxu0 0.0
  %2050 = vmatprep.subr.mxu0 0.0
  %2051 = vmatpush1.xpose.msra.mxu0 0.0
  %2052 = vmatprep.subr.mxu0 0.0
  %2053 = vmatpush1.xpose.msra.mxu0 0.0
  %2054 = vmatprep.subr.mxu0 0.0
  %2055 = vmatpush1.xpose.msra.mxu0 0.0
  %2056 = vmatprep.subr.mxu0 0.0
  %2057 = vmatpush1.xpose.msra.mxu0 0.0
  %2058 = vmatprep.subr.mxu0 0.0
  %2059 = vmatpush1.xpose.msra.mxu0 0.0
  %2060 = vmatprep.subr.mxu0 0.0
  %2061 = vmatpush1.xpose.msra.mxu0 0.0
  %2062 = vmatprep.subr.mxu0 0.0
  %2063 = vmatpush1.xpose.msra.mxu0 0.0
  %2064 = vmatprep.subr.mxu0 0.0
  %2065 = vmatpush1.xpose.msra.mxu0 0.0
  %2066 = vmatprep.subr.mxu0 0.0
  %2067 = vmatpush1.xpose.msra.mxu0 0.0
  %2068 = vmatprep.subr.mxu0 0.0
  %2069 = vmatpush1.xpose.msra.mxu0 %v2042
  %2070 = vmatprep.subr.mxu0 0.0
  %2071 = vmatpush1.xpose.msra.mxu0 %v2040
  %2072 = vmatprep.subr.mxu0 0.0
  %2073 = vmatpush1.xpose.msra.mxu0 %v2038
  %2074 = vmatprep.subr.mxu0 0.0
  %2075 = vmatpush1.xpose.msra.mxu0 %v2036
  %2076 = vmatprep.subr.mxu0 0.0
  %2077 = vmatpush2.xpose.msra.mxu0 0.0
  %2078 = vmatprep.subr.mxu0 0.0
  %2079 = vmatpush2.xpose.msra.mxu0 0.0
  %2080 = vmatprep.subr.mxu0 0.0
  %2081 = vmatpush2.xpose.msra.mxu0 0.0
  %2082 = vmatprep.subr.mxu0 0.0
  %2083 = vmatpush2.xpose.msra.mxu0 0.0
  %2084 = vmatprep.subr.mxu0 0.0
  %2085 = vmatpush2.xpose.msra.mxu0 0.0
  %2086 = vmatprep.subr.mxu0 0.0
  %2087 = vmatpush2.xpose.msra.mxu0 0.0
  %2088 = vmatprep.subr.mxu0 0.0
  %2089 = vmatpush2.xpose.msra.mxu0 0.0
  %2090 = vmatprep.subr.mxu0 0.0
  %2091 = vmatpush2.xpose.msra.mxu0 0.0
  %2092 = vmatprep.subr.mxu0 0.0
  %2093 = vmatpush2.xpose.msra.mxu0 0.0
  %2094 = vmatprep.subr.mxu0 0.0
  %2095 = vmatpush2.xpose.msra.mxu0 0.0
  %2096 = vmatprep.subr.mxu0 0.0
  %2097 = vmatpush2.xpose.msra.mxu0 0.0
  %2098 = vmatprep.subr.mxu0 0.0
  %2099 = vmatpush2.xpose.msra.mxu0 0.0
  %2100 = vmatprep.subr.mxu0 0.0
  %2101 = vmatpush2.xpose.msra.mxu0 0.0
  %2102 = vmatprep.subr.mxu0 0.0
  %2103 = vmatpush2.xpose.msra.mxu0 0.0
  %2104 = vmatprep.subr.mxu0 0.0
  %2105 = vmatpush2.xpose.msra.mxu0 0.0
  %2106 = vmatprep.subr.mxu0 0.0
  %2107 = vmatpush2.xpose.msra.mxu0 0.0
  %2108 = vmatprep.mubr.f32.mxu0 0.0
  %2109 = vmatmul.mubr.f32.gmra.mxu0 %v2028
  %v2110 = vpop.f32.mrf.mxu0
  %v2111 = vadd.f32 0.0, %v2110
  %v2112 = vpop.f32.mrf.mxu0
  %2113 = vmatprep.mubr.f32.mxu0 0.0
  %2114 = vmatmul.mubr.f32.gmra.mxu0 %v2030
  %v2115 = vpop.f32.mrf.mxu0
  %v2116 = vadd.f32 0.0, %v2115
  %v2117 = vpop.f32.mrf.mxu0
  %2118 = vmatprep.mubr.f32.mxu0 0.0
  %2119 = vmatmul.mubr.f32.gmra.mxu0 %v2032
  %v2120 = vpop.f32.mrf.mxu0
  %v2121 = vadd.f32 0.0, %v2120
  %v2122 = vpop.f32.mrf.mxu0
  %2123 = vmatprep.mubr.f32.mxu0 0.0
  %2124 = vmatmul.mubr.f32.gmra.mxu0 %v2034
  %v2125 = vpop.f32.mrf.mxu0
  %v2126 = vadd.f32 0.0, %v2125
  %v2127 = vpop.f32.mrf.mxu0
  %2128 = vdwg.mxu0
  %v2129 = vmul.f32 %v2111, 0.35355338
  %v2130 = vmul.f32 %v2116, 0.35355338
  %v2131 = vmul.f32 %v2121, 0.35355338
  %v2132 = vmul.f32 %v2126, 0.35355338
  %v2133 = vadd.f32 %v2129, %v46
  %v2134 = vadd.f32 %v2130, %v47
  %v2135 = vadd.f32 %v2131, %v48
  %v2136 = vadd.f32 %v2132, %v49
  %v2137 = vsel %vm52, %v2133, -inf
  %2138 = vmax.xlane.f32.xlu0 %v2137
  %v2139 = vpop.xlane.xlu0 %2138
  %v2140 = vsel %vm52, %v2134, -inf
  %2141 = vmax.xlane.f32.xlu0 %v2140
  %v2142 = vpop.xlane.xlu0 %2141
  %v2143 = vsel %vm52, %v2135, -inf
  %2144 = vmax.xlane.f32.xlu0 %v2143
  %v2145 = vpop.xlane.xlu0 %2144
  %v2146 = vsel %vm52, %v2136, -inf
  %2147 = vmax.xlane.f32.xlu0 %v2146
  %v2148 = vpop.xlane.xlu0 %2147
  %v2149 = vsub.f32 %v2133, %v2139
  %v2150 = vsub.f32 %v2134, %v2142
  %v2151 = vsub.f32 %v2135, %v2145
  %v2152 = vsub.f32 %v2136, %v2148
  %v2153 = vmul.f32 %v2149, 1.442695
  %v2154 = vpow.pop %v2153
  %v2155 = vmul.f32 %v2150, 1.442695
  %v2156 = vpow.pop %v2155
  %v2157 = vmul.f32 %v2151, 1.442695
  %v2158 = vpow.pop %v2157
  %v2159 = vmul.f32 %v2152, 1.442695
  %v2160 = vpow.pop %v2159
  %v2161 = vsel %vm52, %v2154, 0.0
  %2162 = vadd.xlane.f32.xlu0 %v2161
  %v2163 = vpop.xlane.xlu0 %2162
  %v2164 = vsel %vm52, %v2156, 0.0
  %2165 = vadd.xlane.f32.xlu0 %v2164
  %v2166 = vpop.xlane.xlu0 %2165
  %v2167 = vsel %vm52, %v2158, 0.0
  %2168 = vadd.xlane.f32.xlu0 %v2167
  %v2169 = vpop.xlane.xlu0 %2168
  %v2170 = vsel %vm52, %v2160, 0.0
  %2171 = vadd.xlane.f32.xlu0 %v2170
  %v2172 = vpop.xlane.xlu0 %2171
  %v2173 = vrcp.pop %v2163
  %v2174 = vrcp.pop %v2166
  %v2175 = vrcp.pop %v2169
  %v2176 = vrcp.pop %v2172
  %v2177 = vmul.f32 %v2154, %v2173
  %v2178 = vmul.f32 %v2156, %v2174
  %v2179 = vmul.f32 %v2158, %v2175
  %v2180 = vmul.f32 %v2160, %v2176
  %2181 = vrot.lane.b32.xlu0 %v2002, 64
  %v2182 = vpop.permute.xlu0 %2181
  %2183 = vrot.lane.b32.xlu0 %v2005, 64
  %v2184 = vpop.permute.xlu0 %2183
  %2185 = vrot.lane.b32.xlu0 %v2010, 64
  %v2186 = vpop.permute.xlu0 %2185
  %2187 = vrot.lane.b32.xlu0 %v2013, 64
  %v2188 = vpop.permute.xlu0 %2187
  %v2194 = vsel %vm52, %v2177, 0
  %v2197 = vsel %vm52, %v2178, 0
  %v2200 = vsel %vm52, %v2179, 0
  %v2203 = vsel %vm52, %v2180, 0
  %2205 = vmatprep.subr.mxu0 0.0
  %2206 = vmatpush1.msra.mxu0 0.0
  %2207 = vmatprep.subr.mxu0 0.0
  %2208 = vmatpush1.msra.mxu0 0.0
  %2209 = vmatprep.subr.mxu0 0.0
  %2210 = vmatpush1.msra.mxu0 0.0
  %2211 = vmatprep.subr.mxu0 0.0
  %2212 = vmatpush1.msra.mxu0 0.0
  %2213 = vmatprep.subr.mxu0 0.0
  %2214 = vmatpush1.msra.mxu0 0.0
  %2215 = vmatprep.subr.mxu0 0.0
  %2216 = vmatpush1.msra.mxu0 0.0
  %2217 = vmatprep.subr.mxu0 0.0
  %2218 = vmatpush1.msra.mxu0 0.0
  %2219 = vmatprep.subr.mxu0 0.0
  %2220 = vmatpush1.msra.mxu0 0.0
  %2221 = vmatprep.subr.mxu0 0.0
  %2222 = vmatpush1.msra.mxu0 0.0
  %2223 = vmatprep.subr.mxu0 0.0
  %2224 = vmatpush1.msra.mxu0 0.0
  %2225 = vmatprep.subr.mxu0 0.0
  %2226 = vmatpush1.msra.mxu0 0.0
  %2227 = vmatprep.subr.mxu0 0.0
  %2228 = vmatpush1.msra.mxu0 0.0
  %2229 = vmatprep.subr.mxu0 0.0
  %2230 = vmatpush1.msra.mxu0 %v2188
  %2231 = vmatprep.subr.mxu0 0.0
  %2232 = vmatpush1.msra.mxu0 %v2186
  %2233 = vmatprep.subr.mxu0 0.0
  %2234 = vmatpush1.msra.mxu0 %v2184
  %2235 = vmatprep.subr.mxu0 0.0
  %2236 = vmatpush1.msra.mxu0 %v2182
  %2237 = vmatprep.subr.mxu0 0.0
  %2238 = vmatpush2.msra.mxu0 0.0
  %2239 = vmatprep.subr.mxu0 0.0
  %2240 = vmatpush2.msra.mxu0 0.0
  %2241 = vmatprep.subr.mxu0 0.0
  %2242 = vmatpush2.msra.mxu0 0.0
  %2243 = vmatprep.subr.mxu0 0.0
  %2244 = vmatpush2.msra.mxu0 0.0
  %2245 = vmatprep.subr.mxu0 0.0
  %2246 = vmatpush2.msra.mxu0 0.0
  %2247 = vmatprep.subr.mxu0 0.0
  %2248 = vmatpush2.msra.mxu0 0.0
  %2249 = vmatprep.subr.mxu0 0.0
  %2250 = vmatpush2.msra.mxu0 0.0
  %2251 = vmatprep.subr.mxu0 0.0
  %2252 = vmatpush2.msra.mxu0 0.0
  %2253 = vmatprep.subr.mxu0 0.0
  %2254 = vmatpush2.msra.mxu0 0.0
  %2255 = vmatprep.subr.mxu0 0.0
  %2256 = vmatpush2.msra.mxu0 0.0
  %2257 = vmatprep.subr.mxu0 0.0
  %2258 = vmatpush2.msra.mxu0 0.0
  %2259 = vmatprep.subr.mxu0 0.0
  %2260 = vmatpush2.msra.mxu0 0.0
  %2261 = vmatprep.subr.mxu0 0.0
  %2262 = vmatpush2.msra.mxu0 0.0
  %2263 = vmatprep.subr.mxu0 0.0
  %2264 = vmatpush2.msra.mxu0 0.0
  %2265 = vmatprep.subr.mxu0 0.0
  %2266 = vmatpush2.msra.mxu0 0.0
  %2267 = vmatprep.subr.mxu0 0.0
  %2268 = vmatpush2.msra.mxu0 0.0
  %2269 = vmatprep.mubr.f32.mxu0 0.0
  %2270 = vmatmul.mubr.f32.gmra.mxu0 %v2194
  %v2271 = vpop.f32.mrf.mxu0
  %v2272 = vadd.f32 0.0, %v2271
  %v2273 = vpop.f32.mrf.mxu0
  %2274 = vmatprep.mubr.f32.mxu0 0.0
  %2275 = vmatmul.mubr.f32.gmra.mxu0 %v2197
  %v2276 = vpop.f32.mrf.mxu0
  %v2277 = vadd.f32 0.0, %v2276
  %v2278 = vpop.f32.mrf.mxu0
  %2279 = vmatprep.mubr.f32.mxu0 0.0
  %2280 = vmatmul.mubr.f32.gmra.mxu0 %v2200
  %v2281 = vpop.f32.mrf.mxu0
  %v2282 = vadd.f32 0.0, %v2281
  %v2283 = vpop.f32.mrf.mxu0
  %2284 = vmatprep.mubr.f32.mxu0 0.0
  %2285 = vmatmul.mubr.f32.gmra.mxu0 %v2203
  %v2286 = vpop.f32.mrf.mxu0
  %v2287 = vadd.f32 0.0, %v2286
  %v2288 = vpop.f32.mrf.mxu0
  %2289 = vdwg.mxu0
  %v2290 = vpack.c.bf16 %v2277, %v2272
  %v2291 = vpack.c.bf16 %v2287, %v2282
  %2292 = vrot.lane.b32.xlu0 %v2002, 120
  %v2293 = vpop.permute.xlu0 %2292
  %2294 = vrot.lane.b32.xlu0 %v2005, 120
  %v2295 = vpop.permute.xlu0 %2294
  %2296 = vrot.lane.b32.xlu0 %v2010, 120
  %v2297 = vpop.permute.xlu0 %2296
  %2298 = vrot.lane.b32.xlu0 %v2013, 120
  %v2299 = vpop.permute.xlu0 %2298
  %2300 = vrot.lane.b32.xlu0 %v2002, 88
  %v2301 = vpop.permute.xlu0 %2300
  %2302 = vrot.lane.b32.xlu0 %v2005, 88
  %v2303 = vpop.permute.xlu0 %2302
  %2304 = vrot.lane.b32.xlu0 %v2010, 88
  %v2305 = vpop.permute.xlu0 %2304
  %2306 = vrot.lane.b32.xlu0 %v2013, 88
  %v2307 = vpop.permute.xlu0 %2306
  %v2308 = vsel %vm219, %v2293, 0
  %v2310 = vsel %vm219, %v2295, 0
  %v2312 = vsel %vm219, %v2297, 0
  %v2314 = vsel %vm219, %v2299, 0
  %v2316 = vsel %vm219, %v2301, 0
  %v2318 = vsel %vm219, %v2303, 0
  %v2320 = vsel %vm219, %v2305, 0
  %v2322 = vsel %vm219, %v2307, 0
  %2324 = vmatprep.subr.mxu0 0.0
  %2325 = vmatpush1.xpose.msra.mxu0 0.0
  %2326 = vmatprep.subr.mxu0 0.0
  %2327 = vmatpush1.xpose.msra.mxu0 0.0
  %2328 = vmatprep.subr.mxu0 0.0
  %2329 = vmatpush1.xpose.msra.mxu0 0.0
  %2330 = vmatprep.subr.mxu0 0.0
  %2331 = vmatpush1.xpose.msra.mxu0 0.0
  %2332 = vmatprep.subr.mxu0 0.0
  %2333 = vmatpush1.xpose.msra.mxu0 0.0
  %2334 = vmatprep.subr.mxu0 0.0
  %2335 = vmatpush1.xpose.msra.mxu0 0.0
  %2336 = vmatprep.subr.mxu0 0.0
  %2337 = vmatpush1.xpose.msra.mxu0 0.0
  %2338 = vmatprep.subr.mxu0 0.0
  %2339 = vmatpush1.xpose.msra.mxu0 0.0
  %2340 = vmatprep.subr.mxu0 0.0
  %2341 = vmatpush1.xpose.msra.mxu0 0.0
  %2342 = vmatprep.subr.mxu0 0.0
  %2343 = vmatpush1.xpose.msra.mxu0 0.0
  %2344 = vmatprep.subr.mxu0 0.0
  %2345 = vmatpush1.xpose.msra.mxu0 0.0
  %2346 = vmatprep.subr.mxu0 0.0
  %2347 = vmatpush1.xpose.msra.mxu0 0.0
  %2348 = vmatprep.subr.mxu0 0.0
  %2349 = vmatpush1.xpose.msra.mxu0 %v2322
  %2350 = vmatprep.subr.mxu0 0.0
  %2351 = vmatpush1.xpose.msra.mxu0 %v2320
  %2352 = vmatprep.subr.mxu0 0.0
  %2353 = vmatpush1.xpose.msra.mxu0 %v2318
  %2354 = vmatprep.subr.mxu0 0.0
  %2355 = vmatpush1.xpose.msra.mxu0 %v2316
  %2356 = vmatprep.subr.mxu0 0.0
  %2357 = vmatpush2.xpose.msra.mxu0 0.0
  %2358 = vmatprep.subr.mxu0 0.0
  %2359 = vmatpush2.xpose.msra.mxu0 0.0
  %2360 = vmatprep.subr.mxu0 0.0
  %2361 = vmatpush2.xpose.msra.mxu0 0.0
  %2362 = vmatprep.subr.mxu0 0.0
  %2363 = vmatpush2.xpose.msra.mxu0 0.0
  %2364 = vmatprep.subr.mxu0 0.0
  %2365 = vmatpush2.xpose.msra.mxu0 0.0
  %2366 = vmatprep.subr.mxu0 0.0
  %2367 = vmatpush2.xpose.msra.mxu0 0.0
  %2368 = vmatprep.subr.mxu0 0.0
  %2369 = vmatpush2.xpose.msra.mxu0 0.0
  %2370 = vmatprep.subr.mxu0 0.0
  %2371 = vmatpush2.xpose.msra.mxu0 0.0
  %2372 = vmatprep.subr.mxu0 0.0
  %2373 = vmatpush2.xpose.msra.mxu0 0.0
  %2374 = vmatprep.subr.mxu0 0.0
  %2375 = vmatpush2.xpose.msra.mxu0 0.0
  %2376 = vmatprep.subr.mxu0 0.0
  %2377 = vmatpush2.xpose.msra.mxu0 0.0
  %2378 = vmatprep.subr.mxu0 0.0
  %2379 = vmatpush2.xpose.msra.mxu0 0.0
  %2380 = vmatprep.subr.mxu0 0.0
  %2381 = vmatpush2.xpose.msra.mxu0 0.0
  %2382 = vmatprep.subr.mxu0 0.0
  %2383 = vmatpush2.xpose.msra.mxu0 0.0
  %2384 = vmatprep.subr.mxu0 0.0
  %2385 = vmatpush2.xpose.msra.mxu0 0.0
  %2386 = vmatprep.subr.mxu0 0.0
  %2387 = vmatpush2.xpose.msra.mxu0 0.0
  %2388 = vmatprep.mubr.f32.mxu0 0.0
  %2389 = vmatmul.mubr.f32.gmra.mxu0 %v2308
  %v2390 = vpop.f32.mrf.mxu0
  %v2391 = vadd.f32 0.0, %v2390
  %v2392 = vpop.f32.mrf.mxu0
  %2393 = vmatprep.mubr.f32.mxu0 0.0
  %2394 = vmatmul.mubr.f32.gmra.mxu0 %v2310
  %v2395 = vpop.f32.mrf.mxu0
  %v2396 = vadd.f32 0.0, %v2395
  %v2397 = vpop.f32.mrf.mxu0
  %2398 = vmatprep.mubr.f32.mxu0 0.0
  %2399 = vmatmul.mubr.f32.gmra.mxu0 %v2312
  %v2400 = vpop.f32.mrf.mxu0
  %v2401 = vadd.f32 0.0, %v2400
  %v2402 = vpop.f32.mrf.mxu0
  %2403 = vmatprep.mubr.f32.mxu0 0.0
  %2404 = vmatmul.mubr.f32.gmra.mxu0 %v2314
  %v2405 = vpop.f32.mrf.mxu0
  %v2406 = vadd.f32 0.0, %v2405
  %v2407 = vpop.f32.mrf.mxu0
  %2408 = vdwg.mxu0
  %v2409 = vmul.f32 %v2391, 0.35355338
  %v2410 = vmul.f32 %v2396, 0.35355338
  %v2411 = vmul.f32 %v2401, 0.35355338
  %v2412 = vmul.f32 %v2406, 0.35355338
  %v2413 = vadd.f32 %v2409, %v46
  %v2414 = vadd.f32 %v2410, %v47
  %v2415 = vadd.f32 %v2411, %v48
  %v2416 = vadd.f32 %v2412, %v49
  %v2417 = vsel %vm52, %v2413, -inf
  %2418 = vmax.xlane.f32.xlu0 %v2417
  %v2419 = vpop.xlane.xlu0 %2418
  %v2420 = vsel %vm52, %v2414, -inf
  %2421 = vmax.xlane.f32.xlu0 %v2420
  %v2422 = vpop.xlane.xlu0 %2421
  %v2423 = vsel %vm52, %v2415, -inf
  %2424 = vmax.xlane.f32.xlu0 %v2423
  %v2425 = vpop.xlane.xlu0 %2424
  %v2426 = vsel %vm52, %v2416, -inf
  %2427 = vmax.xlane.f32.xlu0 %v2426
  %v2428 = vpop.xlane.xlu0 %2427
  %v2429 = vsub.f32 %v2413, %v2419
  %v2430 = vsub.f32 %v2414, %v2422
  %v2431 = vsub.f32 %v2415, %v2425
  %v2432 = vsub.f32 %v2416, %v2428
  %v2433 = vmul.f32 %v2429, 1.442695
  %v2434 = vpow.pop %v2433
  %v2435 = vmul.f32 %v2430, 1.442695
  %v2436 = vpow.pop %v2435
  %v2437 = vmul.f32 %v2431, 1.442695
  %v2438 = vpow.pop %v2437
  %v2439 = vmul.f32 %v2432, 1.442695
  %v2440 = vpow.pop %v2439
  %v2441 = vsel %vm52, %v2434, 0.0
  %2442 = vadd.xlane.f32.xlu0 %v2441
  %v2443 = vpop.xlane.xlu0 %2442
  %v2444 = vsel %vm52, %v2436, 0.0
  %2445 = vadd.xlane.f32.xlu0 %v2444
  %v2446 = vpop.xlane.xlu0 %2445
  %v2447 = vsel %vm52, %v2438, 0.0
  %2448 = vadd.xlane.f32.xlu0 %v2447
  %v2449 = vpop.xlane.xlu0 %2448
  %v2450 = vsel %vm52, %v2440, 0.0
  %2451 = vadd.xlane.f32.xlu0 %v2450
  %v2452 = vpop.xlane.xlu0 %2451
  %v2453 = vrcp.pop %v2443
  %v2454 = vrcp.pop %v2446
  %v2455 = vrcp.pop %v2449
  %v2456 = vrcp.pop %v2452
  %v2457 = vmul.f32 %v2434, %v2453
  %v2458 = vmul.f32 %v2436, %v2454
  %v2459 = vmul.f32 %v2438, %v2455
  %v2460 = vmul.f32 %v2440, %v2456
  %2461 = vrot.lane.b32.xlu0 %v2002, 56
  %v2462 = vpop.permute.xlu0 %2461
  %2463 = vrot.lane.b32.xlu0 %v2005, 56
  %v2464 = vpop.permute.xlu0 %2463
  %2465 = vrot.lane.b32.xlu0 %v2010, 56
  %v2466 = vpop.permute.xlu0 %2465
  %2467 = vrot.lane.b32.xlu0 %v2013, 56
  %v2468 = vpop.permute.xlu0 %2467
  %v2474 = vsel %vm52, %v2457, 0
  %v2477 = vsel %vm52, %v2458, 0
  %v2480 = vsel %vm52, %v2459, 0
  %v2483 = vsel %vm52, %v2460, 0
  %2485 = vmatprep.subr.mxu0 0.0
  %2486 = vmatpush1.msra.mxu0 0.0
  %2487 = vmatprep.subr.mxu0 0.0
  %2488 = vmatpush1.msra.mxu0 0.0
  %2489 = vmatprep.subr.mxu0 0.0
  %2490 = vmatpush1.msra.mxu0 0.0
  %2491 = vmatprep.subr.mxu0 0.0
  %2492 = vmatpush1.msra.mxu0 0.0
  %2493 = vmatprep.subr.mxu0 0.0
  %2494 = vmatpush1.msra.mxu0 0.0
  %2495 = vmatprep.subr.mxu0 0.0
  %2496 = vmatpush1.msra.mxu0 0.0
  %2497 = vmatprep.subr.mxu0 0.0
  %2498 = vmatpush1.msra.mxu0 0.0
  %2499 = vmatprep.subr.mxu0 0.0
  %2500 = vmatpush1.msra.mxu0 0.0
  %2501 = vmatprep.subr.mxu0 0.0
  %2502 = vmatpush1.msra.mxu0 0.0
  %2503 = vmatprep.subr.mxu0 0.0
  %2504 = vmatpush1.msra.mxu0 0.0
  %2505 = vmatprep.subr.mxu0 0.0
  %2506 = vmatpush1.msra.mxu0 0.0
  %2507 = vmatprep.subr.mxu0 0.0
  %2508 = vmatpush1.msra.mxu0 0.0
  %2509 = vmatprep.subr.mxu0 0.0
  %2510 = vmatpush1.msra.mxu0 %v2468
  %2511 = vmatprep.subr.mxu0 0.0
  %2512 = vmatpush1.msra.mxu0 %v2466
  %2513 = vmatprep.subr.mxu0 0.0
  %2514 = vmatpush1.msra.mxu0 %v2464
  %2515 = vmatprep.subr.mxu0 0.0
  %2516 = vmatpush1.msra.mxu0 %v2462
  %2517 = vmatprep.subr.mxu0 0.0
  %2518 = vmatpush2.msra.mxu0 0.0
  %2519 = vmatprep.subr.mxu0 0.0
  %2520 = vmatpush2.msra.mxu0 0.0
  %2521 = vmatprep.subr.mxu0 0.0
  %2522 = vmatpush2.msra.mxu0 0.0
  %2523 = vmatprep.subr.mxu0 0.0
  %2524 = vmatpush2.msra.mxu0 0.0
  %2525 = vmatprep.subr.mxu0 0.0
  %2526 = vmatpush2.msra.mxu0 0.0
  %2527 = vmatprep.subr.mxu0 0.0
  %2528 = vmatpush2.msra.mxu0 0.0
  %2529 = vmatprep.subr.mxu0 0.0
  %2530 = vmatpush2.msra.mxu0 0.0
  %2531 = vmatprep.subr.mxu0 0.0
  %2532 = vmatpush2.msra.mxu0 0.0
  %2533 = vmatprep.subr.mxu0 0.0
  %2534 = vmatpush2.msra.mxu0 0.0
  %2535 = vmatprep.subr.mxu0 0.0
  %2536 = vmatpush2.msra.mxu0 0.0
  %2537 = vmatprep.subr.mxu0 0.0
  %2538 = vmatpush2.msra.mxu0 0.0
  %2539 = vmatprep.subr.mxu0 0.0
  %2540 = vmatpush2.msra.mxu0 0.0
  %2541 = vmatprep.subr.mxu0 0.0
  %2542 = vmatpush2.msra.mxu0 0.0
  %2543 = vmatprep.subr.mxu0 0.0
  %2544 = vmatpush2.msra.mxu0 0.0
  %2545 = vmatprep.subr.mxu0 0.0
  %2546 = vmatpush2.msra.mxu0 0.0
  %2547 = vmatprep.subr.mxu0 0.0
  %2548 = vmatpush2.msra.mxu0 0.0
  %2549 = vmatprep.mubr.f32.mxu0 0.0
  %2550 = vmatmul.mubr.f32.gmra.mxu0 %v2474
  %v2551 = vpop.f32.mrf.mxu0
  %v2552 = vadd.f32 0.0, %v2551
  %v2553 = vpop.f32.mrf.mxu0
  %2554 = vmatprep.mubr.f32.mxu0 0.0
  %2555 = vmatmul.mubr.f32.gmra.mxu0 %v2477
  %v2556 = vpop.f32.mrf.mxu0
  %v2557 = vadd.f32 0.0, %v2556
  %v2558 = vpop.f32.mrf.mxu0
  %2559 = vmatprep.mubr.f32.mxu0 0.0
  %2560 = vmatmul.mubr.f32.gmra.mxu0 %v2480
  %v2561 = vpop.f32.mrf.mxu0
  %v2562 = vadd.f32 0.0, %v2561
  %v2563 = vpop.f32.mrf.mxu0
  %2564 = vmatprep.mubr.f32.mxu0 0.0
  %2565 = vmatmul.mubr.f32.gmra.mxu0 %v2483
  %v2566 = vpop.f32.mrf.mxu0
  %v2567 = vadd.f32 0.0, %v2566
  %v2568 = vpop.f32.mrf.mxu0
  %2569 = vdwg.mxu0
  %v2570 = vpack.c.bf16 %v2557, %v2552
  %v2571 = vpack.c.bf16 %v2567, %v2562
  %v2573 = vsel %vm219, %v2570, 0
  %v2576 = vsel %vm219, %v2571, 0
  %v2579 = vsel %vm770, %v1929, 0
  %2581 = vmatprep.subr.bf16.mxu0 0
  %2582 = vmatpush1.bf16.msra.mxu0 0
  %2583 = vmatprep.subr.bf16.mxu0 0
  %2584 = vmatpush1.bf16.msra.mxu0 0
  %2585 = vmatprep.subr.bf16.mxu0 0
  %2586 = vmatpush1.bf16.msra.mxu0 0
  %2587 = vmatprep.subr.bf16.mxu0 0
  %2588 = vmatpush1.bf16.msra.mxu0 0
  %2589 = vmatprep.subr.bf16.mxu0 0
  %2590 = vmatpush1.bf16.msra.mxu0 0
  %2591 = vmatprep.subr.bf16.mxu0 0
  %2592 = vmatpush1.bf16.msra.mxu0 0
  %2593 = vmatprep.subr.bf16.mxu0 0
  %2594 = vmatpush1.bf16.msra.mxu0 0
  %2595 = vmatprep.subr.bf16.mxu0 0
  %2596 = vmatpush1.bf16.msra.mxu0 %v2579
  %2597 = vmatprep.subr.bf16.mxu0 0
  %2598 = vmatpush2.bf16.msra.mxu0 0
  %2599 = vmatprep.subr.bf16.mxu0 0
  %2600 = vmatpush2.bf16.msra.mxu0 0
  %2601 = vmatprep.subr.bf16.mxu0 0
  %2602 = vmatpush2.bf16.msra.mxu0 0
  %2603 = vmatprep.subr.bf16.mxu0 0
  %2604 = vmatpush2.bf16.msra.mxu0 0
  %2605 = vmatprep.subr.bf16.mxu0 0
  %2606 = vmatpush2.bf16.msra.mxu0 0
  %2607 = vmatprep.subr.bf16.mxu0 0
  %2608 = vmatpush2.bf16.msra.mxu0 0
  %2609 = vmatprep.subr.bf16.mxu0 0
  %2610 = vmatpush2.bf16.msra.mxu0 0
  %2611 = vmatprep.subr.bf16.mxu0 0
  %2612 = vmatpush2.bf16.msra.mxu0 0
  %2613 = vmatprep.mubr.bf16.mxu0 0
  %2614 = vmatmul.mubr.bf16.gmra.mxu0 %v2573
  %v2615 = vpop.f32.mrf.mxu0
  %v2616 = vadd.f32 0.0, %v2615
  %v2617 = vpop.f32.mrf.mxu0
  %v2618 = vpop.f32.mrf.mxu0
  %v2619 = vadd.f32 0.0, %v2618
  %v2620 = vpop.f32.mrf.mxu0
  %2621 = vmatprep.mubr.bf16.mxu0 0
  %2622 = vmatmul.mubr.bf16.gmra.mxu0 %v2576
  %v2623 = vpop.f32.mrf.mxu0
  %v2624 = vadd.f32 0.0, %v2623
  %v2625 = vpop.f32.mrf.mxu0
  %v2626 = vpop.f32.mrf.mxu0
  %v2627 = vadd.f32 0.0, %v2626
  %v2628 = vpop.f32.mrf.mxu0
  %2629 = vdwg.mxu0
  %v2631 = vsel %vm219, %v2290, 0
  %v2634 = vsel %vm219, %v2291, 0
  %v2637 = vsel %vm770, %v1928, 0
  %2639 = vmatprep.subr.bf16.mxu0 0
  %2640 = vmatpush1.bf16.msra.mxu0 0
  %2641 = vmatprep.subr.bf16.mxu0 0
  %2642 = vmatpush1.bf16.msra.mxu0 0
  %2643 = vmatprep.subr.bf16.mxu0 0
  %2644 = vmatpush1.bf16.msra.mxu0 0
  %2645 = vmatprep.subr.bf16.mxu0 0
  %2646 = vmatpush1.bf16.msra.mxu0 0
  %2647 = vmatprep.subr.bf16.mxu0 0
  %2648 = vmatpush1.bf16.msra.mxu0 0
  %2649 = vmatprep.subr.bf16.mxu0 0
  %2650 = vmatpush1.bf16.msra.mxu0 0
  %2651 = vmatprep.subr.bf16.mxu0 0
  %2652 = vmatpush1.bf16.msra.mxu0 0
  %2653 = vmatprep.subr.bf16.mxu0 0
  %2654 = vmatpush1.bf16.msra.mxu0 %v2637
  %2655 = vmatprep.subr.bf16.mxu0 0
  %2656 = vmatpush2.bf16.msra.mxu0 0
  %2657 = vmatprep.subr.bf16.mxu0 0
  %2658 = vmatpush2.bf16.msra.mxu0 0
  %2659 = vmatprep.subr.bf16.mxu0 0
  %2660 = vmatpush2.bf16.msra.mxu0 0
  %2661 = vmatprep.subr.bf16.mxu0 0
  %2662 = vmatpush2.bf16.msra.mxu0 0
  %2663 = vmatprep.subr.bf16.mxu0 0
  %2664 = vmatpush2.bf16.msra.mxu0 0
  %2665 = vmatprep.subr.bf16.mxu0 0
  %2666 = vmatpush2.bf16.msra.mxu0 0
  %2667 = vmatprep.subr.bf16.mxu0 0
  %2668 = vmatpush2.bf16.msra.mxu0 0
  %2669 = vmatprep.subr.bf16.mxu0 0
  %2670 = vmatpush2.bf16.msra.mxu0 0
  %2671 = vmatprep.mubr.bf16.mxu0 0
  %2672 = vmatmul.mubr.bf16.gmra.mxu0 %v2631
  %v2673 = vpop.f32.mrf.mxu0
  %v2674 = vadd.f32 %v2616, %v2673
  %v2675 = vpop.f32.mrf.mxu0
  %v2676 = vpop.f32.mrf.mxu0
  %v2677 = vadd.f32 %v2619, %v2676
  %v2678 = vpop.f32.mrf.mxu0
  %2679 = vmatprep.mubr.bf16.mxu0 0
  %2680 = vmatmul.mubr.bf16.gmra.mxu0 %v2634
  %v2681 = vpop.f32.mrf.mxu0
  %v2682 = vadd.f32 %v2624, %v2681
  %v2683 = vpop.f32.mrf.mxu0
  %v2684 = vpop.f32.mrf.mxu0
  %v2685 = vadd.f32 %v2627, %v2684
  %v2686 = vpop.f32.mrf.mxu0
  %2687 = vdwg.mxu0
  %2688 = vrot.lane.b32.xlu0 %v2002, 112
  %v2689 = vpop.permute.xlu0 %2688
  %2690 = vrot.lane.b32.xlu0 %v2005, 112
  %v2691 = vpop.permute.xlu0 %2690
  %2692 = vrot.lane.b32.xlu0 %v2010, 112
  %v2693 = vpop.permute.xlu0 %2692
  %2694 = vrot.lane.b32.xlu0 %v2013, 112
  %v2695 = vpop.permute.xlu0 %2694
  %2696 = vrot.lane.b32.xlu0 %v2002, 80
  %v2697 = vpop.permute.xlu0 %2696
  %2698 = vrot.lane.b32.xlu0 %v2005, 80
  %v2699 = vpop.permute.xlu0 %2698
  %2700 = vrot.lane.b32.xlu0 %v2010, 80
  %v2701 = vpop.permute.xlu0 %2700
  %2702 = vrot.lane.b32.xlu0 %v2013, 80
  %v2703 = vpop.permute.xlu0 %2702
  %v2704 = vsel %vm219, %v2689, 0
  %v2706 = vsel %vm219, %v2691, 0
  %v2708 = vsel %vm219, %v2693, 0
  %v2710 = vsel %vm219, %v2695, 0
  %v2712 = vsel %vm219, %v2697, 0
  %v2714 = vsel %vm219, %v2699, 0
  %v2716 = vsel %vm219, %v2701, 0
  %v2718 = vsel %vm219, %v2703, 0
  %2720 = vmatprep.subr.mxu0 0.0
  %2721 = vmatpush1.xpose.msra.mxu0 0.0
  %2722 = vmatprep.subr.mxu0 0.0
  %2723 = vmatpush1.xpose.msra.mxu0 0.0
  %2724 = vmatprep.subr.mxu0 0.0
  %2725 = vmatpush1.xpose.msra.mxu0 0.0
  %2726 = vmatprep.subr.mxu0 0.0
  %2727 = vmatpush1.xpose.msra.mxu0 0.0
  %2728 = vmatprep.subr.mxu0 0.0
  %2729 = vmatpush1.xpose.msra.mxu0 0.0
  %2730 = vmatprep.subr.mxu0 0.0
  %2731 = vmatpush1.xpose.msra.mxu0 0.0
  %2732 = vmatprep.subr.mxu0 0.0
  %2733 = vmatpush1.xpose.msra.mxu0 0.0
  %2734 = vmatprep.subr.mxu0 0.0
  %2735 = vmatpush1.xpose.msra.mxu0 0.0
  %2736 = vmatprep.subr.mxu0 0.0
  %2737 = vmatpush1.xpose.msra.mxu0 0.0
  %2738 = vmatprep.subr.mxu0 0.0
  %2739 = vmatpush1.xpose.msra.mxu0 0.0
  %2740 = vmatprep.subr.mxu0 0.0
  %2741 = vmatpush1.xpose.msra.mxu0 0.0
  %2742 = vmatprep.subr.mxu0 0.0
  %2743 = vmatpush1.xpose.msra.mxu0 0.0
  %2744 = vmatprep.subr.mxu0 0.0
  %2745 = vmatpush1.xpose.msra.mxu0 %v2718
  %2746 = vmatprep.subr.mxu0 0.0
  %2747 = vmatpush1.xpose.msra.mxu0 %v2716
  %2748 = vmatprep.subr.mxu0 0.0
  %2749 = vmatpush1.xpose.msra.mxu0 %v2714
  %2750 = vmatprep.subr.mxu0 0.0
  %2751 = vmatpush1.xpose.msra.mxu0 %v2712
  %2752 = vmatprep.subr.mxu0 0.0
  %2753 = vmatpush2.xpose.msra.mxu0 0.0
  %2754 = vmatprep.subr.mxu0 0.0
  %2755 = vmatpush2.xpose.msra.mxu0 0.0
  %2756 = vmatprep.subr.mxu0 0.0
  %2757 = vmatpush2.xpose.msra.mxu0 0.0
  %2758 = vmatprep.subr.mxu0 0.0
  %2759 = vmatpush2.xpose.msra.mxu0 0.0
  %2760 = vmatprep.subr.mxu0 0.0
  %2761 = vmatpush2.xpose.msra.mxu0 0.0
  %2762 = vmatprep.subr.mxu0 0.0
  %2763 = vmatpush2.xpose.msra.mxu0 0.0
  %2764 = vmatprep.subr.mxu0 0.0
  %2765 = vmatpush2.xpose.msra.mxu0 0.0
  %2766 = vmatprep.subr.mxu0 0.0
  %2767 = vmatpush2.xpose.msra.mxu0 0.0
  %2768 = vmatprep.subr.mxu0 0.0
  %2769 = vmatpush2.xpose.msra.mxu0 0.0
  %2770 = vmatprep.subr.mxu0 0.0
  %2771 = vmatpush2.xpose.msra.mxu0 0.0
  %2772 = vmatprep.subr.mxu0 0.0
  %2773 = vmatpush2.xpose.msra.mxu0 0.0
  %2774 = vmatprep.subr.mxu0 0.0
  %2775 = vmatpush2.xpose.msra.mxu0 0.0
  %2776 = vmatprep.subr.mxu0 0.0
  %2777 = vmatpush2.xpose.msra.mxu0 0.0
  %2778 = vmatprep.subr.mxu0 0.0
  %2779 = vmatpush2.xpose.msra.mxu0 0.0
  %2780 = vmatprep.subr.mxu0 0.0
  %2781 = vmatpush2.xpose.msra.mxu0 0.0
  %2782 = vmatprep.subr.mxu0 0.0
  %2783 = vmatpush2.xpose.msra.mxu0 0.0
  %2784 = vmatprep.mubr.f32.mxu0 0.0
  %2785 = vmatmul.mubr.f32.gmra.mxu0 %v2704
  %v2786 = vpop.f32.mrf.mxu0
  %v2787 = vadd.f32 0.0, %v2786
  %v2788 = vpop.f32.mrf.mxu0
  %2789 = vmatprep.mubr.f32.mxu0 0.0
  %2790 = vmatmul.mubr.f32.gmra.mxu0 %v2706
  %v2791 = vpop.f32.mrf.mxu0
  %v2792 = vadd.f32 0.0, %v2791
  %v2793 = vpop.f32.mrf.mxu0
  %2794 = vmatprep.mubr.f32.mxu0 0.0
  %2795 = vmatmul.mubr.f32.gmra.mxu0 %v2708
  %v2796 = vpop.f32.mrf.mxu0
  %v2797 = vadd.f32 0.0, %v2796
  %v2798 = vpop.f32.mrf.mxu0
  %2799 = vmatprep.mubr.f32.mxu0 0.0
  %2800 = vmatmul.mubr.f32.gmra.mxu0 %v2710
  %v2801 = vpop.f32.mrf.mxu0
  %v2802 = vadd.f32 0.0, %v2801
  %v2803 = vpop.f32.mrf.mxu0
  %2804 = vdwg.mxu0
  %v2805 = vmul.f32 %v2787, 0.35355338
  %v2806 = vmul.f32 %v2792, 0.35355338
  %v2807 = vmul.f32 %v2797, 0.35355338
  %v2808 = vmul.f32 %v2802, 0.35355338
  %v2809 = vadd.f32 %v2805, %v46
  %v2810 = vadd.f32 %v2806, %v47
  %v2811 = vadd.f32 %v2807, %v48
  %v2812 = vadd.f32 %v2808, %v49
  %v2813 = vsel %vm52, %v2809, -inf
  %2814 = vmax.xlane.f32.xlu0 %v2813
  %v2815 = vpop.xlane.xlu0 %2814
  %v2816 = vsel %vm52, %v2810, -inf
  %2817 = vmax.xlane.f32.xlu0 %v2816
  %v2818 = vpop.xlane.xlu0 %2817
  %v2819 = vsel %vm52, %v2811, -inf
  %2820 = vmax.xlane.f32.xlu0 %v2819
  %v2821 = vpop.xlane.xlu0 %2820
  %v2822 = vsel %vm52, %v2812, -inf
  %2823 = vmax.xlane.f32.xlu0 %v2822
  %v2824 = vpop.xlane.xlu0 %2823
  %v2825 = vsub.f32 %v2809, %v2815
  %v2826 = vsub.f32 %v2810, %v2818
  %v2827 = vsub.f32 %v2811, %v2821
  %v2828 = vsub.f32 %v2812, %v2824
  %v2829 = vmul.f32 %v2825, 1.442695
  %v2830 = vpow.pop %v2829
  %v2831 = vmul.f32 %v2826, 1.442695
  %v2832 = vpow.pop %v2831
  %v2833 = vmul.f32 %v2827, 1.442695
  %v2834 = vpow.pop %v2833
  %v2835 = vmul.f32 %v2828, 1.442695
  %v2836 = vpow.pop %v2835
  %v2837 = vsel %vm52, %v2830, 0.0
  %2838 = vadd.xlane.f32.xlu0 %v2837
  %v2839 = vpop.xlane.xlu0 %2838
  %v2840 = vsel %vm52, %v2832, 0.0
  %2841 = vadd.xlane.f32.xlu0 %v2840
  %v2842 = vpop.xlane.xlu0 %2841
  %v2843 = vsel %vm52, %v2834, 0.0
  %2844 = vadd.xlane.f32.xlu0 %v2843
  %v2845 = vpop.xlane.xlu0 %2844
  %v2846 = vsel %vm52, %v2836, 0.0
  %2847 = vadd.xlane.f32.xlu0 %v2846
  %v2848 = vpop.xlane.xlu0 %2847
  %v2849 = vrcp.pop %v2839
  %v2850 = vrcp.pop %v2842
  %v2851 = vrcp.pop %v2845
  %v2852 = vrcp.pop %v2848
  %v2853 = vmul.f32 %v2830, %v2849
  %v2854 = vmul.f32 %v2832, %v2850
  %v2855 = vmul.f32 %v2834, %v2851
  %v2856 = vmul.f32 %v2836, %v2852
  %2857 = vrot.lane.b32.xlu0 %v2002, 48
  %v2858 = vpop.permute.xlu0 %2857
  %2859 = vrot.lane.b32.xlu0 %v2005, 48
  %v2860 = vpop.permute.xlu0 %2859
  %2861 = vrot.lane.b32.xlu0 %v2010, 48
  %v2862 = vpop.permute.xlu0 %2861
  %2863 = vrot.lane.b32.xlu0 %v2013, 48
  %v2864 = vpop.permute.xlu0 %2863
  %v2870 = vsel %vm52, %v2853, 0
  %v2873 = vsel %vm52, %v2854, 0
  %v2876 = vsel %vm52, %v2855, 0
  %v2879 = vsel %vm52, %v2856, 0
  %2881 = vmatprep.subr.mxu0 0.0
  %2882 = vmatpush1.msra.mxu0 0.0
  %2883 = vmatprep.subr.mxu0 0.0
  %2884 = vmatpush1.msra.mxu0 0.0
  %2885 = vmatprep.subr.mxu0 0.0
  %2886 = vmatpush1.msra.mxu0 0.0
  %2887 = vmatprep.subr.mxu0 0.0
  %2888 = vmatpush1.msra.mxu0 0.0
  %2889 = vmatprep.subr.mxu0 0.0
  %2890 = vmatpush1.msra.mxu0 0.0
  %2891 = vmatprep.subr.mxu0 0.0
  %2892 = vmatpush1.msra.mxu0 0.0
  %2893 = vmatprep.subr.mxu0 0.0
  %2894 = vmatpush1.msra.mxu0 0.0
  %2895 = vmatprep.subr.mxu0 0.0
  %2896 = vmatpush1.msra.mxu0 0.0
  %2897 = vmatprep.subr.mxu0 0.0
  %2898 = vmatpush1.msra.mxu0 0.0
  %2899 = vmatprep.subr.mxu0 0.0
  %2900 = vmatpush1.msra.mxu0 0.0
  %2901 = vmatprep.subr.mxu0 0.0
  %2902 = vmatpush1.msra.mxu0 0.0
  %2903 = vmatprep.subr.mxu0 0.0
  %2904 = vmatpush1.msra.mxu0 0.0
  %2905 = vmatprep.subr.mxu0 0.0
  %2906 = vmatpush1.msra.mxu0 %v2864
  %2907 = vmatprep.subr.mxu0 0.0
  %2908 = vmatpush1.msra.mxu0 %v2862
  %2909 = vmatprep.subr.mxu0 0.0
  %2910 = vmatpush1.msra.mxu0 %v2860
  %2911 = vmatprep.subr.mxu0 0.0
  %2912 = vmatpush1.msra.mxu0 %v2858
  %2913 = vmatprep.subr.mxu0 0.0
  %2914 = vmatpush2.msra.mxu0 0.0
  %2915 = vmatprep.subr.mxu0 0.0
  %2916 = vmatpush2.msra.mxu0 0.0
  %2917 = vmatprep.subr.mxu0 0.0
  %2918 = vmatpush2.msra.mxu0 0.0
  %2919 = vmatprep.subr.mxu0 0.0
  %2920 = vmatpush2.msra.mxu0 0.0
  %2921 = vmatprep.subr.mxu0 0.0
  %2922 = vmatpush2.msra.mxu0 0.0
  %2923 = vmatprep.subr.mxu0 0.0
  %2924 = vmatpush2.msra.mxu0 0.0
  %2925 = vmatprep.subr.mxu0 0.0
  %2926 = vmatpush2.msra.mxu0 0.0
  %2927 = vmatprep.subr.mxu0 0.0
  %2928 = vmatpush2.msra.mxu0 0.0
  %2929 = vmatprep.subr.mxu0 0.0
  %2930 = vmatpush2.msra.mxu0 0.0
  %2931 = vmatprep.subr.mxu0 0.0
  %2932 = vmatpush2.msra.mxu0 0.0
  %2933 = vmatprep.subr.mxu0 0.0
  %2934 = vmatpush2.msra.mxu0 0.0
  %2935 = vmatprep.subr.mxu0 0.0
  %2936 = vmatpush2.msra.mxu0 0.0
  %2937 = vmatprep.subr.mxu0 0.0
  %2938 = vmatpush2.msra.mxu0 0.0
  %2939 = vmatprep.subr.mxu0 0.0
  %2940 = vmatpush2.msra.mxu0 0.0
  %2941 = vmatprep.subr.mxu0 0.0
  %2942 = vmatpush2.msra.mxu0 0.0
  %2943 = vmatprep.subr.mxu0 0.0
  %2944 = vmatpush2.msra.mxu0 0.0
  %2945 = vmatprep.mubr.f32.mxu0 0.0
  %2946 = vmatmul.mubr.f32.gmra.mxu0 %v2870
  %v2947 = vpop.f32.mrf.mxu0
  %v2948 = vadd.f32 0.0, %v2947
  %v2949 = vpop.f32.mrf.mxu0
  %2950 = vmatprep.mubr.f32.mxu0 0.0
  %2951 = vmatmul.mubr.f32.gmra.mxu0 %v2873
  %v2952 = vpop.f32.mrf.mxu0
  %v2953 = vadd.f32 0.0, %v2952
  %v2954 = vpop.f32.mrf.mxu0
  %2955 = vmatprep.mubr.f32.mxu0 0.0
  %2956 = vmatmul.mubr.f32.gmra.mxu0 %v2876
  %v2957 = vpop.f32.mrf.mxu0
  %v2958 = vadd.f32 0.0, %v2957
  %v2959 = vpop.f32.mrf.mxu0
  %2960 = vmatprep.mubr.f32.mxu0 0.0
  %2961 = vmatmul.mubr.f32.gmra.mxu0 %v2879
  %v2962 = vpop.f32.mrf.mxu0
  %v2963 = vadd.f32 0.0, %v2962
  %v2964 = vpop.f32.mrf.mxu0
  %2965 = vdwg.mxu0
  %v2966 = vpack.c.bf16 %v2953, %v2948
  %v2967 = vpack.c.bf16 %v2963, %v2958
  %v2969 = vsel %vm219, %v2966, 0
  %v2972 = vsel %vm219, %v2967, 0
  %v2975 = vsel %vm770, %v1930, 0
  %2977 = vmatprep.subr.bf16.mxu0 0
  %2978 = vmatpush1.bf16.msra.mxu0 0
  %2979 = vmatprep.subr.bf16.mxu0 0
  %2980 = vmatpush1.bf16.msra.mxu0 0
  %2981 = vmatprep.subr.bf16.mxu0 0
  %2982 = vmatpush1.bf16.msra.mxu0 0
  %2983 = vmatprep.subr.bf16.mxu0 0
  %2984 = vmatpush1.bf16.msra.mxu0 0
  %2985 = vmatprep.subr.bf16.mxu0 0
  %2986 = vmatpush1.bf16.msra.mxu0 0
  %2987 = vmatprep.subr.bf16.mxu0 0
  %2988 = vmatpush1.bf16.msra.mxu0 0
  %2989 = vmatprep.subr.bf16.mxu0 0
  %2990 = vmatpush1.bf16.msra.mxu0 0
  %2991 = vmatprep.subr.bf16.mxu0 0
  %2992 = vmatpush1.bf16.msra.mxu0 %v2975
  %2993 = vmatprep.subr.bf16.mxu0 0
  %2994 = vmatpush2.bf16.msra.mxu0 0
  %2995 = vmatprep.subr.bf16.mxu0 0
  %2996 = vmatpush2.bf16.msra.mxu0 0
  %2997 = vmatprep.subr.bf16.mxu0 0
  %2998 = vmatpush2.bf16.msra.mxu0 0
  %2999 = vmatprep.subr.bf16.mxu0 0
  %3000 = vmatpush2.bf16.msra.mxu0 0
  %3001 = vmatprep.subr.bf16.mxu0 0
  %3002 = vmatpush2.bf16.msra.mxu0 0
  %3003 = vmatprep.subr.bf16.mxu0 0
  %3004 = vmatpush2.bf16.msra.mxu0 0
  %3005 = vmatprep.subr.bf16.mxu0 0
  %3006 = vmatpush2.bf16.msra.mxu0 0
  %3007 = vmatprep.subr.bf16.mxu0 0
  %3008 = vmatpush2.bf16.msra.mxu0 0
  %3009 = vmatprep.mubr.bf16.mxu0 0
  %3010 = vmatmul.mubr.bf16.gmra.mxu0 %v2969
  %v3011 = vpop.f32.mrf.mxu0
  %v3012 = vadd.f32 0.0, %v3011
  %v3013 = vpop.f32.mrf.mxu0
  %v3014 = vpop.f32.mrf.mxu0
  %v3015 = vadd.f32 0.0, %v3014
  %v3016 = vpop.f32.mrf.mxu0
  %3017 = vmatprep.mubr.bf16.mxu0 0
  %3018 = vmatmul.mubr.bf16.gmra.mxu0 %v2972
  %v3019 = vpop.f32.mrf.mxu0
  %v3020 = vadd.f32 0.0, %v3019
  %v3021 = vpop.f32.mrf.mxu0
  %v3022 = vpop.f32.mrf.mxu0
  %v3023 = vadd.f32 0.0, %v3022
  %v3024 = vpop.f32.mrf.mxu0
  %3025 = vdwg.mxu0
  %v3026 = vadd.f32 %v2674, %v3012
  %v3027 = vadd.f32 %v2677, %v3015
  %v3028 = vadd.f32 %v2682, %v3020
  %v3029 = vadd.f32 %v2685, %v3023
  %3030 = vrot.lane.b32.xlu0 %v2002, 104
  %v3031 = vpop.permute.xlu0 %3030
  %3032 = vrot.lane.b32.xlu0 %v2005, 104
  %v3033 = vpop.permute.xlu0 %3032
  %3034 = vrot.lane.b32.xlu0 %v2010, 104
  %v3035 = vpop.permute.xlu0 %3034
  %3036 = vrot.lane.b32.xlu0 %v2013, 104
  %v3037 = vpop.permute.xlu0 %3036
  %3038 = vrot.lane.b32.xlu0 %v2002, 72
  %v3039 = vpop.permute.xlu0 %3038
  %3040 = vrot.lane.b32.xlu0 %v2005, 72
  %v3041 = vpop.permute.xlu0 %3040
  %3042 = vrot.lane.b32.xlu0 %v2010, 72
  %v3043 = vpop.permute.xlu0 %3042
  %3044 = vrot.lane.b32.xlu0 %v2013, 72
  %v3045 = vpop.permute.xlu0 %3044
  %v3046 = vsel %vm219, %v3031, 0
  %v3048 = vsel %vm219, %v3033, 0
  %v3050 = vsel %vm219, %v3035, 0
  %v3052 = vsel %vm219, %v3037, 0
  %v3054 = vsel %vm219, %v3039, 0
  %v3056 = vsel %vm219, %v3041, 0
  %v3058 = vsel %vm219, %v3043, 0
  %v3060 = vsel %vm219, %v3045, 0
  %3062 = vmatprep.subr.mxu0 0.0
  %3063 = vmatpush1.xpose.msra.mxu0 0.0
  %3064 = vmatprep.subr.mxu0 0.0
  %3065 = vmatpush1.xpose.msra.mxu0 0.0
  %3066 = vmatprep.subr.mxu0 0.0
  %3067 = vmatpush1.xpose.msra.mxu0 0.0
  %3068 = vmatprep.subr.mxu0 0.0
  %3069 = vmatpush1.xpose.msra.mxu0 0.0
  %3070 = vmatprep.subr.mxu0 0.0
  %3071 = vmatpush1.xpose.msra.mxu0 0.0
  %3072 = vmatprep.subr.mxu0 0.0
  %3073 = vmatpush1.xpose.msra.mxu0 0.0
  %3074 = vmatprep.subr.mxu0 0.0
  %3075 = vmatpush1.xpose.msra.mxu0 0.0
  %3076 = vmatprep.subr.mxu0 0.0
  %3077 = vmatpush1.xpose.msra.mxu0 0.0
  %3078 = vmatprep.subr.mxu0 0.0
  %3079 = vmatpush1.xpose.msra.mxu0 0.0
  %3080 = vmatprep.subr.mxu0 0.0
  %3081 = vmatpush1.xpose.msra.mxu0 0.0
  %3082 = vmatprep.subr.mxu0 0.0
  %3083 = vmatpush1.xpose.msra.mxu0 0.0
  %3084 = vmatprep.subr.mxu0 0.0
  %3085 = vmatpush1.xpose.msra.mxu0 0.0
  %3086 = vmatprep.subr.mxu0 0.0
  %3087 = vmatpush1.xpose.msra.mxu0 %v3060
  %3088 = vmatprep.subr.mxu0 0.0
  %3089 = vmatpush1.xpose.msra.mxu0 %v3058
  %3090 = vmatprep.subr.mxu0 0.0
  %3091 = vmatpush1.xpose.msra.mxu0 %v3056
  %3092 = vmatprep.subr.mxu0 0.0
  %3093 = vmatpush1.xpose.msra.mxu0 %v3054
  %3094 = vmatprep.subr.mxu0 0.0
  %3095 = vmatpush2.xpose.msra.mxu0 0.0
  %3096 = vmatprep.subr.mxu0 0.0
  %3097 = vmatpush2.xpose.msra.mxu0 0.0
  %3098 = vmatprep.subr.mxu0 0.0
  %3099 = vmatpush2.xpose.msra.mxu0 0.0
  %3100 = vmatprep.subr.mxu0 0.0
  %3101 = vmatpush2.xpose.msra.mxu0 0.0
  %3102 = vmatprep.subr.mxu0 0.0
  %3103 = vmatpush2.xpose.msra.mxu0 0.0
  %3104 = vmatprep.subr.mxu0 0.0
  %3105 = vmatpush2.xpose.msra.mxu0 0.0
  %3106 = vmatprep.subr.mxu0 0.0
  %3107 = vmatpush2.xpose.msra.mxu0 0.0
  %3108 = vmatprep.subr.mxu0 0.0
  %3109 = vmatpush2.xpose.msra.mxu0 0.0
  %3110 = vmatprep.subr.mxu0 0.0
  %3111 = vmatpush2.xpose.msra.mxu0 0.0
  %3112 = vmatprep.subr.mxu0 0.0
  %3113 = vmatpush2.xpose.msra.mxu0 0.0
  %3114 = vmatprep.subr.mxu0 0.0
  %3115 = vmatpush2.xpose.msra.mxu0 0.0
  %3116 = vmatprep.subr.mxu0 0.0
  %3117 = vmatpush2.xpose.msra.mxu0 0.0
  %3118 = vmatprep.subr.mxu0 0.0
  %3119 = vmatpush2.xpose.msra.mxu0 0.0
  %3120 = vmatprep.subr.mxu0 0.0
  %3121 = vmatpush2.xpose.msra.mxu0 0.0
  %3122 = vmatprep.subr.mxu0 0.0
  %3123 = vmatpush2.xpose.msra.mxu0 0.0
  %3124 = vmatprep.subr.mxu0 0.0
  %3125 = vmatpush2.xpose.msra.mxu0 0.0
  %3126 = vmatprep.mubr.f32.mxu0 0.0
  %3127 = vmatmul.mubr.f32.gmra.mxu0 %v3046
  %v3128 = vpop.f32.mrf.mxu0
  %v3129 = vadd.f32 0.0, %v3128
  %v3130 = vpop.f32.mrf.mxu0
  %3131 = vmatprep.mubr.f32.mxu0 0.0
  %3132 = vmatmul.mubr.f32.gmra.mxu0 %v3048
  %v3133 = vpop.f32.mrf.mxu0
  %v3134 = vadd.f32 0.0, %v3133
  %v3135 = vpop.f32.mrf.mxu0
  %3136 = vmatprep.mubr.f32.mxu0 0.0
  %3137 = vmatmul.mubr.f32.gmra.mxu0 %v3050
  %v3138 = vpop.f32.mrf.mxu0
  %v3139 = vadd.f32 0.0, %v3138
  %v3140 = vpop.f32.mrf.mxu0
  %3141 = vmatprep.mubr.f32.mxu0 0.0
  %3142 = vmatmul.mubr.f32.gmra.mxu0 %v3052
  %v3143 = vpop.f32.mrf.mxu0
  %v3144 = vadd.f32 0.0, %v3143
  %v3145 = vpop.f32.mrf.mxu0
  %3146 = vdwg.mxu0
  %v3147 = vmul.f32 %v3129, 0.35355338
  %v3148 = vmul.f32 %v3134, 0.35355338
  %v3149 = vmul.f32 %v3139, 0.35355338
  %v3150 = vmul.f32 %v3144, 0.35355338
  %v3151 = vadd.f32 %v3147, %v46
  %v3152 = vadd.f32 %v3148, %v47
  %v3153 = vadd.f32 %v3149, %v48
  %v3154 = vadd.f32 %v3150, %v49
  %v3155 = vsel %vm52, %v3151, -inf
  %3156 = vmax.xlane.f32.xlu0 %v3155
  %v3157 = vpop.xlane.xlu0 %3156
  %v3158 = vsel %vm52, %v3152, -inf
  %3159 = vmax.xlane.f32.xlu0 %v3158
  %v3160 = vpop.xlane.xlu0 %3159
  %v3161 = vsel %vm52, %v3153, -inf
  %3162 = vmax.xlane.f32.xlu0 %v3161
  %v3163 = vpop.xlane.xlu0 %3162
  %v3164 = vsel %vm52, %v3154, -inf
  %3165 = vmax.xlane.f32.xlu0 %v3164
  %v3166 = vpop.xlane.xlu0 %3165
  %v3167 = vsub.f32 %v3151, %v3157
  %v3168 = vsub.f32 %v3152, %v3160
  %v3169 = vsub.f32 %v3153, %v3163
  %v3170 = vsub.f32 %v3154, %v3166
  %v3171 = vmul.f32 %v3167, 1.442695
  %v3172 = vpow.pop %v3171
  %v3173 = vmul.f32 %v3168, 1.442695
  %v3174 = vpow.pop %v3173
  %v3175 = vmul.f32 %v3169, 1.442695
  %v3176 = vpow.pop %v3175
  %v3177 = vmul.f32 %v3170, 1.442695
  %v3178 = vpow.pop %v3177
  %v3179 = vsel %vm52, %v3172, 0.0
  %3180 = vadd.xlane.f32.xlu0 %v3179
  %v3181 = vpop.xlane.xlu0 %3180
  %v3182 = vsel %vm52, %v3174, 0.0
  %3183 = vadd.xlane.f32.xlu0 %v3182
  %v3184 = vpop.xlane.xlu0 %3183
  %v3185 = vsel %vm52, %v3176, 0.0
  %3186 = vadd.xlane.f32.xlu0 %v3185
  %v3187 = vpop.xlane.xlu0 %3186
  %v3188 = vsel %vm52, %v3178, 0.0
  %3189 = vadd.xlane.f32.xlu0 %v3188
  %v3190 = vpop.xlane.xlu0 %3189
  %v3191 = vrcp.pop %v3181
  %v3192 = vrcp.pop %v3184
  %v3193 = vrcp.pop %v3187
  %v3194 = vrcp.pop %v3190
  %v3195 = vmul.f32 %v3172, %v3191
  %v3196 = vmul.f32 %v3174, %v3192
  %v3197 = vmul.f32 %v3176, %v3193
  %v3198 = vmul.f32 %v3178, %v3194
  %3199 = vrot.lane.b32.xlu0 %v2002, 40
  %v3200 = vpop.permute.xlu0 %3199
  %3201 = vrot.lane.b32.xlu0 %v2005, 40
  %v3202 = vpop.permute.xlu0 %3201
  %3203 = vrot.lane.b32.xlu0 %v2010, 40
  %v3204 = vpop.permute.xlu0 %3203
  %3205 = vrot.lane.b32.xlu0 %v2013, 40
  %v3206 = vpop.permute.xlu0 %3205
  %v3212 = vsel %vm52, %v3195, 0
  %v3215 = vsel %vm52, %v3196, 0
  %v3218 = vsel %vm52, %v3197, 0
  %v3221 = vsel %vm52, %v3198, 0
  %3223 = vmatprep.subr.mxu0 0.0
  %3224 = vmatpush1.msra.mxu0 0.0
  %3225 = vmatprep.subr.mxu0 0.0
  %3226 = vmatpush1.msra.mxu0 0.0
  %3227 = vmatprep.subr.mxu0 0.0
  %3228 = vmatpush1.msra.mxu0 0.0
  %3229 = vmatprep.subr.mxu0 0.0
  %3230 = vmatpush1.msra.mxu0 0.0
  %3231 = vmatprep.subr.mxu0 0.0
  %3232 = vmatpush1.msra.mxu0 0.0
  %3233 = vmatprep.subr.mxu0 0.0
  %3234 = vmatpush1.msra.mxu0 0.0
  %3235 = vmatprep.subr.mxu0 0.0
  %3236 = vmatpush1.msra.mxu0 0.0
  %3237 = vmatprep.subr.mxu0 0.0
  %3238 = vmatpush1.msra.mxu0 0.0
  %3239 = vmatprep.subr.mxu0 0.0
  %3240 = vmatpush1.msra.mxu0 0.0
  %3241 = vmatprep.subr.mxu0 0.0
  %3242 = vmatpush1.msra.mxu0 0.0
  %3243 = vmatprep.subr.mxu0 0.0
  %3244 = vmatpush1.msra.mxu0 0.0
  %3245 = vmatprep.subr.mxu0 0.0
  %3246 = vmatpush1.msra.mxu0 0.0
  %3247 = vmatprep.subr.mxu0 0.0
  %3248 = vmatpush1.msra.mxu0 %v3206
  %3249 = vmatprep.subr.mxu0 0.0
  %3250 = vmatpush1.msra.mxu0 %v3204
  %3251 = vmatprep.subr.mxu0 0.0
  %3252 = vmatpush1.msra.mxu0 %v3202
  %3253 = vmatprep.subr.mxu0 0.0
  %3254 = vmatpush1.msra.mxu0 %v3200
  %3255 = vmatprep.subr.mxu0 0.0
  %3256 = vmatpush2.msra.mxu0 0.0
  %3257 = vmatprep.subr.mxu0 0.0
  %3258 = vmatpush2.msra.mxu0 0.0
  %3259 = vmatprep.subr.mxu0 0.0
  %3260 = vmatpush2.msra.mxu0 0.0
  %3261 = vmatprep.subr.mxu0 0.0
  %3262 = vmatpush2.msra.mxu0 0.0
  %3263 = vmatprep.subr.mxu0 0.0
  %3264 = vmatpush2.msra.mxu0 0.0
  %3265 = vmatprep.subr.mxu0 0.0
  %3266 = vmatpush2.msra.mxu0 0.0
  %3267 = vmatprep.subr.mxu0 0.0
  %3268 = vmatpush2.msra.mxu0 0.0
  %3269 = vmatprep.subr.mxu0 0.0
  %3270 = vmatpush2.msra.mxu0 0.0
  %3271 = vmatprep.subr.mxu0 0.0
  %3272 = vmatpush2.msra.mxu0 0.0
  %3273 = vmatprep.subr.mxu0 0.0
  %3274 = vmatpush2.msra.mxu0 0.0
  %3275 = vmatprep.subr.mxu0 0.0
  %3276 = vmatpush2.msra.mxu0 0.0
  %3277 = vmatprep.subr.mxu0 0.0
  %3278 = vmatpush2.msra.mxu0 0.0
  %3279 = vmatprep.subr.mxu0 0.0
  %3280 = vmatpush2.msra.mxu0 0.0
  %3281 = vmatprep.subr.mxu0 0.0
  %3282 = vmatpush2.msra.mxu0 0.0
  %3283 = vmatprep.subr.mxu0 0.0
  %3284 = vmatpush2.msra.mxu0 0.0
  %3285 = vmatprep.subr.mxu0 0.0
  %3286 = vmatpush2.msra.mxu0 0.0
  %3287 = vmatprep.mubr.f32.mxu0 0.0
  %3288 = vmatmul.mubr.f32.gmra.mxu0 %v3212
  %v3289 = vpop.f32.mrf.mxu0
  %v3290 = vadd.f32 0.0, %v3289
  %v3291 = vpop.f32.mrf.mxu0
  %3292 = vmatprep.mubr.f32.mxu0 0.0
  %3293 = vmatmul.mubr.f32.gmra.mxu0 %v3215
  %v3294 = vpop.f32.mrf.mxu0
  %v3295 = vadd.f32 0.0, %v3294
  %v3296 = vpop.f32.mrf.mxu0
  %3297 = vmatprep.mubr.f32.mxu0 0.0
  %3298 = vmatmul.mubr.f32.gmra.mxu0 %v3218
  %v3299 = vpop.f32.mrf.mxu0
  %v3300 = vadd.f32 0.0, %v3299
  %v3301 = vpop.f32.mrf.mxu0
  %3302 = vmatprep.mubr.f32.mxu0 0.0
  %3303 = vmatmul.mubr.f32.gmra.mxu0 %v3221
  %v3304 = vpop.f32.mrf.mxu0
  %v3305 = vadd.f32 0.0, %v3304
  %v3306 = vpop.f32.mrf.mxu0
  %3307 = vdwg.mxu0
  %v3308 = vpack.c.bf16 %v3295, %v3290
  %v3309 = vpack.c.bf16 %v3305, %v3300
  %v3311 = vsel %vm219, %v3308, 0
  %v3314 = vsel %vm219, %v3309, 0
  %v3317 = vsel %vm770, %v1931, 0
  %3319 = vmatprep.subr.bf16.mxu0 0
  %3320 = vmatpush1.bf16.msra.mxu0 0
  %3321 = vmatprep.subr.bf16.mxu0 0
  %3322 = vmatpush1.bf16.msra.mxu0 0
  %3323 = vmatprep.subr.bf16.mxu0 0
  %3324 = vmatpush1.bf16.msra.mxu0 0
  %3325 = vmatprep.subr.bf16.mxu0 0
  %3326 = vmatpush1.bf16.msra.mxu0 0
  %3327 = vmatprep.subr.bf16.mxu0 0
  %3328 = vmatpush1.bf16.msra.mxu0 0
  %3329 = vmatprep.subr.bf16.mxu0 0
  %3330 = vmatpush1.bf16.msra.mxu0 0
  %3331 = vmatprep.subr.bf16.mxu0 0
  %3332 = vmatpush1.bf16.msra.mxu0 0
  %3333 = vmatprep.subr.bf16.mxu0 0
  %3334 = vmatpush1.bf16.msra.mxu0 %v3317
  %3335 = vmatprep.subr.bf16.mxu0 0
  %3336 = vmatpush2.bf16.msra.mxu0 0
  %3337 = vmatprep.subr.bf16.mxu0 0
  %3338 = vmatpush2.bf16.msra.mxu0 0
  %3339 = vmatprep.subr.bf16.mxu0 0
  %3340 = vmatpush2.bf16.msra.mxu0 0
  %3341 = vmatprep.subr.bf16.mxu0 0
  %3342 = vmatpush2.bf16.msra.mxu0 0
  %3343 = vmatprep.subr.bf16.mxu0 0
  %3344 = vmatpush2.bf16.msra.mxu0 0
  %3345 = vmatprep.subr.bf16.mxu0 0
  %3346 = vmatpush2.bf16.msra.mxu0 0
  %3347 = vmatprep.subr.bf16.mxu0 0
  %3348 = vmatpush2.bf16.msra.mxu0 0
  %3349 = vmatprep.subr.bf16.mxu0 0
  %3350 = vmatpush2.bf16.msra.mxu0 0
  %3351 = vmatprep.mubr.bf16.mxu0 0
  %3352 = vmatmul.mubr.bf16.gmra.mxu0 %v3311
  %v3353 = vpop.f32.mrf.mxu0
  %v3354 = vadd.f32 0.0, %v3353
  %v3355 = vpop.f32.mrf.mxu0
  %v3356 = vpop.f32.mrf.mxu0
  %v3357 = vadd.f32 0.0, %v3356
  %v3358 = vpop.f32.mrf.mxu0
  %3359 = vmatprep.mubr.bf16.mxu0 0
  %3360 = vmatmul.mubr.bf16.gmra.mxu0 %v3314
  %v3361 = vpop.f32.mrf.mxu0
  %v3362 = vadd.f32 0.0, %v3361
  %v3363 = vpop.f32.mrf.mxu0
  %v3364 = vpop.f32.mrf.mxu0
  %v3365 = vadd.f32 0.0, %v3364
  %v3366 = vpop.f32.mrf.mxu0
  %3367 = vdwg.mxu0
  %v3368 = vadd.f32 %v3026, %v3354
  %v3369 = vadd.f32 %v3027, %v3357
  %v3370 = vadd.f32 %v3028, %v3362
  %v3371 = vadd.f32 %v3029, %v3365
  %v3372 = vlaneseq
  %v3373 = vshrl.u32 %v3372, 7
  %v3374 = vsub.s32 0, %v3373
  %v3375 = vrot.slane %v1933, %v3374
  %v3376 = vadd.f32 %v3368, %v3375
  %v3377 = vadd.f32 %v3369, %v3375
  %v3378 = vadd.f32 %v3370, %v3375
  %v3379 = vadd.f32 %v3371, %v3375
  %v3380 = vadd.f32 %v1923, %v3376
  %v3381 = vadd.f32 %v1924, %v3377
  %v3382 = vadd.f32 %v1925, %v3378
  %v3383 = vadd.f32 %v1926, %v3379
  %v3384 = vsel %vm52, %v3380, 0.0
  %3385 = vadd.xlane.f32.xlu0 %v3384
  %v3386 = vpop.xlane.xlu0 %3385
  %v3387 = vsel %vm52, %v3381, 0.0
  %3388 = vadd.xlane.f32.xlu0 %v3387
  %v3389 = vpop.xlane.xlu0 %3388
  %v3390 = vsel %vm52, %v3382, 0.0
  %3391 = vadd.xlane.f32.xlu0 %v3390
  %v3392 = vpop.xlane.xlu0 %3391
  %v3393 = vsel %vm52, %v3383, 0.0
  %3394 = vadd.xlane.f32.xlu0 %v3393
  %v3395 = vpop.xlane.xlu0 %3394
  %v3396 = vmul.f32 %v3386, %v65
  %v3397 = vmul.f32 %v3389, %v65
  %v3398 = vmul.f32 %v3392, %v65
  %v3399 = vmul.f32 %v3395, %v65
  %v3400 = vsub.f32 %v3380, %v3396
  %v3401 = vsub.f32 %v3381, %v3397
  %v3402 = vsub.f32 %v3382, %v3398
  %v3403 = vsub.f32 %v3383, %v3399
  %v3404 = vmul.f32 %v3400, %v3400
  %v3405 = vmul.f32 %v3401, %v3401
  %v3406 = vmul.f32 %v3402, %v3402
  %v3407 = vmul.f32 %v3403, %v3403
  %v3408 = vsel %vm52, %v3404, 0.0
  %3409 = vadd.xlane.f32.xlu0 %v3408
  %v3410 = vpop.xlane.xlu0 %3409
  %v3411 = vsel %vm52, %v3405, 0.0
  %3412 = vadd.xlane.f32.xlu0 %v3411
  %v3413 = vpop.xlane.xlu0 %3412
  %v3414 = vsel %vm52, %v3406, 0.0
  %3415 = vadd.xlane.f32.xlu0 %v3414
  %v3416 = vpop.xlane.xlu0 %3415
  %v3417 = vsel %vm52, %v3407, 0.0
  %3418 = vadd.xlane.f32.xlu0 %v3417
  %v3419 = vpop.xlane.xlu0 %3418
  %v3420 = vmul.f32 %v3410, %v65
  %v3421 = vmul.f32 %v3413, %v65
  %v3422 = vmul.f32 %v3416, %v65
  %v3423 = vmul.f32 %v3419, %v65
  %v3424 = vadd.f32 %v3420, 1e-12
  %v3425 = vadd.f32 %v3421, 1e-12
  %v3426 = vadd.f32 %v3422, 1e-12
  %v3427 = vadd.f32 %v3423, 1e-12
  %v3428 = vrsqrt.pop %v3424
  %v3429 = vrsqrt.pop %v3425
  %v3430 = vrsqrt.pop %v3426
  %v3431 = vrsqrt.pop %v3427
  %v3432 = vmul.f32 %v3400, %v3428
  %v3433 = vmul.f32 %v3401, %v3429
  %v3434 = vmul.f32 %v3402, %v3430
  %v3435 = vmul.f32 %v3403, %v3431
  %v3436 = vlaneseq
  %v3437 = vshrl.u32 %v3436, 7
  %v3438 = vsub.s32 1, %v3437
  %v3439 = vrot.slane %v1933, %v3438
  %v3440 = vmul.f32 %v3432, %v3439
  %v3441 = vmul.f32 %v3433, %v3439
  %v3442 = vmul.f32 %v3434, %v3439
  %v3443 = vmul.f32 %v3435, %v3439
  %v3444 = vlaneseq
  %v3445 = vshrl.u32 %v3444, 7
  %v3446 = vsub.s32 2, %v3445
  %v3447 = vrot.slane %v1933, %v3446
  %v3448 = vadd.f32 %v3440, %v3447
  %v3449 = vadd.f32 %v3441, %v3447
  %v3450 = vadd.f32 %v3442, %v3447
  %v3451 = vadd.f32 %v3443, %v3447
  %s3452 = scalar_lea.vmem %s6, 16
  %v3453 = vld [vmem:[%s3452] sm:$0xf]
  %v3454 = vld [vmem:[%s3452 + $0x4] sm:$0xf]
  %v3455 = vld [vmem:[%s3452 + $0x8] sm:$0xf]
  %v3456 = vld [vmem:[%s3452 + $0xc] sm:$0xf]
  %v3457 = vpack.c.bf16 %v3449, %v3448
  %v3458 = vpack.c.bf16 %v3451, %v3450
  %s3459 = scalar_lea.vmem %s7, 1
  %v3460 = vld [vmem:[%s3459] sm:$0x1]
  %v3462 = vlaneseq
  %v3463 = vshrl.u32 %v3462, 7
  %v3464 = vsub.s32 0, %v3463
  %v3465 = vrot.slane %v3460, %v3464
  %v3471 = vunpack.c.l.b16 %v3453
  %v3472 = vunpack.c.l.b16 %v3454
  %v3473 = vunpack.c.l.b16 %v3455
  %v3474 = vunpack.c.l.b16 %v3456
  %v3475 = vpack.c.b16 %v3472, %v3471
  %v3476 = vpack.c.b16 %v3474, %v3473
  %v3480 = vsel %vm52, %v3457, 0
  %v3483 = vsel %vm52, %v3458, 0
  %3485 = vmatprep.subr.bf16.mxu0 0
  %3486 = vmatpush1.bf16.msra.mxu0 0
  %3487 = vmatprep.subr.bf16.mxu0 0
  %3488 = vmatpush1.bf16.msra.mxu0 0
  %3489 = vmatprep.subr.bf16.mxu0 0
  %3490 = vmatpush1.bf16.msra.mxu0 0
  %3491 = vmatprep.subr.bf16.mxu0 0
  %3492 = vmatpush1.bf16.msra.mxu0 0
  %3493 = vmatprep.subr.bf16.mxu0 0
  %3494 = vmatpush1.bf16.msra.mxu0 0
  %3495 = vmatprep.subr.bf16.mxu0 0
  %3496 = vmatpush1.bf16.msra.mxu0 0
  %3497 = vmatprep.subr.bf16.mxu0 0
  %3498 = vmatpush1.bf16.msra.mxu0 %v3476
  %3499 = vmatprep.subr.bf16.mxu0 0
  %3500 = vmatpush1.bf16.msra.mxu0 %v3475
  %3501 = vmatprep.subr.bf16.mxu0 0
  %3502 = vmatpush2.bf16.msra.mxu0 0
  %3503 = vmatprep.subr.bf16.mxu0 0
  %3504 = vmatpush2.bf16.msra.mxu0 0
  %3505 = vmatprep.subr.bf16.mxu0 0
  %3506 = vmatpush2.bf16.msra.mxu0 0
  %3507 = vmatprep.subr.bf16.mxu0 0
  %3508 = vmatpush2.bf16.msra.mxu0 0
  %3509 = vmatprep.subr.bf16.mxu0 0
  %3510 = vmatpush2.bf16.msra.mxu0 0
  %3511 = vmatprep.subr.bf16.mxu0 0
  %3512 = vmatpush2.bf16.msra.mxu0 0
  %3513 = vmatprep.subr.bf16.mxu0 0
  %3514 = vmatpush2.bf16.msra.mxu0 0
  %3515 = vmatprep.subr.bf16.mxu0 0
  %3516 = vmatpush2.bf16.msra.mxu0 0
  %3517 = vmatprep.mubr.bf16.mxu0 0
  %3518 = vmatmul.mubr.bf16.gmra.mxu0 %v3480
  %v3519 = vpop.f32.mrf.mxu0
  %v3520 = vadd.f32 %v3465, %v3519
  %v3521 = vpop.f32.mrf.mxu0
  %v3522 = vpop.f32.mrf.mxu0
  %v3523 = vadd.f32 %v3465, %v3522
  %v3524 = vpop.f32.mrf.mxu0
  %3525 = vmatprep.mubr.bf16.mxu0 0
  %3526 = vmatmul.mubr.bf16.gmra.mxu0 %v3483
  %v3527 = vpop.f32.mrf.mxu0
  %v3528 = vadd.f32 %v3465, %v3527
  %v3529 = vpop.f32.mrf.mxu0
  %v3530 = vpop.f32.mrf.mxu0
  %v3531 = vadd.f32 %v3465, %v3530
  %v3532 = vpop.f32.mrf.mxu0
  %3533 = vdwg.mxu0
  %v3534 = vmul.f32 %v3520, %v3520
  %v3535 = vmul.f32 %v3523, %v3523
  %v3536 = vmul.f32 %v3528, %v3528
  %v3537 = vmul.f32 %v3531, %v3531
  %v3538 = vmul.f32 %v3520, %v3534
  %v3539 = vmul.f32 %v3523, %v3535
  %v3540 = vmul.f32 %v3528, %v3536
  %v3541 = vmul.f32 %v3531, %v3537
  %v3542 = vmul.f32 %v3538, 0.044715
  %v3543 = vmul.f32 %v3539, 0.044715
  %v3544 = vmul.f32 %v3540, 0.044715
  %v3545 = vmul.f32 %v3541, 0.044715
  %v3546 = vadd.f32 %v3520, %v3542
  %v3547 = vadd.f32 %v3523, %v3543
  %v3548 = vadd.f32 %v3528, %v3544
  %v3549 = vadd.f32 %v3531, %v3545
  %v3550 = vmul.f32 %v3546, 0.7978846
  %v3551 = vmul.f32 %v3547, 0.7978846
  %v3552 = vmul.f32 %v3548, 0.7978846
  %v3553 = vmul.f32 %v3549, 0.7978846
  %v3554 = vtanh.pop %v3550
  %v3555 = vtanh.pop %v3551
  %v3556 = vtanh.pop %v3552
  %v3557 = vtanh.pop %v3553
  %v3558 = vadd.f32 %v3554, 1.0
  %v3559 = vadd.f32 %v3555, 1.0
  %v3560 = vadd.f32 %v3556, 1.0
  %v3561 = vadd.f32 %v3557, 1.0
  %v3562 = vmul.f32 %v3558, 0.5
  %v3563 = vmul.f32 %v3559, 0.5
  %v3564 = vmul.f32 %v3560, 0.5
  %v3565 = vmul.f32 %v3561, 0.5
  %v3566 = vmul.f32 %v3520, %v3562
  %v3567 = vmul.f32 %v3523, %v3563
  %v3568 = vmul.f32 %v3528, %v3564
  %v3569 = vmul.f32 %v3531, %v3565
  %s3570 = scalar_lea.vmem %s8, 32
  %v3571 = vld [vmem:[%s3570] sm:$0xf]
  %v3572 = vld [vmem:[%s3570 + $0x4] sm:$0xf]
  %v3573 = vld [vmem:[%s3570 + $0x8] sm:$0xf]
  %v3574 = vld [vmem:[%s3570 + $0xc] sm:$0xf]
  %v3575 = vld [vmem:[%s3570 + $0x10] sm:$0xf]
  %v3576 = vld [vmem:[%s3570 + $0x14] sm:$0xf]
  %v3577 = vld [vmem:[%s3570 + $0x18] sm:$0xf]
  %v3578 = vld [vmem:[%s3570 + $0x1c] sm:$0xf]
  %v3579 = vpack.c.bf16 %v3567, %v3566
  %v3580 = vpack.c.bf16 %v3569, %v3568
  %v3581 = vlaneseq
  %v3582 = vshrl.u32 %v3581, 7
  %v3583 = vsub.s32 3, %v3582
  %v3584 = vrot.slane %v1933, %v3583
  %v3593 = vunpack.c.l.b16 %v3571
  %v3594 = vunpack.c.l.b16 %v3572
  %v3595 = vunpack.c.l.b16 %v3573
  %v3596 = vunpack.c.l.b16 %v3574
  %v3597 = vunpack.c.l.b16 %v3575
  %v3598 = vunpack.c.l.b16 %v3576
  %v3599 = vunpack.c.l.b16 %v3577
  %v3600 = vunpack.c.l.b16 %v3578
  %v3601 = vpack.c.b16 %v3594, %v3593
  %v3602 = vpack.c.b16 %v3596, %v3595
  %v3603 = vpack.c.b16 %v3598, %v3597
  %v3604 = vpack.c.b16 %v3600, %v3599
  %v3610 = vsel %vm1799, %v3579, 0
  %v3613 = vsel %vm1799, %v3580, 0
  %3615 = vmatprep.subr.bf16.mxu0 0
  %3616 = vmatpush1.bf16.msra.mxu0 0
  %3617 = vmatprep.subr.bf16.mxu0 0
  %3618 = vmatpush1.bf16.msra.mxu0 0
  %3619 = vmatprep.subr.bf16.mxu0 0
  %3620 = vmatpush1.bf16.msra.mxu0 0
  %3621 = vmatprep.subr.bf16.mxu0 0
  %3622 = vmatpush1.bf16.msra.mxu0 0
  %3623 = vmatprep.subr.bf16.mxu0 0
  %3624 = vmatpush1.bf16.msra.mxu0 %v3604
  %3625 = vmatprep.subr.bf16.mxu0 0
  %3626 = vmatpush1.bf16.msra.mxu0 %v3603
  %3627 = vmatprep.subr.bf16.mxu0 0
  %3628 = vmatpush1.bf16.msra.mxu0 %v3602
  %3629 = vmatprep.subr.bf16.mxu0 0
  %3630 = vmatpush1.bf16.msra.mxu0 %v3601
  %3631 = vmatprep.subr.bf16.mxu0 0
  %3632 = vmatpush2.bf16.msra.mxu0 0
  %3633 = vmatprep.subr.bf16.mxu0 0
  %3634 = vmatpush2.bf16.msra.mxu0 0
  %3635 = vmatprep.subr.bf16.mxu0 0
  %3636 = vmatpush2.bf16.msra.mxu0 0
  %3637 = vmatprep.subr.bf16.mxu0 0
  %3638 = vmatpush2.bf16.msra.mxu0 0
  %3639 = vmatprep.subr.bf16.mxu0 0
  %3640 = vmatpush2.bf16.msra.mxu0 0
  %3641 = vmatprep.subr.bf16.mxu0 0
  %3642 = vmatpush2.bf16.msra.mxu0 0
  %3643 = vmatprep.subr.bf16.mxu0 0
  %3644 = vmatpush2.bf16.msra.mxu0 0
  %3645 = vmatprep.subr.bf16.mxu0 0
  %3646 = vmatpush2.bf16.msra.mxu0 0
  %3647 = vmatprep.mubr.bf16.mxu0 0
  %3648 = vmatmul.mubr.bf16.gmra.mxu0 %v3610
  %v3649 = vpop.f32.mrf.mxu0
  %v3650 = vadd.f32 %v3584, %v3649
  %v3651 = vpop.f32.mrf.mxu0
  %v3652 = vpop.f32.mrf.mxu0
  %v3653 = vadd.f32 %v3584, %v3652
  %v3654 = vpop.f32.mrf.mxu0
  %3655 = vmatprep.mubr.bf16.mxu0 0
  %3656 = vmatmul.mubr.bf16.gmra.mxu0 %v3613
  %v3657 = vpop.f32.mrf.mxu0
  %v3658 = vadd.f32 %v3584, %v3657
  %v3659 = vpop.f32.mrf.mxu0
  %v3660 = vpop.f32.mrf.mxu0
  %v3661 = vadd.f32 %v3584, %v3660
  %v3662 = vpop.f32.mrf.mxu0
  %3663 = vdwg.mxu0
  %v3664 = vadd.f32 %v3448, %v3650
  %v3665 = vadd.f32 %v3449, %v3653
  %v3666 = vadd.f32 %v3450, %v3658
  %v3667 = vadd.f32 %v3451, %v3661
  %v3668 = vsel %vm52, %v3664, 0.0
  %3669 = vadd.xlane.f32.xlu0 %v3668
  %v3670 = vpop.xlane.xlu0 %3669
  %v3671 = vsel %vm52, %v3665, 0.0
  %3672 = vadd.xlane.f32.xlu0 %v3671
  %v3673 = vpop.xlane.xlu0 %3672
  %v3674 = vsel %vm52, %v3666, 0.0
  %3675 = vadd.xlane.f32.xlu0 %v3674
  %v3676 = vpop.xlane.xlu0 %3675
  %v3677 = vsel %vm52, %v3667, 0.0
  %3678 = vadd.xlane.f32.xlu0 %v3677
  %v3679 = vpop.xlane.xlu0 %3678
  %v3680 = vmul.f32 %v3670, %v65
  %v3681 = vmul.f32 %v3673, %v65
  %v3682 = vmul.f32 %v3676, %v65
  %v3683 = vmul.f32 %v3679, %v65
  %v3684 = vsub.f32 %v3664, %v3680
  %v3685 = vsub.f32 %v3665, %v3681
  %v3686 = vsub.f32 %v3666, %v3682
  %v3687 = vsub.f32 %v3667, %v3683
  %v3688 = vmul.f32 %v3684, %v3684
  %v3689 = vmul.f32 %v3685, %v3685
  %v3690 = vmul.f32 %v3686, %v3686
  %v3691 = vmul.f32 %v3687, %v3687
  %v3692 = vsel %vm52, %v3688, 0.0
  %3693 = vadd.xlane.f32.xlu0 %v3692
  %v3694 = vpop.xlane.xlu0 %3693
  %v3695 = vsel %vm52, %v3689, 0.0
  %3696 = vadd.xlane.f32.xlu0 %v3695
  %v3697 = vpop.xlane.xlu0 %3696
  %v3698 = vsel %vm52, %v3690, 0.0
  %3699 = vadd.xlane.f32.xlu0 %v3698
  %v3700 = vpop.xlane.xlu0 %3699
  %v3701 = vsel %vm52, %v3691, 0.0
  %3702 = vadd.xlane.f32.xlu0 %v3701
  %v3703 = vpop.xlane.xlu0 %3702
  %v3704 = vmul.f32 %v3694, %v65
  %v3705 = vmul.f32 %v3697, %v65
  %v3706 = vmul.f32 %v3700, %v65
  %v3707 = vmul.f32 %v3703, %v65
  %v3708 = vadd.f32 %v3704, 1e-12
  %v3709 = vadd.f32 %v3705, 1e-12
  %v3710 = vadd.f32 %v3706, 1e-12
  %v3711 = vadd.f32 %v3707, 1e-12
  %v3712 = vrsqrt.pop %v3708
  %v3713 = vrsqrt.pop %v3709
  %v3714 = vrsqrt.pop %v3710
  %v3715 = vrsqrt.pop %v3711
  %v3716 = vmul.f32 %v3684, %v3712
  %v3717 = vmul.f32 %v3685, %v3713
  %v3718 = vmul.f32 %v3686, %v3714
  %v3719 = vmul.f32 %v3687, %v3715
  %v3720 = vlaneseq
  %v3721 = vshrl.u32 %v3720, 7
  %v3722 = vsub.s32 4, %v3721
  %v3723 = vrot.slane %v1933, %v3722
  %v3724 = vmul.f32 %v3716, %v3723
  %v3725 = vmul.f32 %v3717, %v3723
  %v3726 = vmul.f32 %v3718, %v3723
  %v3727 = vmul.f32 %v3719, %v3723
  %v3728 = vlaneseq
  %v3729 = vshrl.u32 %v3728, 7
  %v3730 = vsub.s32 5, %v3729
  %v3731 = vrot.slane %v1933, %v3730
  %v3732 = vadd.f32 %v3724, %v3731
  %v3733 = vadd.f32 %v3725, %v3731
  %v3734 = vadd.f32 %v3726, %v3731
  %v3735 = vadd.f32 %v3727, %v3731
  %v3736 = vlaneseq
  %v3737 = vshrl.u32 %v3736, 7
  %v3738 = vlaneseq
  %v3739 = vand.u32 %v3738, 127
  %v3740 = vmul.u32 %v3737, 8
  %vm3741 = vcmp.eq.s32.totalorder %v3739, %v3740
  %v3742 = vsel %vm3741, 1, 0
  %v3743 = vcvt.s32.f32 %v3742
  %v3745 = vsel %vm52, %v3743, 0
  %3747 = vmatprep.subr.mxu0 0.0
  %3748 = vmatpush1.msra.mxu0 0.0
  %3749 = vmatprep.subr.mxu0 0.0
  %3750 = vmatpush1.msra.mxu0 0.0
  %3751 = vmatprep.subr.mxu0 0.0
  %3752 = vmatpush1.msra.mxu0 0.0
  %3753 = vmatprep.subr.mxu0 0.0
  %3754 = vmatpush1.msra.mxu0 0.0
  %3755 = vmatprep.subr.mxu0 0.0
  %3756 = vmatpush1.msra.mxu0 0.0
  %3757 = vmatprep.subr.mxu0 0.0
  %3758 = vmatpush1.msra.mxu0 0.0
  %3759 = vmatprep.subr.mxu0 0.0
  %3760 = vmatpush1.msra.mxu0 0.0
  %3761 = vmatprep.subr.mxu0 0.0
  %3762 = vmatpush1.msra.mxu0 0.0
  %3763 = vmatprep.subr.mxu0 0.0
  %3764 = vmatpush1.msra.mxu0 0.0
  %3765 = vmatprep.subr.mxu0 0.0
  %3766 = vmatpush1.msra.mxu0 0.0
  %3767 = vmatprep.subr.mxu0 0.0
  %3768 = vmatpush1.msra.mxu0 0.0
  %3769 = vmatprep.subr.mxu0 0.0
  %3770 = vmatpush1.msra.mxu0 0.0
  %3771 = vmatprep.subr.mxu0 0.0
  %3772 = vmatpush1.msra.mxu0 %v3735
  %3773 = vmatprep.subr.mxu0 0.0
  %3774 = vmatpush1.msra.mxu0 %v3734
  %3775 = vmatprep.subr.mxu0 0.0
  %3776 = vmatpush1.msra.mxu0 %v3733
  %3777 = vmatprep.subr.mxu0 0.0
  %3778 = vmatpush1.msra.mxu0 %v3732
  %3779 = vmatprep.subr.mxu0 0.0
  %3780 = vmatpush2.msra.mxu0 0.0
  %3781 = vmatprep.subr.mxu0 0.0
  %3782 = vmatpush2.msra.mxu0 0.0
  %3783 = vmatprep.subr.mxu0 0.0
  %3784 = vmatpush2.msra.mxu0 0.0
  %3785 = vmatprep.subr.mxu0 0.0
  %3786 = vmatpush2.msra.mxu0 0.0
  %3787 = vmatprep.subr.mxu0 0.0
  %3788 = vmatpush2.msra.mxu0 0.0
  %3789 = vmatprep.subr.mxu0 0.0
  %3790 = vmatpush2.msra.mxu0 0.0
  %3791 = vmatprep.subr.mxu0 0.0
  %3792 = vmatpush2.msra.mxu0 0.0
  %3793 = vmatprep.subr.mxu0 0.0
  %3794 = vmatpush2.msra.mxu0 0.0
  %3795 = vmatprep.subr.mxu0 0.0
  %3796 = vmatpush2.msra.mxu0 0.0
  %3797 = vmatprep.subr.mxu0 0.0
  %3798 = vmatpush2.msra.mxu0 0.0
  %3799 = vmatprep.subr.mxu0 0.0
  %3800 = vmatpush2.msra.mxu0 0.0
  %3801 = vmatprep.subr.mxu0 0.0
  %3802 = vmatpush2.msra.mxu0 0.0
  %3803 = vmatprep.subr.mxu0 0.0
  %3804 = vmatpush2.msra.mxu0 0.0
  %3805 = vmatprep.subr.mxu0 0.0
  %3806 = vmatpush2.msra.mxu0 0.0
  %3807 = vmatprep.subr.mxu0 0.0
  %3808 = vmatpush2.msra.mxu0 0.0
  %3809 = vmatprep.subr.mxu0 0.0
  %3810 = vmatpush2.msra.mxu0 0.0
  %3811 = vmatprep.mubr.f32.mxu0 0.0
  %3812 = vmatmul.mubr.f32.gmra.mxu0 %v3745
  %v3813 = vpop.f32.mrf.mxu0
  %v3814 = vadd.f32 0.0, %v3813
  %v3815 = vpop.f32.mrf.mxu0
  %3816 = vdwg.mxu0
  %v3817 = vld [vmem:[%s10] sm:$0xf]
  %v3818 = vld [vmem:[%s10 + $0x4] sm:$0xf]
  %v3819 = vld [vmem:[%s10 + $0x8] sm:$0xf]
  %v3820 = vld [vmem:[%s10 + $0xc] sm:$0xf]
  %v3821 = vpack.c.bf16 %v3814, %v3814
  %v3822 = vld [vmem:[%s11] sm:$0x1]
  %v3824 = vlaneseq
  %v3825 = vshrl.u32 %v3824, 7
  %v3826 = vsub.s32 0, %v3825
  %v3827 = vrot.slane %v3822, %v3826
  %v3833 = vunpack.c.l.b16 %v3817
  %v3834 = vunpack.c.l.b16 %v3818
  %v3835 = vunpack.c.l.b16 %v3819
  %v3836 = vunpack.c.l.b16 %v3820
  %v3837 = vpack.c.b16 %v3834, %v3833
  %v3838 = vpack.c.b16 %v3836, %v3835
  %v3842 = vsel %vm52, %v3821, 0
  %3844 = vmatprep.subr.bf16.mxu0 0
  %3845 = vmatpush1.bf16.msra.mxu0 0
  %3846 = vmatprep.subr.bf16.mxu0 0
  %3847 = vmatpush1.bf16.msra.mxu0 0
  %3848 = vmatprep.subr.bf16.mxu0 0
  %3849 = vmatpush1.bf16.msra.mxu0 0
  %3850 = vmatprep.subr.bf16.mxu0 0
  %3851 = vmatpush1.bf16.msra.mxu0 0
  %3852 = vmatprep.subr.bf16.mxu0 0
  %3853 = vmatpush1.bf16.msra.mxu0 0
  %3854 = vmatprep.subr.bf16.mxu0 0
  %3855 = vmatpush1.bf16.msra.mxu0 0
  %3856 = vmatprep.subr.bf16.mxu0 0
  %3857 = vmatpush1.bf16.msra.mxu0 %v3838
  %3858 = vmatprep.subr.bf16.mxu0 0
  %3859 = vmatpush1.bf16.msra.mxu0 %v3837
  %3860 = vmatprep.subr.bf16.mxu0 0
  %3861 = vmatpush2.bf16.msra.mxu0 0
  %3862 = vmatprep.subr.bf16.mxu0 0
  %3863 = vmatpush2.bf16.msra.mxu0 0
  %3864 = vmatprep.subr.bf16.mxu0 0
  %3865 = vmatpush2.bf16.msra.mxu0 0
  %3866 = vmatprep.subr.bf16.mxu0 0
  %3867 = vmatpush2.bf16.msra.mxu0 0
  %3868 = vmatprep.subr.bf16.mxu0 0
  %3869 = vmatpush2.bf16.msra.mxu0 0
  %3870 = vmatprep.subr.bf16.mxu0 0
  %3871 = vmatpush2.bf16.msra.mxu0 0
  %3872 = vmatprep.subr.bf16.mxu0 0
  %3873 = vmatpush2.bf16.msra.mxu0 0
  %3874 = vmatprep.subr.bf16.mxu0 0
  %3875 = vmatpush2.bf16.msra.mxu0 0
  %3876 = vmatprep.mubr.bf16.mxu0 0
  %3877 = vmatmul.mubr.bf16.gmra.mxu0 %v3842
  %v3878 = vpop.f32.mrf.mxu0
  %v3879 = vadd.f32 %v3827, %v3878
  %v3880 = vpop.f32.mrf.mxu0
  %v3881 = vpop.f32.mrf.mxu0
  %v3882 = vpop.f32.mrf.mxu0
  %3883 = vdwg.mxu0
  %v3884 = vtanh.pop %v3879
  %vm3885 = vcmask 257024
  %3886 = vst.msk [vmem:[%s12] sm:$0xf] %vm3885, %v3884
  // Predicated region
  $region50: #{biencoder_forward.1} parent=0 // pred_check
    _
  $region51: #{biencoder_forward.1} parent=0 // pred_check_branch
    %3888 = sbr.rel (0) target = $region53
  $region52: #{biencoder_forward.1} parent=0 // pred_region
    _
  $region53: #{biencoder_forward.1} parent=0 // pred_fallthru
    _
  // Predicated region
  $region54: #{biencoder_forward.1} parent=0 // pred_check
    _
  $region55: #{biencoder_forward.1} parent=0 // pred_check_branch
    %3890 = sbr.rel (0) target = $region57
  $region56: #{biencoder_forward.1} parent=0 // pred_region
    _
  $region57: #{biencoder_forward.1} parent=0 // pred_fallthru
    _

</llo_original>
